<compile_context>
chip_gen: v7x
topology: tpu7x:2x2x1
jax: 0.10.0
libtpu: 0.0.40
codegen_flags: <defaults>
</compile_context>

<pallas_src>
import functools

import jax
import jax.numpy as jnp
from jax.experimental import pallas as pl
from jax.experimental.pallas import tpu as pltpu


# ----------------------------------------------------------------------------
# Pallas kernel: per tile of Nt points compute -log(sc2_rigidity)
# ----------------------------------------------------------------------------
def _sc2_kernel(src_ref, flow_ref, out_ref, a_ref, *, d_thre, n_power_iters, K):
    # src_ref / flow_ref : [3, K, Nt]   out_ref : [1, Nt]
    # a_ref              : [K, K, Nt]   VMEM scratch holding A (row-slabs).
    src = src_ref[...].astype(jnp.float32)            # [3, K, Nt]
    tgt = src + flow_ref[...].astype(jnp.float32)     # target_keypts = src + flow
    inv_d = 1.0 / d_thre

    sx, sy, sz = src[0], src[1], src[2]               # each [K, Nt]
    tx, ty, tz = tgt[0], tgt[1], tgt[2]

    # ---- Build A row-by-row into VMEM scratch --------------------------------
    # cross = |src_dist - tgt_dist| in the reference's two-sqrt form: the sqrts
    # run on the EUP (slack) and there is no catastrophic cancellation when
    # src_dist ~= tgt_dist.  u0 = A @ ones (first power iteration specialized
    # for v = ones) is accumulated on the fly so A is not re-read for iter 0.
    u0 = None
    for i in range(K):
        ds2 = ((sx[i:i + 1] - sx) ** 2
               + (sy[i:i + 1] - sy) ** 2
               + (sz[i:i + 1] - sz) ** 2)             # [K, Nt] squared src dist
        dt2 = ((tx[i:i + 1] - tx) ** 2
               + (ty[i:i + 1] - ty) ** 2
               + (tz[i:i + 1] - tz) ** 2)             # [K, Nt] squared tgt dist
        cross = (jnp.sqrt(ds2) - jnp.sqrt(dt2)) * inv_d
        row = jnp.maximum(1.0 - cross * cross, 0.0)   # A[i, :, n]
        a_ref[i] = row
        u0 = row if u0 is None else u0 + row

    # ---- Power iteration (deferred normalization) -----------------------------
    # A entries are in [0, 1] with A_ii = 1, so ||v|| grows by at most Kx per
    # iteration: 10 un-normalized iterations stay ~1e12, far from f32 overflow,
    # and >= 1 so no underflow either.
    def matvec(v):
        # (A v)[i, n] = sum_j A[i, j, n] v[j, n]; A is symmetric, so contracting
        # the row-slabs against v[j] is equivalent.  Unrolled VPU mul/adds only.
        u = a_ref[0] * v[0:1]
        for j in range(1, K):
            u = u + a_ref[j] * v[j:j + 1]
        return u

    # TODO(synk): the torch.allclose early-exit inside sc_utils.power_iteration
    #             is skipped; we always run the full n_power_iters iterations.
    v = jax.lax.fori_loop(1, n_power_iters, lambda _, vv: matvec(vv), u0)

    # spatial_consistency_score as a Rayleigh quotient: (v^T A v)/(v^T v)/K.
    av = matvec(v)
    num = jnp.sum(v * av, axis=0, keepdims=True)      # [1, Nt]
    den = jnp.sum(v * v, axis=0, keepdims=True)       # [1, Nt]
    score = num / (den * K)
    out_ref[...] = -jnp.log(score)


# ----------------------------------------------------------------------------
# Tiling heuristic
# ----------------------------------------------------------------------------
def _select_tiling(n, cap_lanes=1024):
    """Return (tile_n, num_steps).

    tile_n is a multiple of 128 capped at cap_lanes; whenever more than one
    grid step is needed the step count is even (>= 2) so the "parallel" grid
    axis can shard across both v7x TensorCores with no idle tail step.
    """
    cols = pl.cdiv(n, 128)                  # 128-lane columns needed
    if cols <= 1:
        return 128, 1                       # tiny N: single step, single TC
    cap_cols = max(1, cap_lanes // 128)
    steps = 2 * pl.cdiv(cols, 2 * cap_cols)  # even, >= 2, tile <= cap
    tile_cols = pl.cdiv(cols, steps)
    return tile_cols * 128, steps


# ----------------------------------------------------------------------------
# Wrapper
# ----------------------------------------------------------------------------
def sc2_knn_neg_log(src_t, flow_t, *, d_thre=0.03, n_power_iters=10,
                    tile_n=None):
    """src_t / flow_t: [3, K, N] float32 (lane-dense layout).

    Returns per-point -log(sc2_rigidity), shape [N].
    """
    C, K, N = src_t.shape
    assert C == 3

    if tile_n is None:
        tile_n, steps = _select_tiling(N)
    else:
        assert tile_n % 128 == 0
        steps = pl.cdiv(N, tile_n)

    # Pad N up to steps * tile_n.  Padded columns are all-zero -> A = all-ones
    # -> score = 1 -> -log = 0; they are sliced off before returning.
    Np = steps * tile_n
    if Np != N:
        pad = Np - N
        src_t = jnp.pad(src_t, ((0, 0), (0, 0), (0, pad)))
        flow_t = jnp.pad(flow_t, ((0, 0), (0, 0), (0, pad)))

    kernel = functools.partial(_sc2_kernel, d_thre=float(d_thre),
                               n_power_iters=n_power_iters, K=K)

    out = pl.pallas_call(
        kernel,
        out_shape=jax.ShapeDtypeStruct((1, Np), jnp.float32),
        grid_spec=pltpu.PrefetchScalarGridSpec(
            num_scalar_prefetch=0,
            grid=(steps,),
            in_specs=[
                pl.BlockSpec((3, K, tile_n), lambda i: (0, 0, i)),
                pl.BlockSpec((3, K, tile_n), lambda i: (0, 0, i)),
            ],
            out_specs=pl.BlockSpec((1, tile_n), lambda i: (0, i)),
            # Explicit home for A: keeps the inevitable spill of the 16 row
            # slabs predictable and makes large tile_n regalloc-safe.
            scratch_shapes=[pltpu.VMEM((K, K, tile_n), jnp.float32)],
        ),
        compiler_params=pltpu.CompilerParams(
            dimension_semantics=("parallel",)),
    )(src_t, flow_t)

    return out[0, :N]                                          # [N]


class SC2KNNClusterAware:
    """JAX/Pallas port of SC2_KNN_cluster_aware (B assumed == 1 like the ref)."""

    def __init__(self, pc1, K=16, d_thre=0.03):
        # pc1: [B, N, 3]
        self.d_thre = float(d_thre)
        self.K = int(K)
        # knn_points(pc1, pc1, K): brute-force squared dists + top_k (much
        # cheaper than a full argsort); self point comes first.
        # TODO(synk): tie-breaking for coincident points can differ from
        #             pytorch3d.knn_points.
        d2 = jnp.sum((pc1[:, :, None, :] - pc1[:, None, :, :]) ** 2, axis=-1)
        _, idx = jax.lax.top_k(-d2, self.K)                    # [B, N, K]
        self.kNN = idx
        src_keypts = pc1[0][idx[0]]                            # [N, K, 3]
        self.src_keypts = src_keypts
        # Pre-transposed lane-dense layout [3, K, N] consumed by the kernel.
        self.src_t = jnp.transpose(src_keypts, (2, 1, 0))      # [3, K, N]

    def forward(self, flow, ids=None):
        # TODO(synk): forward only; no custom_vjp is defined for jax.grad.
        flow_knn = flow[0][self.kNN[0]]                        # [N, K, 3]
        flow_t = jnp.transpose(flow_knn, (2, 1, 0))            # [3, K, N]
        neg_log = sc2_knn_neg_log(self.src_t, flow_t, d_thre=self.d_thre)
        return jnp.mean(neg_log)                               # scalar loss

    __call__ = forward


# ----------------------------------------------------------------------------
# Pure-JAX reference (mirrors the torch module) for a correctness check
# ----------------------------------------------------------------------------
def _sc2_reference(src_keypts, flow_knn, d_thre=0.03, n_iters=10):
    src = src_keypts.astype(jnp.float32)
    tgt = src + flow_knn.astype(jnp.float32)

    def pd(x):
        d = x[:, :, None, :] - x[:, None, :, :]
        return jnp.sqrt(jnp.sum(d * d, axis=-1))

    sd, td = pd(src), pd(tgt)
    cross = jnp.abs(sd - td)
    A = jnp.maximum(1.0 - cross ** 2 / d_thre ** 2, 0.0)
    N, K = src.shape[0], src.shape[1]
    v = jnp.ones((N, K), jnp.float32)
    for _ in range(n_iters):
        v = jnp.einsum('nij,nj->ni', A, v)
        v = v / (jnp.linalg.norm(v, axis=-1, keepdims=True) + 1e-6)
    Av = jnp.einsum('nij,nj->ni', A, v)
    score = jnp.sum(v * Av, axis=-1) / K
    return jnp.mean(-jnp.log(score))


# ----------------------------------------------------------------------------
# Demo
# ----------------------------------------------------------------------------
if __name__ == "__main__":
    key = jax.random.PRNGKey(0)
    k_pc, k_fl = jax.random.split(key)

    # N = 200 exercises both the lane padding and the even (2-step) grid.
    B, N, K = 1, 200, 16
    pc1 = jax.random.uniform(k_pc, (B, N, 3), dtype=jnp.float32) * 2.0
    flow = jax.random.normal(k_fl, (B, N, 3), dtype=jnp.float32) * 0.02

    module = SC2KNNClusterAware(pc1, K=K, d_thre=0.03)
    loss = module(flow)
    loss = jax.block_until_ready(loss)

    assert loss.shape == () and jnp.isfinite(loss)

    # Sanity-check against the plain-JAX reference of the torch module.
    flow_knn = flow[0][module.kNN[0]]
    ref = jax.block_until_ready(
        _sc2_reference(module.src_keypts, flow_knn, d_thre=0.03))
    assert jnp.abs(loss - ref) < 1e-2 * (1.0 + jnp.abs(ref)), (loss, ref)

    print("KERNEL_OK")
</pallas_src>

<mosaic_0001>
module attributes {stable_mosaic.version = 11 : i64} {
  func.func @_sc2_kernel(%arg0: i32, %arg1: memref<3x16x128xf32, #tpu.memory_space<vmem>>, %arg2: memref<3x16x128xf32, #tpu.memory_space<vmem>>, %arg3: memref<1x128xf32, #tpu.memory_space<vmem>>, %arg4: memref<16x16x128xf32, #tpu.memory_space<vmem>>) attributes {dimension_semantics = [#tpu.dimension_semantics<parallel>], iteration_bounds = array<i64: 2>, scalar_prefetch = 0 : i64, scratch_operands = 1 : i64, tpu.core_type = #tpu.core_type<tc>, window_params = [{transform_indices = @transform_0, window_bounds = array<i64: 3, 16, 128>}, {transform_indices = @transform_1, window_bounds = array<i64: 3, 16, 128>}, {transform_indices = @transform_2, window_bounds = array<i64: 1, 128>}]} {
    %c0 = arith.constant 0 : index
    %c0_0 = arith.constant 0 : index
    %c0_1 = arith.constant 0 : index
    %0 = vector.load %arg1[%c0, %c0_0, %c0_1] : memref<3x16x128xf32, #tpu.memory_space<vmem>>, vector<3x16x128xf32>
    %c0_2 = arith.constant 0 : index
    %c0_3 = arith.constant 0 : index
    %c0_4 = arith.constant 0 : index
    %1 = vector.load %arg2[%c0_2, %c0_3, %c0_4] : memref<3x16x128xf32, #tpu.memory_space<vmem>>, vector<3x16x128xf32>
    %2 = arith.addf %0, %1 : vector<3x16x128xf32>
    %3 = vector.extract_strided_slice %0 {offsets = [0, 0, 0], sizes = [1, 16, 128], strides = [1, 1, 1]} : vector<3x16x128xf32> to vector<1x16x128xf32>
    %4 = vector.shape_cast %3 : vector<1x16x128xf32> to vector<16x128xf32>
    %5 = vector.extract_strided_slice %0 {offsets = [1, 0, 0], sizes = [1, 16, 128], strides = [1, 1, 1]} : vector<3x16x128xf32> to vector<1x16x128xf32>
    %6 = vector.shape_cast %5 : vector<1x16x128xf32> to vector<16x128xf32>
    %7 = vector.extract_strided_slice %0 {offsets = [2, 0, 0], sizes = [1, 16, 128], strides = [1, 1, 1]} : vector<3x16x128xf32> to vector<1x16x128xf32>
    %8 = vector.shape_cast %7 : vector<1x16x128xf32> to vector<16x128xf32>
    %9 = vector.extract_strided_slice %2 {offsets = [0, 0, 0], sizes = [1, 16, 128], strides = [1, 1, 1]} : vector<3x16x128xf32> to vector<1x16x128xf32>
    %10 = vector.shape_cast %9 : vector<1x16x128xf32> to vector<16x128xf32>
    %11 = vector.extract_strided_slice %2 {offsets = [1, 0, 0], sizes = [1, 16, 128], strides = [1, 1, 1]} : vector<3x16x128xf32> to vector<1x16x128xf32>
    %12 = vector.shape_cast %11 : vector<1x16x128xf32> to vector<16x128xf32>
    %13 = vector.extract_strided_slice %2 {offsets = [2, 0, 0], sizes = [1, 16, 128], strides = [1, 1, 1]} : vector<3x16x128xf32> to vector<1x16x128xf32>
    %14 = vector.shape_cast %13 : vector<1x16x128xf32> to vector<16x128xf32>
    %15 = vector.extract_strided_slice %4 {offsets = [0, 0], sizes = [1, 128], strides = [1, 1]} : vector<16x128xf32> to vector<1x128xf32>
    %16 = vector.broadcast %15 : vector<1x128xf32> to vector<16x128xf32>
    %17 = arith.subf %16, %4 : vector<16x128xf32>
    %18 = arith.mulf %17, %17 : vector<16x128xf32>
    %19 = vector.extract_strided_slice %6 {offsets = [0, 0], sizes = [1, 128], strides = [1, 1]} : vector<16x128xf32> to vector<1x128xf32>
    %20 = vector.broadcast %19 : vector<1x128xf32> to vector<16x128xf32>
    %21 = arith.subf %20, %6 : vector<16x128xf32>
    %22 = arith.mulf %21, %21 : vector<16x128xf32>
    %23 = arith.addf %18, %22 : vector<16x128xf32>
    %24 = vector.extract_strided_slice %8 {offsets = [0, 0], sizes = [1, 128], strides = [1, 1]} : vector<16x128xf32> to vector<1x128xf32>
    %25 = vector.broadcast %24 : vector<1x128xf32> to vector<16x128xf32>
    %26 = arith.subf %25, %8 : vector<16x128xf32>
    %27 = arith.mulf %26, %26 : vector<16x128xf32>
    %28 = arith.addf %23, %27 : vector<16x128xf32>
    %29 = vector.extract_strided_slice %10 {offsets = [0, 0], sizes = [1, 128], strides = [1, 1]} : vector<16x128xf32> to vector<1x128xf32>
    %30 = vector.broadcast %29 : vector<1x128xf32> to vector<16x128xf32>
    %31 = arith.subf %30, %10 : vector<16x128xf32>
    %32 = arith.mulf %31, %31 : vector<16x128xf32>
    %33 = vector.extract_strided_slice %12 {offsets = [0, 0], sizes = [1, 128], strides = [1, 1]} : vector<16x128xf32> to vector<1x128xf32>
    %34 = vector.broadcast %33 : vector<1x128xf32> to vector<16x128xf32>
    %35 = arith.subf %34, %12 : vector<16x128xf32>
    %36 = arith.mulf %35, %35 : vector<16x128xf32>
    %37 = arith.addf %32, %36 : vector<16x128xf32>
    %38 = vector.extract_strided_slice %14 {offsets = [0, 0], sizes = [1, 128], strides = [1, 1]} : vector<16x128xf32> to vector<1x128xf32>
    %39 = vector.broadcast %38 : vector<1x128xf32> to vector<16x128xf32>
    %40 = arith.subf %39, %14 : vector<16x128xf32>
    %41 = arith.mulf %40, %40 : vector<16x128xf32>
    %42 = arith.addf %37, %41 : vector<16x128xf32>
    %43 = math.sqrt %28 : vector<16x128xf32>
    %44 = math.sqrt %42 : vector<16x128xf32>
    %45 = arith.subf %43, %44 : vector<16x128xf32>
    %cst = arith.constant 33.3333321 : f32
    %46 = vector.broadcast %cst : f32 to vector<16x128xf32>
    %47 = arith.mulf %45, %46 : vector<16x128xf32>
    %48 = arith.mulf %47, %47 : vector<16x128xf32>
    %cst_5 = arith.constant 1.000000e+00 : f32
    %49 = vector.broadcast %cst_5 : f32 to vector<16x128xf32>
    %50 = arith.subf %49, %48 : vector<16x128xf32>
    %cst_6 = arith.constant 0.000000e+00 : f32
    %51 = vector.broadcast %cst_6 : f32 to vector<16x128xf32>
    %52 = arith.maximumf %50, %51 : vector<16x128xf32>
    %c0_7 = arith.constant 0 : index
    %c0_8 = arith.constant 0 : index
    %c0_9 = arith.constant 0 : index
    %53 = vector.load %arg4[%c0_7, %c0_8, %c0_9] : memref<16x16x128xf32, #tpu.memory_space<vmem>>, vector<1x16x128xf32>
    %54 = vector.shape_cast %53 : vector<1x16x128xf32> to vector<16x128xf32>
    %55 = vector.shape_cast %52 : vector<16x128xf32> to vector<1x16x128xf32>
    tpu.vector_store %arg4[%c0_7, %c0_8, %c0_9], %55 {strides = array<i32>} : memref<16x16x128xf32, #tpu.memory_space<vmem>>, vector<1x16x128xf32>,
    %56 = vector.extract_strided_slice %4 {offsets = [1, 0], sizes = [1, 128], strides = [1, 1]} : vector<16x128xf32> to vector<1x128xf32>
    %57 = vector.broadcast %56 : vector<1x128xf32> to vector<16x128xf32>
    %58 = arith.subf %57, %4 : vector<16x128xf32>
    %59 = arith.mulf %58, %58 : vector<16x128xf32>
    %60 = vector.extract_strided_slice %6 {offsets = [1, 0], sizes = [1, 128], strides = [1, 1]} : vector<16x128xf32> to vector<1x128xf32>
    %61 = vector.broadcast %60 : vector<1x128xf32> to vector<16x128xf32>
    %62 = arith.subf %61, %6 : vector<16x128xf32>
    %63 = arith.mulf %62, %62 : vector<16x128xf32>
    %64 = arith.addf %59, %63 : vector<16x128xf32>
    %65 = vector.extract_strided_slice %8 {offsets = [1, 0], sizes = [1, 128], strides = [1, 1]} : vector<16x128xf32> to vector<1x128xf32>
    %66 = vector.broadcast %65 : vector<1x128xf32> to vector<16x128xf32>
    %67 = arith.subf %66, %8 : vector<16x128xf32>
    %68 = arith.mulf %67, %67 : vector<16x128xf32>
    %69 = arith.addf %64, %68 : vector<16x128xf32>
    %70 = vector.extract_strided_slice %10 {offsets = [1, 0], sizes = [1, 128], strides = [1, 1]} : vector<16x128xf32> to vector<1x128xf32>
    %71 = vector.broadcast %70 : vector<1x128xf32> to vector<16x128xf32>
    %72 = arith.subf %71, %10 : vector<16x128xf32>
    %73 = arith.mulf %72, %72 : vector<16x128xf32>
    %74 = vector.extract_strided_slice %12 {offsets = [1, 0], sizes = [1, 128], strides = [1, 1]} : vector<16x128xf32> to vector<1x128xf32>
    %75 = vector.broadcast %74 : vector<1x128xf32> to vector<16x128xf32>
    %76 = arith.subf %75, %12 : vector<16x128xf32>
    %77 = arith.mulf %76, %76 : vector<16x128xf32>
    %78 = arith.addf %73, %77 : vector<16x128xf32>
    %79 = vector.extract_strided_slice %14 {offsets = [1, 0], sizes = [1, 128], strides = [1, 1]} : vector<16x128xf32> to vector<1x128xf32>
    %80 = vector.broadcast %79 : vector<1x128xf32> to vector<16x128xf32>
    %81 = arith.subf %80, %14 : vector<16x128xf32>
    %82 = arith.mulf %81, %81 : vector<16x128xf32>
    %83 = arith.addf %78, %82 : vector<16x128xf32>
    %84 = math.sqrt %69 : vector<16x128xf32>
    %85 = math.sqrt %83 : vector<16x128xf32>
    %86 = arith.subf %84, %85 : vector<16x128xf32>
    %cst_10 = arith.constant 33.3333321 : f32
    %87 = vector.broadcast %cst_10 : f32 to vector<16x128xf32>
    %88 = arith.mulf %86, %87 : vector<16x128xf32>
    %89 = arith.mulf %88, %88 : vector<16x128xf32>
    %cst_11 = arith.constant 1.000000e+00 : f32
    %90 = vector.broadcast %cst_11 : f32 to vector<16x128xf32>
    %91 = arith.subf %90, %89 : vector<16x128xf32>
    %cst_12 = arith.constant 0.000000e+00 : f32
    %92 = vector.broadcast %cst_12 : f32 to vector<16x128xf32>
    %93 = arith.maximumf %91, %92 : vector<16x128xf32>
    %c1 = arith.constant 1 : index
    %c0_13 = arith.constant 0 : index
    %c0_14 = arith.constant 0 : index
    %94 = vector.load %arg4[%c1, %c0_13, %c0_14] : memref<16x16x128xf32, #tpu.memory_space<vmem>>, vector<1x16x128xf32>
    %95 = vector.shape_cast %94 : vector<1x16x128xf32> to vector<16x128xf32>
    %96 = vector.shape_cast %93 : vector<16x128xf32> to vector<1x16x128xf32>
    tpu.vector_store %arg4[%c1, %c0_13, %c0_14], %96 {strides = array<i32>} : memref<16x16x128xf32, #tpu.memory_space<vmem>>, vector<1x16x128xf32>,
    %97 = arith.addf %52, %93 : vector<16x128xf32>
    %98 = vector.extract_strided_slice %4 {offsets = [2, 0], sizes = [1, 128], strides = [1, 1]} : vector<16x128xf32> to vector<1x128xf32>
    %99 = vector.broadcast %98 : vector<1x128xf32> to vector<16x128xf32>
    %100 = arith.subf %99, %4 : vector<16x128xf32>
    %101 = arith.mulf %100, %100 : vector<16x128xf32>
    %102 = vector.extract_strided_slice %6 {offsets = [2, 0], sizes = [1, 128], strides = [1, 1]} : vector<16x128xf32> to vector<1x128xf32>
    %103 = vector.broadcast %102 : vector<1x128xf32> to vector<16x128xf32>
    %104 = arith.subf %103, %6 : vector<16x128xf32>
    %105 = arith.mulf %104, %104 : vector<16x128xf32>
    %106 = arith.addf %101, %105 : vector<16x128xf32>
    %107 = vector.extract_strided_slice %8 {offsets = [2, 0], sizes = [1, 128], strides = [1, 1]} : vector<16x128xf32> to vector<1x128xf32>
    %108 = vector.broadcast %107 : vector<1x128xf32> to vector<16x128xf32>
    %109 = arith.subf %108, %8 : vector<16x128xf32>
    %110 = arith.mulf %109, %109 : vector<16x128xf32>
    %111 = arith.addf %106, %110 : vector<16x128xf32>
    %112 = vector.extract_strided_slice %10 {offsets = [2, 0], sizes = [1, 128], strides = [1, 1]} : vector<16x128xf32> to vector<1x128xf32>
    %113 = vector.broadcast %112 : vector<1x128xf32> to vector<16x128xf32>
    %114 = arith.subf %113, %10 : vector<16x128xf32>
    %115 = arith.mulf %114, %114 : vector<16x128xf32>
    %116 = vector.extract_strided_slice %12 {offsets = [2, 0], sizes = [1, 128], strides = [1, 1]} : vector<16x128xf32> to vector<1x128xf32>
    %117 = vector.broadcast %116 : vector<1x128xf32> to vector<16x128xf32>
    %118 = arith.subf %117, %12 : vector<16x128xf32>
    %119 = arith.mulf %118, %118 : vector<16x128xf32>
    %120 = arith.addf %115, %119 : vector<16x128xf32>
    %121 = vector.extract_strided_slice %14 {offsets = [2, 0], sizes = [1, 128], strides = [1, 1]} : vector<16x128xf32> to vector<1x128xf32>
    %122 = vector.broadcast %121 : vector<1x128xf32> to vector<16x128xf32>
    %123 = arith.subf %122, %14 : vector<16x128xf32>
    %124 = arith.mulf %123, %123 : vector<16x128xf32>
    %125 = arith.addf %120, %124 : vector<16x128xf32>
    %126 = math.sqrt %111 : vector<16x128xf32>
    %127 = math.sqrt %125 : vector<16x128xf32>
    %128 = arith.subf %126, %127 : vector<16x128xf32>
    %cst_15 = arith.constant 33.3333321 : f32
    %129 = vector.broadcast %cst_15 : f32 to vector<16x128xf32>
    %130 = arith.mulf %128, %129 : vector<16x128xf32>
    %131 = arith.mulf %130, %130 : vector<16x128xf32>
    %cst_16 = arith.constant 1.000000e+00 : f32
    %132 = vector.broadcast %cst_16 : f32 to vector<16x128xf32>
    %133 = arith.subf %132, %131 : vector<16x128xf32>
    %cst_17 = arith.constant 0.000000e+00 : f32
    %134 = vector.broadcast %cst_17 : f32 to vector<16x128xf32>
    %135 = arith.maximumf %133, %134 : vector<16x128xf32>
    %c2 = arith.constant 2 : index
    %c0_18 = arith.constant 0 : index
    %c0_19 = arith.constant 0 : index
    %136 = vector.load %arg4[%c2, %c0_18, %c0_19] : memref<16x16x128xf32, #tpu.memory_space<vmem>>, vector<1x16x128xf32>
    %137 = vector.shape_cast %136 : vector<1x16x128xf32> to vector<16x128xf32>
    %138 = vector.shape_cast %135 : vector<16x128xf32> to vector<1x16x128xf32>
    tpu.vector_store %arg4[%c2, %c0_18, %c0_19], %138 {strides = array<i32>} : memref<16x16x128xf32, #tpu.memory_space<vmem>>, vector<1x16x128xf32>,
    %139 = arith.addf %97, %135 : vector<16x128xf32>
    %140 = vector.extract_strided_slice %4 {offsets = [3, 0], sizes = [1, 128], strides = [1, 1]} : vector<16x128xf32> to vector<1x128xf32>
    %141 = vector.broadcast %140 : vector<1x128xf32> to vector<16x128xf32>
    %142 = arith.subf %141, %4 : vector<16x128xf32>
    %143 = arith.mulf %142, %142 : vector<16x128xf32>
    %144 = vector.extract_strided_slice %6 {offsets = [3, 0], sizes = [1, 128], strides = [1, 1]} : vector<16x128xf32> to vector<1x128xf32>
    %145 = vector.broadcast %144 : vector<1x128xf32> to vector<16x128xf32>
    %146 = arith.subf %145, %6 : vector<16x128xf32>
    %147 = arith.mulf %146, %146 : vector<16x128xf32>
    %148 = arith.addf %143, %147 : vector<16x128xf32>
    %149 = vector.extract_strided_slice %8 {offsets = [3, 0], sizes = [1, 128], strides = [1, 1]} : vector<16x128xf32> to vector<1x128xf32>
    %150 = vector.broadcast %149 : vector<1x128xf32> to vector<16x128xf32>
    %151 = arith.subf %150, %8 : vector<16x128xf32>
    %152 = arith.mulf %151, %151 : vector<16x128xf32>
    %153 = arith.addf %148, %152 : vector<16x128xf32>
    %154 = vector.extract_strided_slice %10 {offsets = [3, 0], sizes = [1, 128], strides = [1, 1]} : vector<16x128xf32> to vector<1x128xf32>
    %155 = vector.broadcast %154 : vector<1x128xf32> to vector<16x128xf32>
    %156 = arith.subf %155, %10 : vector<16x128xf32>
    %157 = arith.mulf %156, %156 : vector<16x128xf32>
    %158 = vector.extract_strided_slice %12 {offsets = [3, 0], sizes = [1, 128], strides = [1, 1]} : vector<16x128xf32> to vector<1x128xf32>
    %159 = vector.broadcast %158 : vector<1x128xf32> to vector<16x128xf32>
    %160 = arith.subf %159, %12 : vector<16x128xf32>
    %161 = arith.mulf %160, %160 : vector<16x128xf32>
    %162 = arith.addf %157, %161 : vector<16x128xf32>
    %163 = vector.extract_strided_slice %14 {offsets = [3, 0], sizes = [1, 128], strides = [1, 1]} : vector<16x128xf32> to vector<1x128xf32>
    %164 = vector.broadcast %163 : vector<1x128xf32> to vector<16x128xf32>
    %165 = arith.subf %164, %14 : vector<16x128xf32>
    %166 = arith.mulf %165, %165 : vector<16x128xf32>
    %167 = arith.addf %162, %166 : vector<16x128xf32>
    %168 = math.sqrt %153 : vector<16x128xf32>
    %169 = math.sqrt %167 : vector<16x128xf32>
    %170 = arith.subf %168, %169 : vector<16x128xf32>
    %cst_20 = arith.constant 33.3333321 : f32
    %171 = vector.broadcast %cst_20 : f32 to vector<16x128xf32>
    %172 = arith.mulf %170, %171 : vector<16x128xf32>
    %173 = arith.mulf %172, %172 : vector<16x128xf32>
    %cst_21 = arith.constant 1.000000e+00 : f32
    %174 = vector.broadcast %cst_21 : f32 to vector<16x128xf32>
    %175 = arith.subf %174, %173 : vector<16x128xf32>
    %cst_22 = arith.constant 0.000000e+00 : f32
    %176 = vector.broadcast %cst_22 : f32 to vector<16x128xf32>
    %177 = arith.maximumf %175, %176 : vector<16x128xf32>
    %c3 = arith.constant 3 : index
    %c0_23 = arith.constant 0 : index
    %c0_24 = arith.constant 0 : index
    %178 = vector.load %arg4[%c3, %c0_23, %c0_24] : memref<16x16x128xf32, #tpu.memory_space<vmem>>, vector<1x16x128xf32>
    %179 = vector.shape_cast %178 : vector<1x16x128xf32> to vector<16x128xf32>
    %180 = vector.shape_cast %177 : vector<16x128xf32> to vector<1x16x128xf32>
    tpu.vector_store %arg4[%c3, %c0_23, %c0_24], %180 {strides = array<i32>} : memref<16x16x128xf32, #tpu.memory_space<vmem>>, vector<1x16x128xf32>,
    %181 = arith.addf %139, %177 : vector<16x128xf32>
    %182 = vector.extract_strided_slice %4 {offsets = [4, 0], sizes = [1, 128], strides = [1, 1]} : vector<16x128xf32> to vector<1x128xf32>
    %183 = vector.broadcast %182 : vector<1x128xf32> to vector<16x128xf32>
    %184 = arith.subf %183, %4 : vector<16x128xf32>
    %185 = arith.mulf %184, %184 : vector<16x128xf32>
    %186 = vector.extract_strided_slice %6 {offsets = [4, 0], sizes = [1, 128], strides = [1, 1]} : vector<16x128xf32> to vector<1x128xf32>
    %187 = vector.broadcast %186 : vector<1x128xf32> to vector<16x128xf32>
    %188 = arith.subf %187, %6 : vector<16x128xf32>
    %189 = arith.mulf %188, %188 : vector<16x128xf32>
    %190 = arith.addf %185, %189 : vector<16x128xf32>
    %191 = vector.extract_strided_slice %8 {offsets = [4, 0], sizes = [1, 128], strides = [1, 1]} : vector<16x128xf32> to vector<1x128xf32>
    %192 = vector.broadcast %191 : vector<1x128xf32> to vector<16x128xf32>
    %193 = arith.subf %192, %8 : vector<16x128xf32>
    %194 = arith.mulf %193, %193 : vector<16x128xf32>
    %195 = arith.addf %190, %194 : vector<16x128xf32>
    %196 = vector.extract_strided_slice %10 {offsets = [4, 0], sizes = [1, 128], strides = [1, 1]} : vector<16x128xf32> to vector<1x128xf32>
    %197 = vector.broadcast %196 : vector<1x128xf32> to vector<16x128xf32>
    %198 = arith.subf %197, %10 : vector<16x128xf32>
    %199 = arith.mulf %198, %198 : vector<16x128xf32>
    %200 = vector.extract_strided_slice %12 {offsets = [4, 0], sizes = [1, 128], strides = [1, 1]} : vector<16x128xf32> to vector<1x128xf32>
    %201 = vector.broadcast %200 : vector<1x128xf32> to vector<16x128xf32>
    %202 = arith.subf %201, %12 : vector<16x128xf32>
    %203 = arith.mulf %202, %202 : vector<16x128xf32>
    %204 = arith.addf %199, %203 : vector<16x128xf32>
    %205 = vector.extract_strided_slice %14 {offsets = [4, 0], sizes = [1, 128], strides = [1, 1]} : vector<16x128xf32> to vector<1x128xf32>
    %206 = vector.broadcast %205 : vector<1x128xf32> to vector<16x128xf32>
    %207 = arith.subf %206, %14 : vector<16x128xf32>
    %208 = arith.mulf %207, %207 : vector<16x128xf32>
    %209 = arith.addf %204, %208 : vector<16x128xf32>
    %210 = math.sqrt %195 : vector<16x128xf32>
    %211 = math.sqrt %209 : vector<16x128xf32>
    %212 = arith.subf %210, %211 : vector<16x128xf32>
    %cst_25 = arith.constant 33.3333321 : f32
    %213 = vector.broadcast %cst_25 : f32 to vector<16x128xf32>
    %214 = arith.mulf %212, %213 : vector<16x128xf32>
    %215 = arith.mulf %214, %214 : vector<16x128xf32>
    %cst_26 = arith.constant 1.000000e+00 : f32
    %216 = vector.broadcast %cst_26 : f32 to vector<16x128xf32>
    %217 = arith.subf %216, %215 : vector<16x128xf32>
    %cst_27 = arith.constant 0.000000e+00 : f32
    %218 = vector.broadcast %cst_27 : f32 to vector<16x128xf32>
    %219 = arith.maximumf %217, %218 : vector<16x128xf32>
    %c4 = arith.constant 4 : index
    %c0_28 = arith.constant 0 : index
    %c0_29 = arith.constant 0 : index
    %220 = vector.load %arg4[%c4, %c0_28, %c0_29] : memref<16x16x128xf32, #tpu.memory_space<vmem>>, vector<1x16x128xf32>
    %221 = vector.shape_cast %220 : vector<1x16x128xf32> to vector<16x128xf32>
    %222 = vector.shape_cast %219 : vector<16x128xf32> to vector<1x16x128xf32>
    tpu.vector_store %arg4[%c4, %c0_28, %c0_29], %222 {strides = array<i32>} : memref<16x16x128xf32, #tpu.memory_space<vmem>>, vector<1x16x128xf32>,
    %223 = arith.addf %181, %219 : vector<16x128xf32>
    %224 = vector.extract_strided_slice %4 {offsets = [5, 0], sizes = [1, 128], strides = [1, 1]} : vector<16x128xf32> to vector<1x128xf32>
    %225 = vector.broadcast %224 : vector<1x128xf32> to vector<16x128xf32>
    %226 = arith.subf %225, %4 : vector<16x128xf32>
    %227 = arith.mulf %226, %226 : vector<16x128xf32>
    %228 = vector.extract_strided_slice %6 {offsets = [5, 0], sizes = [1, 128], strides = [1, 1]} : vector<16x128xf32> to vector<1x128xf32>
    %229 = vector.broadcast %228 : vector<1x128xf32> to vector<16x128xf32>
    %230 = arith.subf %229, %6 : vector<16x128xf32>
    %231 = arith.mulf %230, %230 : vector<16x128xf32>
    %232 = arith.addf %227, %231 : vector<16x128xf32>
    %233 = vector.extract_strided_slice %8 {offsets = [5, 0], sizes = [1, 128], strides = [1, 1]} : vector<16x128xf32> to vector<1x128xf32>
    %234 = vector.broadcast %233 : vector<1x128xf32> to vector<16x128xf32>
    %235 = arith.subf %234, %8 : vector<16x128xf32>
    %236 = arith.mulf %235, %235 : vector<16x128xf32>
    %237 = arith.addf %232, %236 : vector<16x128xf32>
    %238 = vector.extract_strided_slice %10 {offsets = [5, 0], sizes = [1, 128], strides = [1, 1]} : vector<16x128xf32> to vector<1x128xf32>
    %239 = vector.broadcast %238 : vector<1x128xf32> to vector<16x128xf32>
    %240 = arith.subf %239, %10 : vector<16x128xf32>
    %241 = arith.mulf %240, %240 : vector<16x128xf32>
    %242 = vector.extract_strided_slice %12 {offsets = [5, 0], sizes = [1, 128], strides = [1, 1]} : vector<16x128xf32> to vector<1x128xf32>
    %243 = vector.broadcast %242 : vector<1x128xf32> to vector<16x128xf32>
    %244 = arith.subf %243, %12 : vector<16x128xf32>
    %245 = arith.mulf %244, %244 : vector<16x128xf32>
    %246 = arith.addf %241, %245 : vector<16x128xf32>
    %247 = vector.extract_strided_slice %14 {offsets = [5, 0], sizes = [1, 128], strides = [1, 1]} : vector<16x128xf32> to vector<1x128xf32>
    %248 = vector.broadcast %247 : vector<1x128xf32> to vector<16x128xf32>
    %249 = arith.subf %248, %14 : vector<16x128xf32>
    %250 = arith.mulf %249, %249 : vector<16x128xf32>
    %251 = arith.addf %246, %250 : vector<16x128xf32>
    %252 = math.sqrt %237 : vector<16x128xf32>
    %253 = math.sqrt %251 : vector<16x128xf32>
    %254 = arith.subf %252, %253 : vector<16x128xf32>
    %cst_30 = arith.constant 33.3333321 : f32
    %255 = vector.broadcast %cst_30 : f32 to vector<16x128xf32>
    %256 = arith.mulf %254, %255 : vector<16x128xf32>
    %257 = arith.mulf %256, %256 : vector<16x128xf32>
    %cst_31 = arith.constant 1.000000e+00 : f32
    %258 = vector.broadcast %cst_31 : f32 to vector<16x128xf32>
    %259 = arith.subf %258, %257 : vector<16x128xf32>
    %cst_32 = arith.constant 0.000000e+00 : f32
    %260 = vector.broadcast %cst_32 : f32 to vector<16x128xf32>
    %261 = arith.maximumf %259, %260 : vector<16x128xf32>
    %c5 = arith.constant 5 : index
    %c0_33 = arith.constant 0 : index
    %c0_34 = arith.constant 0 : index
    %262 = vector.load %arg4[%c5, %c0_33, %c0_34] : memref<16x16x128xf32, #tpu.memory_space<vmem>>, vector<1x16x128xf32>
    %263 = vector.shape_cast %262 : vector<1x16x128xf32> to vector<16x128xf32>
    %264 = vector.shape_cast %261 : vector<16x128xf32> to vector<1x16x128xf32>
    tpu.vector_store %arg4[%c5, %c0_33, %c0_34], %264 {strides = array<i32>} : memref<16x16x128xf32, #tpu.memory_space<vmem>>, vector<1x16x128xf32>,
    %265 = arith.addf %223, %261 : vector<16x128xf32>
    %266 = vector.extract_strided_slice %4 {offsets = [6, 0], sizes = [1, 128], strides = [1, 1]} : vector<16x128xf32> to vector<1x128xf32>
    %267 = vector.broadcast %266 : vector<1x128xf32> to vector<16x128xf32>
    %268 = arith.subf %267, %4 : vector<16x128xf32>
    %269 = arith.mulf %268, %268 : vector<16x128xf32>
    %270 = vector.extract_strided_slice %6 {offsets = [6, 0], sizes = [1, 128], strides = [1, 1]} : vector<16x128xf32> to vector<1x128xf32>
    %271 = vector.broadcast %270 : vector<1x128xf32> to vector<16x128xf32>
    %272 = arith.subf %271, %6 : vector<16x128xf32>
    %273 = arith.mulf %272, %272 : vector<16x128xf32>
    %274 = arith.addf %269, %273 : vector<16x128xf32>
    %275 = vector.extract_strided_slice %8 {offsets = [6, 0], sizes = [1, 128], strides = [1, 1]} : vector<16x128xf32> to vector<1x128xf32>
    %276 = vector.broadcast %275 : vector<1x128xf32> to vector<16x128xf32>
    %277 = arith.subf %276, %8 : vector<16x128xf32>
    %278 = arith.mulf %277, %277 : vector<16x128xf32>
    %279 = arith.addf %274, %278 : vector<16x128xf32>
    %280 = vector.extract_strided_slice %10 {offsets = [6, 0], sizes = [1, 128], strides = [1, 1]} : vector<16x128xf32> to vector<1x128xf32>
    %281 = vector.broadcast %280 : vector<1x128xf32> to vector<16x128xf32>
    %282 = arith.subf %281, %10 : vector<16x128xf32>
    %283 = arith.mulf %282, %282 : vector<16x128xf32>
    %284 = vector.extract_strided_slice %12 {offsets = [6, 0], sizes = [1, 128], strides = [1, 1]} : vector<16x128xf32> to vector<1x128xf32>
    %285 = vector.broadcast %284 : vector<1x128xf32> to vector<16x128xf32>
    %286 = arith.subf %285, %12 : vector<16x128xf32>
    %287 = arith.mulf %286, %286 : vector<16x128xf32>
    %288 = arith.addf %283, %287 : vector<16x128xf32>
    %289 = vector.extract_strided_slice %14 {offsets = [6, 0], sizes = [1, 128], strides = [1, 1]} : vector<16x128xf32> to vector<1x128xf32>
    %290 = vector.broadcast %289 : vector<1x128xf32> to vector<16x128xf32>
    %291 = arith.subf %290, %14 : vector<16x128xf32>
    %292 = arith.mulf %291, %291 : vector<16x128xf32>
    %293 = arith.addf %288, %292 : vector<16x128xf32>
    %294 = math.sqrt %279 : vector<16x128xf32>
    %295 = math.sqrt %293 : vector<16x128xf32>
    %296 = arith.subf %294, %295 : vector<16x128xf32>
    %cst_35 = arith.constant 33.3333321 : f32
    %297 = vector.broadcast %cst_35 : f32 to vector<16x128xf32>
    %298 = arith.mulf %296, %297 : vector<16x128xf32>
    %299 = arith.mulf %298, %298 : vector<16x128xf32>
    %cst_36 = arith.constant 1.000000e+00 : f32
    %300 = vector.broadcast %cst_36 : f32 to vector<16x128xf32>
    %301 = arith.subf %300, %299 : vector<16x128xf32>
    %cst_37 = arith.constant 0.000000e+00 : f32
    %302 = vector.broadcast %cst_37 : f32 to vector<16x128xf32>
    %303 = arith.maximumf %301, %302 : vector<16x128xf32>
    %c6 = arith.constant 6 : index
    %c0_38 = arith.constant 0 : index
    %c0_39 = arith.constant 0 : index
    %304 = vector.load %arg4[%c6, %c0_38, %c0_39] : memref<16x16x128xf32, #tpu.memory_space<vmem>>, vector<1x16x128xf32>
    %305 = vector.shape_cast %304 : vector<1x16x128xf32> to vector<16x128xf32>
    %306 = vector.shape_cast %303 : vector<16x128xf32> to vector<1x16x128xf32>
    tpu.vector_store %arg4[%c6, %c0_38, %c0_39], %306 {strides = array<i32>} : memref<16x16x128xf32, #tpu.memory_space<vmem>>, vector<1x16x128xf32>,
    %307 = arith.addf %265, %303 : vector<16x128xf32>
    %308 = vector.extract_strided_slice %4 {offsets = [7, 0], sizes = [1, 128], strides = [1, 1]} : vector<16x128xf32> to vector<1x128xf32>
    %309 = vector.broadcast %308 : vector<1x128xf32> to vector<16x128xf32>
    %310 = arith.subf %309, %4 : vector<16x128xf32>
    %311 = arith.mulf %310, %310 : vector<16x128xf32>
    %312 = vector.extract_strided_slice %6 {offsets = [7, 0], sizes = [1, 128], strides = [1, 1]} : vector<16x128xf32> to vector<1x128xf32>
    %313 = vector.broadcast %312 : vector<1x128xf32> to vector<16x128xf32>
    %314 = arith.subf %313, %6 : vector<16x128xf32>
    %315 = arith.mulf %314, %314 : vector<16x128xf32>
    %316 = arith.addf %311, %315 : vector<16x128xf32>
    %317 = vector.extract_strided_slice %8 {offsets = [7, 0], sizes = [1, 128], strides = [1, 1]} : vector<16x128xf32> to vector<1x128xf32>
    %318 = vector.broadcast %317 : vector<1x128xf32> to vector<16x128xf32>
    %319 = arith.subf %318, %8 : vector<16x128xf32>
    %320 = arith.mulf %319, %319 : vector<16x128xf32>
    %321 = arith.addf %316, %320 : vector<16x128xf32>
    %322 = vector.extract_strided_slice %10 {offsets = [7, 0], sizes = [1, 128], strides = [1, 1]} : vector<16x128xf32> to vector<1x128xf32>
    %323 = vector.broadcast %322 : vector<1x128xf32> to vector<16x128xf32>
    %324 = arith.subf %323, %10 : vector<16x128xf32>
    %325 = arith.mulf %324, %324 : vector<16x128xf32>
    %326 = vector.extract_strided_slice %12 {offsets = [7, 0], sizes = [1, 128], strides = [1, 1]} : vector<16x128xf32> to vector<1x128xf32>
    %327 = vector.broadcast %326 : vector<1x128xf32> to vector<16x128xf32>
    %328 = arith.subf %327, %12 : vector<16x128xf32>
    %329 = arith.mulf %328, %328 : vector<16x128xf32>
    %330 = arith.addf %325, %329 : vector<16x128xf32>
    %331 = vector.extract_strided_slice %14 {offsets = [7, 0], sizes = [1, 128], strides = [1, 1]} : vector<16x128xf32> to vector<1x128xf32>
    %332 = vector.broadcast %331 : vector<1x128xf32> to vector<16x128xf32>
    %333 = arith.subf %332, %14 : vector<16x128xf32>
    %334 = arith.mulf %333, %333 : vector<16x128xf32>
    %335 = arith.addf %330, %334 : vector<16x128xf32>
    %336 = math.sqrt %321 : vector<16x128xf32>
    %337 = math.sqrt %335 : vector<16x128xf32>
    %338 = arith.subf %336, %337 : vector<16x128xf32>
    %cst_40 = arith.constant 33.3333321 : f32
    %339 = vector.broadcast %cst_40 : f32 to vector<16x128xf32>
    %340 = arith.mulf %338, %339 : vector<16x128xf32>
    %341 = arith.mulf %340, %340 : vector<16x128xf32>
    %cst_41 = arith.constant 1.000000e+00 : f32
    %342 = vector.broadcast %cst_41 : f32 to vector<16x128xf32>
    %343 = arith.subf %342, %341 : vector<16x128xf32>
    %cst_42 = arith.constant 0.000000e+00 : f32
    %344 = vector.broadcast %cst_42 : f32 to vector<16x128xf32>
    %345 = arith.maximumf %343, %344 : vector<16x128xf32>
    %c7 = arith.constant 7 : index
    %c0_43 = arith.constant 0 : index
    %c0_44 = arith.constant 0 : index
    %346 = vector.load %arg4[%c7, %c0_43, %c0_44] : memref<16x16x128xf32, #tpu.memory_space<vmem>>, vector<1x16x128xf32>
    %347 = vector.shape_cast %346 : vector<1x16x128xf32> to vector<16x128xf32>
    %348 = vector.shape_cast %345 : vector<16x128xf32> to vector<1x16x128xf32>
    tpu.vector_store %arg4[%c7, %c0_43, %c0_44], %348 {strides = array<i32>} : memref<16x16x128xf32, #tpu.memory_space<vmem>>, vector<1x16x128xf32>,
    %349 = arith.addf %307, %345 : vector<16x128xf32>
    %350 = vector.extract_strided_slice %4 {offsets = [8, 0], sizes = [1, 128], strides = [1, 1]} : vector<16x128xf32> to vector<1x128xf32>
    %351 = vector.broadcast %350 : vector<1x128xf32> to vector<16x128xf32>
    %352 = arith.subf %351, %4 : vector<16x128xf32>
    %353 = arith.mulf %352, %352 : vector<16x128xf32>
    %354 = vector.extract_strided_slice %6 {offsets = [8, 0], sizes = [1, 128], strides = [1, 1]} : vector<16x128xf32> to vector<1x128xf32>
    %355 = vector.broadcast %354 : vector<1x128xf32> to vector<16x128xf32>
    %356 = arith.subf %355, %6 : vector<16x128xf32>
    %357 = arith.mulf %356, %356 : vector<16x128xf32>
    %358 = arith.addf %353, %357 : vector<16x128xf32>
    %359 = vector.extract_strided_slice %8 {offsets = [8, 0], sizes = [1, 128], strides = [1, 1]} : vector<16x128xf32> to vector<1x128xf32>
    %360 = vector.broadcast %359 : vector<1x128xf32> to vector<16x128xf32>
    %361 = arith.subf %360, %8 : vector<16x128xf32>
    %362 = arith.mulf %361, %361 : vector<16x128xf32>
    %363 = arith.addf %358, %362 : vector<16x128xf32>
    %364 = vector.extract_strided_slice %10 {offsets = [8, 0], sizes = [1, 128], strides = [1, 1]} : vector<16x128xf32> to vector<1x128xf32>
    %365 = vector.broadcast %364 : vector<1x128xf32> to vector<16x128xf32>
    %366 = arith.subf %365, %10 : vector<16x128xf32>
    %367 = arith.mulf %366, %366 : vector<16x128xf32>
    %368 = vector.extract_strided_slice %12 {offsets = [8, 0], sizes = [1, 128], strides = [1, 1]} : vector<16x128xf32> to vector<1x128xf32>
    %369 = vector.broadcast %368 : vector<1x128xf32> to vector<16x128xf32>
    %370 = arith.subf %369, %12 : vector<16x128xf32>
    %371 = arith.mulf %370, %370 : vector<16x128xf32>
    %372 = arith.addf %367, %371 : vector<16x128xf32>
    %373 = vector.extract_strided_slice %14 {offsets = [8, 0], sizes = [1, 128], strides = [1, 1]} : vector<16x128xf32> to vector<1x128xf32>
    %374 = vector.broadcast %373 : vector<1x128xf32> to vector<16x128xf32>
    %375 = arith.subf %374, %14 : vector<16x128xf32>
    %376 = arith.mulf %375, %375 : vector<16x128xf32>
    %377 = arith.addf %372, %376 : vector<16x128xf32>
    %378 = math.sqrt %363 : vector<16x128xf32>
    %379 = math.sqrt %377 : vector<16x128xf32>
    %380 = arith.subf %378, %379 : vector<16x128xf32>
    %cst_45 = arith.constant 33.3333321 : f32
    %381 = vector.broadcast %cst_45 : f32 to vector<16x128xf32>
    %382 = arith.mulf %380, %381 : vector<16x128xf32>
    %383 = arith.mulf %382, %382 : vector<16x128xf32>
    %cst_46 = arith.constant 1.000000e+00 : f32
    %384 = vector.broadcast %cst_46 : f32 to vector<16x128xf32>
    %385 = arith.subf %384, %383 : vector<16x128xf32>
    %cst_47 = arith.constant 0.000000e+00 : f32
    %386 = vector.broadcast %cst_47 : f32 to vector<16x128xf32>
    %387 = arith.maximumf %385, %386 : vector<16x128xf32>
    %c8 = arith.constant 8 : index
    %c0_48 = arith.constant 0 : index
    %c0_49 = arith.constant 0 : index
    %388 = vector.load %arg4[%c8, %c0_48, %c0_49] : memref<16x16x128xf32, #tpu.memory_space<vmem>>, vector<1x16x128xf32>
    %389 = vector.shape_cast %388 : vector<1x16x128xf32> to vector<16x128xf32>
    %390 = vector.shape_cast %387 : vector<16x128xf32> to vector<1x16x128xf32>
    tpu.vector_store %arg4[%c8, %c0_48, %c0_49], %390 {strides = array<i32>} : memref<16x16x128xf32, #tpu.memory_space<vmem>>, vector<1x16x128xf32>,
    %391 = arith.addf %349, %387 : vector<16x128xf32>
    %392 = vector.extract_strided_slice %4 {offsets = [9, 0], sizes = [1, 128], strides = [1, 1]} : vector<16x128xf32> to vector<1x128xf32>
    %393 = vector.broadcast %392 : vector<1x128xf32> to vector<16x128xf32>
    %394 = arith.subf %393, %4 : vector<16x128xf32>
    %395 = arith.mulf %394, %394 : vector<16x128xf32>
    %396 = vector.extract_strided_slice %6 {offsets = [9, 0], sizes = [1, 128], strides = [1, 1]} : vector<16x128xf32> to vector<1x128xf32>
    %397 = vector.broadcast %396 : vector<1x128xf32> to vector<16x128xf32>
    %398 = arith.subf %397, %6 : vector<16x128xf32>
    %399 = arith.mulf %398, %398 : vector<16x128xf32>
    %400 = arith.addf %395, %399 : vector<16x128xf32>
    %401 = vector.extract_strided_slice %8 {offsets = [9, 0], sizes = [1, 128], strides = [1, 1]} : vector<16x128xf32> to vector<1x128xf32>
    %402 = vector.broadcast %401 : vector<1x128xf32> to vector<16x128xf32>
    %403 = arith.subf %402, %8 : vector<16x128xf32>
    %404 = arith.mulf %403, %403 : vector<16x128xf32>
    %405 = arith.addf %400, %404 : vector<16x128xf32>
    %406 = vector.extract_strided_slice %10 {offsets = [9, 0], sizes = [1, 128], strides = [1, 1]} : vector<16x128xf32> to vector<1x128xf32>
    %407 = vector.broadcast %406 : vector<1x128xf32> to vector<16x128xf32>
    %408 = arith.subf %407, %10 : vector<16x128xf32>
    %409 = arith.mulf %408, %408 : vector<16x128xf32>
    %410 = vector.extract_strided_slice %12 {offsets = [9, 0], sizes = [1, 128], strides = [1, 1]} : vector<16x128xf32> to vector<1x128xf32>
    %411 = vector.broadcast %410 : vector<1x128xf32> to vector<16x128xf32>
    %412 = arith.subf %411, %12 : vector<16x128xf32>
    %413 = arith.mulf %412, %412 : vector<16x128xf32>
    %414 = arith.addf %409, %413 : vector<16x128xf32>
    %415 = vector.extract_strided_slice %14 {offsets = [9, 0], sizes = [1, 128], strides = [1, 1]} : vector<16x128xf32> to vector<1x128xf32>
    %416 = vector.broadcast %415 : vector<1x128xf32> to vector<16x128xf32>
    %417 = arith.subf %416, %14 : vector<16x128xf32>
    %418 = arith.mulf %417, %417 : vector<16x128xf32>
    %419 = arith.addf %414, %418 : vector<16x128xf32>
    %420 = math.sqrt %405 : vector<16x128xf32>
    %421 = math.sqrt %419 : vector<16x128xf32>
    %422 = arith.subf %420, %421 : vector<16x128xf32>
    %cst_50 = arith.constant 33.3333321 : f32
    %423 = vector.broadcast %cst_50 : f32 to vector<16x128xf32>
    %424 = arith.mulf %422, %423 : vector<16x128xf32>
    %425 = arith.mulf %424, %424 : vector<16x128xf32>
    %cst_51 = arith.constant 1.000000e+00 : f32
    %426 = vector.broadcast %cst_51 : f32 to vector<16x128xf32>
    %427 = arith.subf %426, %425 : vector<16x128xf32>
    %cst_52 = arith.constant 0.000000e+00 : f32
    %428 = vector.broadcast %cst_52 : f32 to vector<16x128xf32>
    %429 = arith.maximumf %427, %428 : vector<16x128xf32>
    %c9 = arith.constant 9 : index
    %c0_53 = arith.constant 0 : index
    %c0_54 = arith.constant 0 : index
    %430 = vector.load %arg4[%c9, %c0_53, %c0_54] : memref<16x16x128xf32, #tpu.memory_space<vmem>>, vector<1x16x128xf32>
    %431 = vector.shape_cast %430 : vector<1x16x128xf32> to vector<16x128xf32>
    %432 = vector.shape_cast %429 : vector<16x128xf32> to vector<1x16x128xf32>
    tpu.vector_store %arg4[%c9, %c0_53, %c0_54], %432 {strides = array<i32>} : memref<16x16x128xf32, #tpu.memory_space<vmem>>, vector<1x16x128xf32>,
    %433 = arith.addf %391, %429 : vector<16x128xf32>
    %434 = vector.extract_strided_slice %4 {offsets = [10, 0], sizes = [1, 128], strides = [1, 1]} : vector<16x128xf32> to vector<1x128xf32>
    %435 = vector.broadcast %434 : vector<1x128xf32> to vector<16x128xf32>
    %436 = arith.subf %435, %4 : vector<16x128xf32>
    %437 = arith.mulf %436, %436 : vector<16x128xf32>
    %438 = vector.extract_strided_slice %6 {offsets = [10, 0], sizes = [1, 128], strides = [1, 1]} : vector<16x128xf32> to vector<1x128xf32>
    %439 = vector.broadcast %438 : vector<1x128xf32> to vector<16x128xf32>
    %440 = arith.subf %439, %6 : vector<16x128xf32>
    %441 = arith.mulf %440, %440 : vector<16x128xf32>
    %442 = arith.addf %437, %441 : vector<16x128xf32>
    %443 = vector.extract_strided_slice %8 {offsets = [10, 0], sizes = [1, 128], strides = [1, 1]} : vector<16x128xf32> to vector<1x128xf32>
    %444 = vector.broadcast %443 : vector<1x128xf32> to vector<16x128xf32>
    %445 = arith.subf %444, %8 : vector<16x128xf32>
    %446 = arith.mulf %445, %445 : vector<16x128xf32>
    %447 = arith.addf %442, %446 : vector<16x128xf32>
    %448 = vector.extract_strided_slice %10 {offsets = [10, 0], sizes = [1, 128], strides = [1, 1]} : vector<16x128xf32> to vector<1x128xf32>
    %449 = vector.broadcast %448 : vector<1x128xf32> to vector<16x128xf32>
    %450 = arith.subf %449, %10 : vector<16x128xf32>
    %451 = arith.mulf %450, %450 : vector<16x128xf32>
    %452 = vector.extract_strided_slice %12 {offsets = [10, 0], sizes = [1, 128], strides = [1, 1]} : vector<16x128xf32> to vector<1x128xf32>
    %453 = vector.broadcast %452 : vector<1x128xf32> to vector<16x128xf32>
    %454 = arith.subf %453, %12 : vector<16x128xf32>
    %455 = arith.mulf %454, %454 : vector<16x128xf32>
    %456 = arith.addf %451, %455 : vector<16x128xf32>
    %457 = vector.extract_strided_slice %14 {offsets = [10, 0], sizes = [1, 128], strides = [1, 1]} : vector<16x128xf32> to vector<1x128xf32>
    %458 = vector.broadcast %457 : vector<1x128xf32> to vector<16x128xf32>
    %459 = arith.subf %458, %14 : vector<16x128xf32>
    %460 = arith.mulf %459, %459 : vector<16x128xf32>
    %461 = arith.addf %456, %460 : vector<16x128xf32>
    %462 = math.sqrt %447 : vector<16x128xf32>
    %463 = math.sqrt %461 : vector<16x128xf32>
    %464 = arith.subf %462, %463 : vector<16x128xf32>
    %cst_55 = arith.constant 33.3333321 : f32
    %465 = vector.broadcast %cst_55 : f32 to vector<16x128xf32>
    %466 = arith.mulf %464, %465 : vector<16x128xf32>
    %467 = arith.mulf %466, %466 : vector<16x128xf32>
    %cst_56 = arith.constant 1.000000e+00 : f32
    %468 = vector.broadcast %cst_56 : f32 to vector<16x128xf32>
    %469 = arith.subf %468, %467 : vector<16x128xf32>
    %cst_57 = arith.constant 0.000000e+00 : f32
    %470 = vector.broadcast %cst_57 : f32 to vector<16x128xf32>
    %471 = arith.maximumf %469, %470 : vector<16x128xf32>
    %c10 = arith.constant 10 : index
    %c0_58 = arith.constant 0 : index
    %c0_59 = arith.constant 0 : index
    %472 = vector.load %arg4[%c10, %c0_58, %c0_59] : memref<16x16x128xf32, #tpu.memory_space<vmem>>, vector<1x16x128xf32>
    %473 = vector.shape_cast %472 : vector<1x16x128xf32> to vector<16x128xf32>
    %474 = vector.shape_cast %471 : vector<16x128xf32> to vector<1x16x128xf32>
    tpu.vector_store %arg4[%c10, %c0_58, %c0_59], %474 {strides = array<i32>} : memref<16x16x128xf32, #tpu.memory_space<vmem>>, vector<1x16x128xf32>,
    %475 = arith.addf %433, %471 : vector<16x128xf32>
    %476 = vector.extract_strided_slice %4 {offsets = [11, 0], sizes = [1, 128], strides = [1, 1]} : vector<16x128xf32> to vector<1x128xf32>
    %477 = vector.broadcast %476 : vector<1x128xf32> to vector<16x128xf32>
    %478 = arith.subf %477, %4 : vector<16x128xf32>
    %479 = arith.mulf %478, %478 : vector<16x128xf32>
    %480 = vector.extract_strided_slice %6 {offsets = [11, 0], sizes = [1, 128], strides = [1, 1]} : vector<16x128xf32> to vector<1x128xf32>
    %481 = vector.broadcast %480 : vector<1x128xf32> to vector<16x128xf32>
    %482 = arith.subf %481, %6 : vector<16x128xf32>
    %483 = arith.mulf %482, %482 : vector<16x128xf32>
    %484 = arith.addf %479, %483 : vector<16x128xf32>
    %485 = vector.extract_strided_slice %8 {offsets = [11, 0], sizes = [1, 128], strides = [1, 1]} : vector<16x128xf32> to vector<1x128xf32>
    %486 = vector.broadcast %485 : vector<1x128xf32> to vector<16x128xf32>
    %487 = arith.subf %486, %8 : vector<16x128xf32>
    %488 = arith.mulf %487, %487 : vector<16x128xf32>
    %489 = arith.addf %484, %488 : vector<16x128xf32>
    %490 = vector.extract_strided_slice %10 {offsets = [11, 0], sizes = [1, 128], strides = [1, 1]} : vector<16x128xf32> to vector<1x128xf32>
    %491 = vector.broadcast %490 : vector<1x128xf32> to vector<16x128xf32>
    %492 = arith.subf %491, %10 : vector<16x128xf32>
    %493 = arith.mulf %492, %492 : vector<16x128xf32>
    %494 = vector.extract_strided_slice %12 {offsets = [11, 0], sizes = [1, 128], strides = [1, 1]} : vector<16x128xf32> to vector<1x128xf32>
    %495 = vector.broadcast %494 : vector<1x128xf32> to vector<16x128xf32>
    %496 = arith.subf %495, %12 : vector<16x128xf32>
    %497 = arith.mulf %496, %496 : vector<16x128xf32>
    %498 = arith.addf %493, %497 : vector<16x128xf32>
    %499 = vector.extract_strided_slice %14 {offsets = [11, 0], sizes = [1, 128], strides = [1, 1]} : vector<16x128xf32> to vector<1x128xf32>
    %500 = vector.broadcast %499 : vector<1x128xf32> to vector<16x128xf32>
    %501 = arith.subf %500, %14 : vector<16x128xf32>
    %502 = arith.mulf %501, %501 : vector<16x128xf32>
    %503 = arith.addf %498, %502 : vector<16x128xf32>
    %504 = math.sqrt %489 : vector<16x128xf32>
    %505 = math.sqrt %503 : vector<16x128xf32>
    %506 = arith.subf %504, %505 : vector<16x128xf32>
    %cst_60 = arith.constant 33.3333321 : f32
    %507 = vector.broadcast %cst_60 : f32 to vector<16x128xf32>
    %508 = arith.mulf %506, %507 : vector<16x128xf32>
    %509 = arith.mulf %508, %508 : vector<16x128xf32>
    %cst_61 = arith.constant 1.000000e+00 : f32
    %510 = vector.broadcast %cst_61 : f32 to vector<16x128xf32>
    %511 = arith.subf %510, %509 : vector<16x128xf32>
    %cst_62 = arith.constant 0.000000e+00 : f32
    %512 = vector.broadcast %cst_62 : f32 to vector<16x128xf32>
    %513 = arith.maximumf %511, %512 : vector<16x128xf32>
    %c11 = arith.constant 11 : index
    %c0_63 = arith.constant 0 : index
    %c0_64 = arith.constant 0 : index
    %514 = vector.load %arg4[%c11, %c0_63, %c0_64] : memref<16x16x128xf32, #tpu.memory_space<vmem>>, vector<1x16x128xf32>
    %515 = vector.shape_cast %514 : vector<1x16x128xf32> to vector<16x128xf32>
    %516 = vector.shape_cast %513 : vector<16x128xf32> to vector<1x16x128xf32>
    tpu.vector_store %arg4[%c11, %c0_63, %c0_64], %516 {strides = array<i32>} : memref<16x16x128xf32, #tpu.memory_space<vmem>>, vector<1x16x128xf32>,
    %517 = arith.addf %475, %513 : vector<16x128xf32>
    %518 = vector.extract_strided_slice %4 {offsets = [12, 0], sizes = [1, 128], strides = [1, 1]} : vector<16x128xf32> to vector<1x128xf32>
    %519 = vector.broadcast %518 : vector<1x128xf32> to vector<16x128xf32>
    %520 = arith.subf %519, %4 : vector<16x128xf32>
    %521 = arith.mulf %520, %520 : vector<16x128xf32>
    %522 = vector.extract_strided_slice %6 {offsets = [12, 0], sizes = [1, 128], strides = [1, 1]} : vector<16x128xf32> to vector<1x128xf32>
    %523 = vector.broadcast %522 : vector<1x128xf32> to vector<16x128xf32>
    %524 = arith.subf %523, %6 : vector<16x128xf32>
    %525 = arith.mulf %524, %524 : vector<16x128xf32>
    %526 = arith.addf %521, %525 : vector<16x128xf32>
    %527 = vector.extract_strided_slice %8 {offsets = [12, 0], sizes = [1, 128], strides = [1, 1]} : vector<16x128xf32> to vector<1x128xf32>
    %528 = vector.broadcast %527 : vector<1x128xf32> to vector<16x128xf32>
    %529 = arith.subf %528, %8 : vector<16x128xf32>
    %530 = arith.mulf %529, %529 : vector<16x128xf32>
    %531 = arith.addf %526, %530 : vector<16x128xf32>
    %532 = vector.extract_strided_slice %10 {offsets = [12, 0], sizes = [1, 128], strides = [1, 1]} : vector<16x128xf32> to vector<1x128xf32>
    %533 = vector.broadcast %532 : vector<1x128xf32> to vector<16x128xf32>
    %534 = arith.subf %533, %10 : vector<16x128xf32>
    %535 = arith.mulf %534, %534 : vector<16x128xf32>
    %536 = vector.extract_strided_slice %12 {offsets = [12, 0], sizes = [1, 128], strides = [1, 1]} : vector<16x128xf32> to vector<1x128xf32>
    %537 = vector.broadcast %536 : vector<1x128xf32> to vector<16x128xf32>
    %538 = arith.subf %537, %12 : vector<16x128xf32>
    %539 = arith.mulf %538, %538 : vector<16x128xf32>
    %540 = arith.addf %535, %539 : vector<16x128xf32>
    %541 = vector.extract_strided_slice %14 {offsets = [12, 0], sizes = [1, 128], strides = [1, 1]} : vector<16x128xf32> to vector<1x128xf32>
    %542 = vector.broadcast %541 : vector<1x128xf32> to vector<16x128xf32>
    %543 = arith.subf %542, %14 : vector<16x128xf32>
    %544 = arith.mulf %543, %543 : vector<16x128xf32>
    %545 = arith.addf %540, %544 : vector<16x128xf32>
    %546 = math.sqrt %531 : vector<16x128xf32>
    %547 = math.sqrt %545 : vector<16x128xf32>
    %548 = arith.subf %546, %547 : vector<16x128xf32>
    %cst_65 = arith.constant 33.3333321 : f32
    %549 = vector.broadcast %cst_65 : f32 to vector<16x128xf32>
    %550 = arith.mulf %548, %549 : vector<16x128xf32>
    %551 = arith.mulf %550, %550 : vector<16x128xf32>
    %cst_66 = arith.constant 1.000000e+00 : f32
    %552 = vector.broadcast %cst_66 : f32 to vector<16x128xf32>
    %553 = arith.subf %552, %551 : vector<16x128xf32>
    %cst_67 = arith.constant 0.000000e+00 : f32
    %554 = vector.broadcast %cst_67 : f32 to vector<16x128xf32>
    %555 = arith.maximumf %553, %554 : vector<16x128xf32>
    %c12 = arith.constant 12 : index
    %c0_68 = arith.constant 0 : index
    %c0_69 = arith.constant 0 : index
    %556 = vector.load %arg4[%c12, %c0_68, %c0_69] : memref<16x16x128xf32, #tpu.memory_space<vmem>>, vector<1x16x128xf32>
    %557 = vector.shape_cast %556 : vector<1x16x128xf32> to vector<16x128xf32>
    %558 = vector.shape_cast %555 : vector<16x128xf32> to vector<1x16x128xf32>
    tpu.vector_store %arg4[%c12, %c0_68, %c0_69], %558 {strides = array<i32>} : memref<16x16x128xf32, #tpu.memory_space<vmem>>, vector<1x16x128xf32>,
    %559 = arith.addf %517, %555 : vector<16x128xf32>
    %560 = vector.extract_strided_slice %4 {offsets = [13, 0], sizes = [1, 128], strides = [1, 1]} : vector<16x128xf32> to vector<1x128xf32>
    %561 = vector.broadcast %560 : vector<1x128xf32> to vector<16x128xf32>
    %562 = arith.subf %561, %4 : vector<16x128xf32>
    %563 = arith.mulf %562, %562 : vector<16x128xf32>
    %564 = vector.extract_strided_slice %6 {offsets = [13, 0], sizes = [1, 128], strides = [1, 1]} : vector<16x128xf32> to vector<1x128xf32>
    %565 = vector.broadcast %564 : vector<1x128xf32> to vector<16x128xf32>
    %566 = arith.subf %565, %6 : vector<16x128xf32>
    %567 = arith.mulf %566, %566 : vector<16x128xf32>
    %568 = arith.addf %563, %567 : vector<16x128xf32>
    %569 = vector.extract_strided_slice %8 {offsets = [13, 0], sizes = [1, 128], strides = [1, 1]} : vector<16x128xf32> to vector<1x128xf32>
    %570 = vector.broadcast %569 : vector<1x128xf32> to vector<16x128xf32>
    %571 = arith.subf %570, %8 : vector<16x128xf32>
    %572 = arith.mulf %571, %571 : vector<16x128xf32>
    %573 = arith.addf %568, %572 : vector<16x128xf32>
    %574 = vector.extract_strided_slice %10 {offsets = [13, 0], sizes = [1, 128], strides = [1, 1]} : vector<16x128xf32> to vector<1x128xf32>
    %575 = vector.broadcast %574 : vector<1x128xf32> to vector<16x128xf32>
    %576 = arith.subf %575, %10 : vector<16x128xf32>
    %577 = arith.mulf %576, %576 : vector<16x128xf32>
    %578 = vector.extract_strided_slice %12 {offsets = [13, 0], sizes = [1, 128], strides = [1, 1]} : vector<16x128xf32> to vector<1x128xf32>
    %579 = vector.broadcast %578 : vector<1x128xf32> to vector<16x128xf32>
    %580 = arith.subf %579, %12 : vector<16x128xf32>
    %581 = arith.mulf %580, %580 : vector<16x128xf32>
    %582 = arith.addf %577, %581 : vector<16x128xf32>
    %583 = vector.extract_strided_slice %14 {offsets = [13, 0], sizes = [1, 128], strides = [1, 1]} : vector<16x128xf32> to vector<1x128xf32>
    %584 = vector.broadcast %583 : vector<1x128xf32> to vector<16x128xf32>
    %585 = arith.subf %584, %14 : vector<16x128xf32>
    %586 = arith.mulf %585, %585 : vector<16x128xf32>
    %587 = arith.addf %582, %586 : vector<16x128xf32>
    %588 = math.sqrt %573 : vector<16x128xf32>
    %589 = math.sqrt %587 : vector<16x128xf32>
    %590 = arith.subf %588, %589 : vector<16x128xf32>
    %cst_70 = arith.constant 33.3333321 : f32
    %591 = vector.broadcast %cst_70 : f32 to vector<16x128xf32>
    %592 = arith.mulf %590, %591 : vector<16x128xf32>
    %593 = arith.mulf %592, %592 : vector<16x128xf32>
    %cst_71 = arith.constant 1.000000e+00 : f32
    %594 = vector.broadcast %cst_71 : f32 to vector<16x128xf32>
    %595 = arith.subf %594, %593 : vector<16x128xf32>
    %cst_72 = arith.constant 0.000000e+00 : f32
    %596 = vector.broadcast %cst_72 : f32 to vector<16x128xf32>
    %597 = arith.maximumf %595, %596 : vector<16x128xf32>
    %c13 = arith.constant 13 : index
    %c0_73 = arith.constant 0 : index
    %c0_74 = arith.constant 0 : index
    %598 = vector.load %arg4[%c13, %c0_73, %c0_74] : memref<16x16x128xf32, #tpu.memory_space<vmem>>, vector<1x16x128xf32>
    %599 = vector.shape_cast %598 : vector<1x16x128xf32> to vector<16x128xf32>
    %600 = vector.shape_cast %597 : vector<16x128xf32> to vector<1x16x128xf32>
    tpu.vector_store %arg4[%c13, %c0_73, %c0_74], %600 {strides = array<i32>} : memref<16x16x128xf32, #tpu.memory_space<vmem>>, vector<1x16x128xf32>,
    %601 = arith.addf %559, %597 : vector<16x128xf32>
    %602 = vector.extract_strided_slice %4 {offsets = [14, 0], sizes = [1, 128], strides = [1, 1]} : vector<16x128xf32> to vector<1x128xf32>
    %603 = vector.broadcast %602 : vector<1x128xf32> to vector<16x128xf32>
    %604 = arith.subf %603, %4 : vector<16x128xf32>
    %605 = arith.mulf %604, %604 : vector<16x128xf32>
    %606 = vector.extract_strided_slice %6 {offsets = [14, 0], sizes = [1, 128], strides = [1, 1]} : vector<16x128xf32> to vector<1x128xf32>
    %607 = vector.broadcast %606 : vector<1x128xf32> to vector<16x128xf32>
    %608 = arith.subf %607, %6 : vector<16x128xf32>
    %609 = arith.mulf %608, %608 : vector<16x128xf32>
    %610 = arith.addf %605, %609 : vector<16x128xf32>
    %611 = vector.extract_strided_slice %8 {offsets = [14, 0], sizes = [1, 128], strides = [1, 1]} : vector<16x128xf32> to vector<1x128xf32>
    %612 = vector.broadcast %611 : vector<1x128xf32> to vector<16x128xf32>
    %613 = arith.subf %612, %8 : vector<16x128xf32>
    %614 = arith.mulf %613, %613 : vector<16x128xf32>
    %615 = arith.addf %610, %614 : vector<16x128xf32>
    %616 = vector.extract_strided_slice %10 {offsets = [14, 0], sizes = [1, 128], strides = [1, 1]} : vector<16x128xf32> to vector<1x128xf32>
    %617 = vector.broadcast %616 : vector<1x128xf32> to vector<16x128xf32>
    %618 = arith.subf %617, %10 : vector<16x128xf32>
    %619 = arith.mulf %618, %618 : vector<16x128xf32>
    %620 = vector.extract_strided_slice %12 {offsets = [14, 0], sizes = [1, 128], strides = [1, 1]} : vector<16x128xf32> to vector<1x128xf32>
    %621 = vector.broadcast %620 : vector<1x128xf32> to vector<16x128xf32>
    %622 = arith.subf %621, %12 : vector<16x128xf32>
    %623 = arith.mulf %622, %622 : vector<16x128xf32>
    %624 = arith.addf %619, %623 : vector<16x128xf32>
    %625 = vector.extract_strided_slice %14 {offsets = [14, 0], sizes = [1, 128], strides = [1, 1]} : vector<16x128xf32> to vector<1x128xf32>
    %626 = vector.broadcast %625 : vector<1x128xf32> to vector<16x128xf32>
    %627 = arith.subf %626, %14 : vector<16x128xf32>
    %628 = arith.mulf %627, %627 : vector<16x128xf32>
    %629 = arith.addf %624, %628 : vector<16x128xf32>
    %630 = math.sqrt %615 : vector<16x128xf32>
    %631 = math.sqrt %629 : vector<16x128xf32>
    %632 = arith.subf %630, %631 : vector<16x128xf32>
    %cst_75 = arith.constant 33.3333321 : f32
    %633 = vector.broadcast %cst_75 : f32 to vector<16x128xf32>
    %634 = arith.mulf %632, %633 : vector<16x128xf32>
    %635 = arith.mulf %634, %634 : vector<16x128xf32>
    %cst_76 = arith.constant 1.000000e+00 : f32
    %636 = vector.broadcast %cst_76 : f32 to vector<16x128xf32>
    %637 = arith.subf %636, %635 : vector<16x128xf32>
    %cst_77 = arith.constant 0.000000e+00 : f32
    %638 = vector.broadcast %cst_77 : f32 to vector<16x128xf32>
    %639 = arith.maximumf %637, %638 : vector<16x128xf32>
    %c14 = arith.constant 14 : index
    %c0_78 = arith.constant 0 : index
    %c0_79 = arith.constant 0 : index
    %640 = vector.load %arg4[%c14, %c0_78, %c0_79] : memref<16x16x128xf32, #tpu.memory_space<vmem>>, vector<1x16x128xf32>
    %641 = vector.shape_cast %640 : vector<1x16x128xf32> to vector<16x128xf32>
    %642 = vector.shape_cast %639 : vector<16x128xf32> to vector<1x16x128xf32>
    tpu.vector_store %arg4[%c14, %c0_78, %c0_79], %642 {strides = array<i32>} : memref<16x16x128xf32, #tpu.memory_space<vmem>>, vector<1x16x128xf32>,
    %643 = arith.addf %601, %639 : vector<16x128xf32>
    %644 = vector.extract_strided_slice %4 {offsets = [15, 0], sizes = [1, 128], strides = [1, 1]} : vector<16x128xf32> to vector<1x128xf32>
    %645 = vector.broadcast %644 : vector<1x128xf32> to vector<16x128xf32>
    %646 = arith.subf %645, %4 : vector<16x128xf32>
    %647 = arith.mulf %646, %646 : vector<16x128xf32>
    %648 = vector.extract_strided_slice %6 {offsets = [15, 0], sizes = [1, 128], strides = [1, 1]} : vector<16x128xf32> to vector<1x128xf32>
    %649 = vector.broadcast %648 : vector<1x128xf32> to vector<16x128xf32>
    %650 = arith.subf %649, %6 : vector<16x128xf32>
    %651 = arith.mulf %650, %650 : vector<16x128xf32>
    %652 = arith.addf %647, %651 : vector<16x128xf32>
    %653 = vector.extract_strided_slice %8 {offsets = [15, 0], sizes = [1, 128], strides = [1, 1]} : vector<16x128xf32> to vector<1x128xf32>
    %654 = vector.broadcast %653 : vector<1x128xf32> to vector<16x128xf32>
    %655 = arith.subf %654, %8 : vector<16x128xf32>
    %656 = arith.mulf %655, %655 : vector<16x128xf32>
    %657 = arith.addf %652, %656 : vector<16x128xf32>
    %658 = vector.extract_strided_slice %10 {offsets = [15, 0], sizes = [1, 128], strides = [1, 1]} : vector<16x128xf32> to vector<1x128xf32>
    %659 = vector.broadcast %658 : vector<1x128xf32> to vector<16x128xf32>
    %660 = arith.subf %659, %10 : vector<16x128xf32>
    %661 = arith.mulf %660, %660 : vector<16x128xf32>
    %662 = vector.extract_strided_slice %12 {offsets = [15, 0], sizes = [1, 128], strides = [1, 1]} : vector<16x128xf32> to vector<1x128xf32>
    %663 = vector.broadcast %662 : vector<1x128xf32> to vector<16x128xf32>
    %664 = arith.subf %663, %12 : vector<16x128xf32>
    %665 = arith.mulf %664, %664 : vector<16x128xf32>
    %666 = arith.addf %661, %665 : vector<16x128xf32>
    %667 = vector.extract_strided_slice %14 {offsets = [15, 0], sizes = [1, 128], strides = [1, 1]} : vector<16x128xf32> to vector<1x128xf32>
    %668 = vector.broadcast %667 : vector<1x128xf32> to vector<16x128xf32>
    %669 = arith.subf %668, %14 : vector<16x128xf32>
    %670 = arith.mulf %669, %669 : vector<16x128xf32>
    %671 = arith.addf %666, %670 : vector<16x128xf32>
    %672 = math.sqrt %657 : vector<16x128xf32>
    %673 = math.sqrt %671 : vector<16x128xf32>
    %674 = arith.subf %672, %673 : vector<16x128xf32>
    %cst_80 = arith.constant 33.3333321 : f32
    %675 = vector.broadcast %cst_80 : f32 to vector<16x128xf32>
    %676 = arith.mulf %674, %675 : vector<16x128xf32>
    %677 = arith.mulf %676, %676 : vector<16x128xf32>
    %cst_81 = arith.constant 1.000000e+00 : f32
    %678 = vector.broadcast %cst_81 : f32 to vector<16x128xf32>
    %679 = arith.subf %678, %677 : vector<16x128xf32>
    %cst_82 = arith.constant 0.000000e+00 : f32
    %680 = vector.broadcast %cst_82 : f32 to vector<16x128xf32>
    %681 = arith.maximumf %679, %680 : vector<16x128xf32>
    %c15 = arith.constant 15 : index
    %c0_83 = arith.constant 0 : index
    %c0_84 = arith.constant 0 : index
    %682 = vector.load %arg4[%c15, %c0_83, %c0_84] : memref<16x16x128xf32, #tpu.memory_space<vmem>>, vector<1x16x128xf32>
    %683 = vector.shape_cast %682 : vector<1x16x128xf32> to vector<16x128xf32>
    %684 = vector.shape_cast %681 : vector<16x128xf32> to vector<1x16x128xf32>
    tpu.vector_store %arg4[%c15, %c0_83, %c0_84], %684 {strides = array<i32>} : memref<16x16x128xf32, #tpu.memory_space<vmem>>, vector<1x16x128xf32>,
    %685 = arith.addf %643, %681 : vector<16x128xf32>
    %c0_i32 = arith.constant 0 : i32
    %c9_i32 = arith.constant 9 : i32
    %686 = arith.addi %c0_i32, %c9_i32 : i32
    %c1_i32 = arith.constant 1 : i32
    %687 = scf.for %arg5 = %c0_i32 to %686 step %c1_i32 iter_args(%arg6 = %685) -> (vector<16x128xf32>)  : i32 {
      %c0_139 = arith.constant 0 : index
      %c0_140 = arith.constant 0 : index
      %c0_141 = arith.constant 0 : index
      %796 = vector.load %arg4[%c0_139, %c0_140, %c0_141] : memref<16x16x128xf32, #tpu.memory_space<vmem>>, vector<1x16x128xf32>
      %797 = vector.shape_cast %796 : vector<1x16x128xf32> to vector<16x128xf32>
      %798 = vector.extract_strided_slice %arg6 {offsets = [0, 0], sizes = [1, 128], strides = [1, 1]} : vector<16x128xf32> to vector<1x128xf32>
      %799 = vector.broadcast %798 : vector<1x128xf32> to vector<16x128xf32>
      %800 = arith.mulf %797, %799 : vector<16x128xf32>
      %c1_142 = arith.constant 1 : index
      %c0_143 = arith.constant 0 : index
      %c0_144 = arith.constant 0 : index
      %801 = vector.load %arg4[%c1_142, %c0_143, %c0_144] : memref<16x16x128xf32, #tpu.memory_space<vmem>>, vector<1x16x128xf32>
      %802 = vector.shape_cast %801 : vector<1x16x128xf32> to vector<16x128xf32>
      %803 = vector.extract_strided_slice %arg6 {offsets = [1, 0], sizes = [1, 128], strides = [1, 1]} : vector<16x128xf32> to vector<1x128xf32>
      %804 = vector.broadcast %803 : vector<1x128xf32> to vector<16x128xf32>
      %805 = arith.mulf %802, %804 : vector<16x128xf32>
      %806 = arith.addf %800, %805 : vector<16x128xf32>
      %c2_145 = arith.constant 2 : index
      %c0_146 = arith.constant 0 : index
      %c0_147 = arith.constant 0 : index
      %807 = vector.load %arg4[%c2_145, %c0_146, %c0_147] : memref<16x16x128xf32, #tpu.memory_space<vmem>>, vector<1x16x128xf32>
      %808 = vector.shape_cast %807 : vector<1x16x128xf32> to vector<16x128xf32>
      %809 = vector.extract_strided_slice %arg6 {offsets = [2, 0], sizes = [1, 128], strides = [1, 1]} : vector<16x128xf32> to vector<1x128xf32>
      %810 = vector.broadcast %809 : vector<1x128xf32> to vector<16x128xf32>
      %811 = arith.mulf %808, %810 : vector<16x128xf32>
      %812 = arith.addf %806, %811 : vector<16x128xf32>
      %c3_148 = arith.constant 3 : index
      %c0_149 = arith.constant 0 : index
      %c0_150 = arith.constant 0 : index
      %813 = vector.load %arg4[%c3_148, %c0_149, %c0_150] : memref<16x16x128xf32, #tpu.memory_space<vmem>>, vector<1x16x128xf32>
      %814 = vector.shape_cast %813 : vector<1x16x128xf32> to vector<16x128xf32>
      %815 = vector.extract_strided_slice %arg6 {offsets = [3, 0], sizes = [1, 128], strides = [1, 1]} : vector<16x128xf32> to vector<1x128xf32>
      %816 = vector.broadcast %815 : vector<1x128xf32> to vector<16x128xf32>
      %817 = arith.mulf %814, %816 : vector<16x128xf32>
      %818 = arith.addf %812, %817 : vector<16x128xf32>
      %c4_151 = arith.constant 4 : index
      %c0_152 = arith.constant 0 : index
      %c0_153 = arith.constant 0 : index
      %819 = vector.load %arg4[%c4_151, %c0_152, %c0_153] : memref<16x16x128xf32, #tpu.memory_space<vmem>>, vector<1x16x128xf32>
      %820 = vector.shape_cast %819 : vector<1x16x128xf32> to vector<16x128xf32>
      %821 = vector.extract_strided_slice %arg6 {offsets = [4, 0], sizes = [1, 128], strides = [1, 1]} : vector<16x128xf32> to vector<1x128xf32>
      %822 = vector.broadcast %821 : vector<1x128xf32> to vector<16x128xf32>
      %823 = arith.mulf %820, %822 : vector<16x128xf32>
      %824 = arith.addf %818, %823 : vector<16x128xf32>
      %c5_154 = arith.constant 5 : index
      %c0_155 = arith.constant 0 : index
      %c0_156 = arith.constant 0 : index
      %825 = vector.load %arg4[%c5_154, %c0_155, %c0_156] : memref<16x16x128xf32, #tpu.memory_space<vmem>>, vector<1x16x128xf32>
      %826 = vector.shape_cast %825 : vector<1x16x128xf32> to vector<16x128xf32>
      %827 = vector.extract_strided_slice %arg6 {offsets = [5, 0], sizes = [1, 128], strides = [1, 1]} : vector<16x128xf32> to vector<1x128xf32>
      %828 = vector.broadcast %827 : vector<1x128xf32> to vector<16x128xf32>
      %829 = arith.mulf %826, %828 : vector<16x128xf32>
      %830 = arith.addf %824, %829 : vector<16x128xf32>
      %c6_157 = arith.constant 6 : index
      %c0_158 = arith.constant 0 : index
      %c0_159 = arith.constant 0 : index
      %831 = vector.load %arg4[%c6_157, %c0_158, %c0_159] : memref<16x16x128xf32, #tpu.memory_space<vmem>>, vector<1x16x128xf32>
      %832 = vector.shape_cast %831 : vector<1x16x128xf32> to vector<16x128xf32>
      %833 = vector.extract_strided_slice %arg6 {offsets = [6, 0], sizes = [1, 128], strides = [1, 1]} : vector<16x128xf32> to vector<1x128xf32>
      %834 = vector.broadcast %833 : vector<1x128xf32> to vector<16x128xf32>
      %835 = arith.mulf %832, %834 : vector<16x128xf32>
      %836 = arith.addf %830, %835 : vector<16x128xf32>
      %c7_160 = arith.constant 7 : index
      %c0_161 = arith.constant 0 : index
      %c0_162 = arith.constant 0 : index
      %837 = vector.load %arg4[%c7_160, %c0_161, %c0_162] : memref<16x16x128xf32, #tpu.memory_space<vmem>>, vector<1x16x128xf32>
      %838 = vector.shape_cast %837 : vector<1x16x128xf32> to vector<16x128xf32>
      %839 = vector.extract_strided_slice %arg6 {offsets = [7, 0], sizes = [1, 128], strides = [1, 1]} : vector<16x128xf32> to vector<1x128xf32>
      %840 = vector.broadcast %839 : vector<1x128xf32> to vector<16x128xf32>
      %841 = arith.mulf %838, %840 : vector<16x128xf32>
      %842 = arith.addf %836, %841 : vector<16x128xf32>
      %c8_163 = arith.constant 8 : index
      %c0_164 = arith.constant 0 : index
      %c0_165 = arith.constant 0 : index
      %843 = vector.load %arg4[%c8_163, %c0_164, %c0_165] : memref<16x16x128xf32, #tpu.memory_space<vmem>>, vector<1x16x128xf32>
      %844 = vector.shape_cast %843 : vector<1x16x128xf32> to vector<16x128xf32>
      %845 = vector.extract_strided_slice %arg6 {offsets = [8, 0], sizes = [1, 128], strides = [1, 1]} : vector<16x128xf32> to vector<1x128xf32>
      %846 = vector.broadcast %845 : vector<1x128xf32> to vector<16x128xf32>
      %847 = arith.mulf %844, %846 : vector<16x128xf32>
      %848 = arith.addf %842, %847 : vector<16x128xf32>
      %c9_166 = arith.constant 9 : index
      %c0_167 = arith.constant 0 : index
      %c0_168 = arith.constant 0 : index
      %849 = vector.load %arg4[%c9_166, %c0_167, %c0_168] : memref<16x16x128xf32, #tpu.memory_space<vmem>>, vector<1x16x128xf32>
      %850 = vector.shape_cast %849 : vector<1x16x128xf32> to vector<16x128xf32>
      %851 = vector.extract_strided_slice %arg6 {offsets = [9, 0], sizes = [1, 128], strides = [1, 1]} : vector<16x128xf32> to vector<1x128xf32>
      %852 = vector.broadcast %851 : vector<1x128xf32> to vector<16x128xf32>
      %853 = arith.mulf %850, %852 : vector<16x128xf32>
      %854 = arith.addf %848, %853 : vector<16x128xf32>
      %c10_169 = arith.constant 10 : index
      %c0_170 = arith.constant 0 : index
      %c0_171 = arith.constant 0 : index
      %855 = vector.load %arg4[%c10_169, %c0_170, %c0_171] : memref<16x16x128xf32, #tpu.memory_space<vmem>>, vector<1x16x128xf32>
      %856 = vector.shape_cast %855 : vector<1x16x128xf32> to vector<16x128xf32>
      %857 = vector.extract_strided_slice %arg6 {offsets = [10, 0], sizes = [1, 128], strides = [1, 1]} : vector<16x128xf32> to vector<1x128xf32>
      %858 = vector.broadcast %857 : vector<1x128xf32> to vector<16x128xf32>
      %859 = arith.mulf %856, %858 : vector<16x128xf32>
      %860 = arith.addf %854, %859 : vector<16x128xf32>
      %c11_172 = arith.constant 11 : index
      %c0_173 = arith.constant 0 : index
      %c0_174 = arith.constant 0 : index
      %861 = vector.load %arg4[%c11_172, %c0_173, %c0_174] : memref<16x16x128xf32, #tpu.memory_space<vmem>>, vector<1x16x128xf32>
      %862 = vector.shape_cast %861 : vector<1x16x128xf32> to vector<16x128xf32>
      %863 = vector.extract_strided_slice %arg6 {offsets = [11, 0], sizes = [1, 128], strides = [1, 1]} : vector<16x128xf32> to vector<1x128xf32>
      %864 = vector.broadcast %863 : vector<1x128xf32> to vector<16x128xf32>
      %865 = arith.mulf %862, %864 : vector<16x128xf32>
      %866 = arith.addf %860, %865 : vector<16x128xf32>
      %c12_175 = arith.constant 12 : index
      %c0_176 = arith.constant 0 : index
      %c0_177 = arith.constant 0 : index
      %867 = vector.load %arg4[%c12_175, %c0_176, %c0_177] : memref<16x16x128xf32, #tpu.memory_space<vmem>>, vector<1x16x128xf32>
      %868 = vector.shape_cast %867 : vector<1x16x128xf32> to vector<16x128xf32>
      %869 = vector.extract_strided_slice %arg6 {offsets = [12, 0], sizes = [1, 128], strides = [1, 1]} : vector<16x128xf32> to vector<1x128xf32>
      %870 = vector.broadcast %869 : vector<1x128xf32> to vector<16x128xf32>
      %871 = arith.mulf %868, %870 : vector<16x128xf32>
      %872 = arith.addf %866, %871 : vector<16x128xf32>
      %c13_178 = arith.constant 13 : index
      %c0_179 = arith.constant 0 : index
      %c0_180 = arith.constant 0 : index
      %873 = vector.load %arg4[%c13_178, %c0_179, %c0_180] : memref<16x16x128xf32, #tpu.memory_space<vmem>>, vector<1x16x128xf32>
      %874 = vector.shape_cast %873 : vector<1x16x128xf32> to vector<16x128xf32>
      %875 = vector.extract_strided_slice %arg6 {offsets = [13, 0], sizes = [1, 128], strides = [1, 1]} : vector<16x128xf32> to vector<1x128xf32>
      %876 = vector.broadcast %875 : vector<1x128xf32> to vector<16x128xf32>
      %877 = arith.mulf %874, %876 : vector<16x128xf32>
      %878 = arith.addf %872, %877 : vector<16x128xf32>
      %c14_181 = arith.constant 14 : index
      %c0_182 = arith.constant 0 : index
      %c0_183 = arith.constant 0 : index
      %879 = vector.load %arg4[%c14_181, %c0_182, %c0_183] : memref<16x16x128xf32, #tpu.memory_space<vmem>>, vector<1x16x128xf32>
      %880 = vector.shape_cast %879 : vector<1x16x128xf32> to vector<16x128xf32>
      %881 = vector.extract_strided_slice %arg6 {offsets = [14, 0], sizes = [1, 128], strides = [1, 1]} : vector<16x128xf32> to vector<1x128xf32>
      %882 = vector.broadcast %881 : vector<1x128xf32> to vector<16x128xf32>
      %883 = arith.mulf %880, %882 : vector<16x128xf32>
      %884 = arith.addf %878, %883 : vector<16x128xf32>
      %c15_184 = arith.constant 15 : index
      %c0_185 = arith.constant 0 : index
      %c0_186 = arith.constant 0 : index
      %885 = vector.load %arg4[%c15_184, %c0_185, %c0_186] : memref<16x16x128xf32, #tpu.memory_space<vmem>>, vector<1x16x128xf32>
      %886 = vector.shape_cast %885 : vector<1x16x128xf32> to vector<16x128xf32>
      %887 = vector.extract_strided_slice %arg6 {offsets = [15, 0], sizes = [1, 128], strides = [1, 1]} : vector<16x128xf32> to vector<1x128xf32>
      %888 = vector.broadcast %887 : vector<1x128xf32> to vector<16x128xf32>
      %889 = arith.mulf %886, %888 : vector<16x128xf32>
      %890 = arith.addf %884, %889 : vector<16x128xf32>
      scf.yield %890 : vector<16x128xf32>
    }
    %c0_85 = arith.constant 0 : index
    %c0_86 = arith.constant 0 : index
    %c0_87 = arith.constant 0 : index
    %688 = vector.load %arg4[%c0_85, %c0_86, %c0_87] : memref<16x16x128xf32, #tpu.memory_space<vmem>>, vector<1x16x128xf32>
    %689 = vector.shape_cast %688 : vector<1x16x128xf32> to vector<16x128xf32>
    %690 = vector.extract_strided_slice %687 {offsets = [0, 0], sizes = [1, 128], strides = [1, 1]} : vector<16x128xf32> to vector<1x128xf32>
    %691 = vector.broadcast %690 : vector<1x128xf32> to vector<16x128xf32>
    %692 = arith.mulf %689, %691 : vector<16x128xf32>
    %c1_88 = arith.constant 1 : index
    %c0_89 = arith.constant 0 : index
    %c0_90 = arith.constant 0 : index
    %693 = vector.load %arg4[%c1_88, %c0_89, %c0_90] : memref<16x16x128xf32, #tpu.memory_space<vmem>>, vector<1x16x128xf32>
    %694 = vector.shape_cast %693 : vector<1x16x128xf32> to vector<16x128xf32>
    %695 = vector.extract_strided_slice %687 {offsets = [1, 0], sizes = [1, 128], strides = [1, 1]} : vector<16x128xf32> to vector<1x128xf32>
    %696 = vector.broadcast %695 : vector<1x128xf32> to vector<16x128xf32>
    %697 = arith.mulf %694, %696 : vector<16x128xf32>
    %698 = arith.addf %692, %697 : vector<16x128xf32>
    %c2_91 = arith.constant 2 : index
    %c0_92 = arith.constant 0 : index
    %c0_93 = arith.constant 0 : index
    %699 = vector.load %arg4[%c2_91, %c0_92, %c0_93] : memref<16x16x128xf32, #tpu.memory_space<vmem>>, vector<1x16x128xf32>
    %700 = vector.shape_cast %699 : vector<1x16x128xf32> to vector<16x128xf32>
    %701 = vector.extract_strided_slice %687 {offsets = [2, 0], sizes = [1, 128], strides = [1, 1]} : vector<16x128xf32> to vector<1x128xf32>
    %702 = vector.broadcast %701 : vector<1x128xf32> to vector<16x128xf32>
    %703 = arith.mulf %700, %702 : vector<16x128xf32>
    %704 = arith.addf %698, %703 : vector<16x128xf32>
    %c3_94 = arith.constant 3 : index
    %c0_95 = arith.constant 0 : index
    %c0_96 = arith.constant 0 : index
    %705 = vector.load %arg4[%c3_94, %c0_95, %c0_96] : memref<16x16x128xf32, #tpu.memory_space<vmem>>, vector<1x16x128xf32>
    %706 = vector.shape_cast %705 : vector<1x16x128xf32> to vector<16x128xf32>
    %707 = vector.extract_strided_slice %687 {offsets = [3, 0], sizes = [1, 128], strides = [1, 1]} : vector<16x128xf32> to vector<1x128xf32>
    %708 = vector.broadcast %707 : vector<1x128xf32> to vector<16x128xf32>
    %709 = arith.mulf %706, %708 : vector<16x128xf32>
    %710 = arith.addf %704, %709 : vector<16x128xf32>
    %c4_97 = arith.constant 4 : index
    %c0_98 = arith.constant 0 : index
    %c0_99 = arith.constant 0 : index
    %711 = vector.load %arg4[%c4_97, %c0_98, %c0_99] : memref<16x16x128xf32, #tpu.memory_space<vmem>>, vector<1x16x128xf32>
    %712 = vector.shape_cast %711 : vector<1x16x128xf32> to vector<16x128xf32>
    %713 = vector.extract_strided_slice %687 {offsets = [4, 0], sizes = [1, 128], strides = [1, 1]} : vector<16x128xf32> to vector<1x128xf32>
    %714 = vector.broadcast %713 : vector<1x128xf32> to vector<16x128xf32>
    %715 = arith.mulf %712, %714 : vector<16x128xf32>
    %716 = arith.addf %710, %715 : vector<16x128xf32>
    %c5_100 = arith.constant 5 : index
    %c0_101 = arith.constant 0 : index
    %c0_102 = arith.constant 0 : index
    %717 = vector.load %arg4[%c5_100, %c0_101, %c0_102] : memref<16x16x128xf32, #tpu.memory_space<vmem>>, vector<1x16x128xf32>
    %718 = vector.shape_cast %717 : vector<1x16x128xf32> to vector<16x128xf32>
    %719 = vector.extract_strided_slice %687 {offsets = [5, 0], sizes = [1, 128], strides = [1, 1]} : vector<16x128xf32> to vector<1x128xf32>
    %720 = vector.broadcast %719 : vector<1x128xf32> to vector<16x128xf32>
    %721 = arith.mulf %718, %720 : vector<16x128xf32>
    %722 = arith.addf %716, %721 : vector<16x128xf32>
    %c6_103 = arith.constant 6 : index
    %c0_104 = arith.constant 0 : index
    %c0_105 = arith.constant 0 : index
    %723 = vector.load %arg4[%c6_103, %c0_104, %c0_105] : memref<16x16x128xf32, #tpu.memory_space<vmem>>, vector<1x16x128xf32>
    %724 = vector.shape_cast %723 : vector<1x16x128xf32> to vector<16x128xf32>
    %725 = vector.extract_strided_slice %687 {offsets = [6, 0], sizes = [1, 128], strides = [1, 1]} : vector<16x128xf32> to vector<1x128xf32>
    %726 = vector.broadcast %725 : vector<1x128xf32> to vector<16x128xf32>
    %727 = arith.mulf %724, %726 : vector<16x128xf32>
    %728 = arith.addf %722, %727 : vector<16x128xf32>
    %c7_106 = arith.constant 7 : index
    %c0_107 = arith.constant 0 : index
    %c0_108 = arith.constant 0 : index
    %729 = vector.load %arg4[%c7_106, %c0_107, %c0_108] : memref<16x16x128xf32, #tpu.memory_space<vmem>>, vector<1x16x128xf32>
    %730 = vector.shape_cast %729 : vector<1x16x128xf32> to vector<16x128xf32>
    %731 = vector.extract_strided_slice %687 {offsets = [7, 0], sizes = [1, 128], strides = [1, 1]} : vector<16x128xf32> to vector<1x128xf32>
    %732 = vector.broadcast %731 : vector<1x128xf32> to vector<16x128xf32>
    %733 = arith.mulf %730, %732 : vector<16x128xf32>
    %734 = arith.addf %728, %733 : vector<16x128xf32>
    %c8_109 = arith.constant 8 : index
    %c0_110 = arith.constant 0 : index
    %c0_111 = arith.constant 0 : index
    %735 = vector.load %arg4[%c8_109, %c0_110, %c0_111] : memref<16x16x128xf32, #tpu.memory_space<vmem>>, vector<1x16x128xf32>
    %736 = vector.shape_cast %735 : vector<1x16x128xf32> to vector<16x128xf32>
    %737 = vector.extract_strided_slice %687 {offsets = [8, 0], sizes = [1, 128], strides = [1, 1]} : vector<16x128xf32> to vector<1x128xf32>
    %738 = vector.broadcast %737 : vector<1x128xf32> to vector<16x128xf32>
    %739 = arith.mulf %736, %738 : vector<16x128xf32>
    %740 = arith.addf %734, %739 : vector<16x128xf32>
    %c9_112 = arith.constant 9 : index
    %c0_113 = arith.constant 0 : index
    %c0_114 = arith.constant 0 : index
    %741 = vector.load %arg4[%c9_112, %c0_113, %c0_114] : memref<16x16x128xf32, #tpu.memory_space<vmem>>, vector<1x16x128xf32>
    %742 = vector.shape_cast %741 : vector<1x16x128xf32> to vector<16x128xf32>
    %743 = vector.extract_strided_slice %687 {offsets = [9, 0], sizes = [1, 128], strides = [1, 1]} : vector<16x128xf32> to vector<1x128xf32>
    %744 = vector.broadcast %743 : vector<1x128xf32> to vector<16x128xf32>
    %745 = arith.mulf %742, %744 : vector<16x128xf32>
    %746 = arith.addf %740, %745 : vector<16x128xf32>
    %c10_115 = arith.constant 10 : index
    %c0_116 = arith.constant 0 : index
    %c0_117 = arith.constant 0 : index
    %747 = vector.load %arg4[%c10_115, %c0_116, %c0_117] : memref<16x16x128xf32, #tpu.memory_space<vmem>>, vector<1x16x128xf32>
    %748 = vector.shape_cast %747 : vector<1x16x128xf32> to vector<16x128xf32>
    %749 = vector.extract_strided_slice %687 {offsets = [10, 0], sizes = [1, 128], strides = [1, 1]} : vector<16x128xf32> to vector<1x128xf32>
    %750 = vector.broadcast %749 : vector<1x128xf32> to vector<16x128xf32>
    %751 = arith.mulf %748, %750 : vector<16x128xf32>
    %752 = arith.addf %746, %751 : vector<16x128xf32>
    %c11_118 = arith.constant 11 : index
    %c0_119 = arith.constant 0 : index
    %c0_120 = arith.constant 0 : index
    %753 = vector.load %arg4[%c11_118, %c0_119, %c0_120] : memref<16x16x128xf32, #tpu.memory_space<vmem>>, vector<1x16x128xf32>
    %754 = vector.shape_cast %753 : vector<1x16x128xf32> to vector<16x128xf32>
    %755 = vector.extract_strided_slice %687 {offsets = [11, 0], sizes = [1, 128], strides = [1, 1]} : vector<16x128xf32> to vector<1x128xf32>
    %756 = vector.broadcast %755 : vector<1x128xf32> to vector<16x128xf32>
    %757 = arith.mulf %754, %756 : vector<16x128xf32>
    %758 = arith.addf %752, %757 : vector<16x128xf32>
    %c12_121 = arith.constant 12 : index
    %c0_122 = arith.constant 0 : index
    %c0_123 = arith.constant 0 : index
    %759 = vector.load %arg4[%c12_121, %c0_122, %c0_123] : memref<16x16x128xf32, #tpu.memory_space<vmem>>, vector<1x16x128xf32>
    %760 = vector.shape_cast %759 : vector<1x16x128xf32> to vector<16x128xf32>
    %761 = vector.extract_strided_slice %687 {offsets = [12, 0], sizes = [1, 128], strides = [1, 1]} : vector<16x128xf32> to vector<1x128xf32>
    %762 = vector.broadcast %761 : vector<1x128xf32> to vector<16x128xf32>
    %763 = arith.mulf %760, %762 : vector<16x128xf32>
    %764 = arith.addf %758, %763 : vector<16x128xf32>
    %c13_124 = arith.constant 13 : index
    %c0_125 = arith.constant 0 : index
    %c0_126 = arith.constant 0 : index
    %765 = vector.load %arg4[%c13_124, %c0_125, %c0_126] : memref<16x16x128xf32, #tpu.memory_space<vmem>>, vector<1x16x128xf32>
    %766 = vector.shape_cast %765 : vector<1x16x128xf32> to vector<16x128xf32>
    %767 = vector.extract_strided_slice %687 {offsets = [13, 0], sizes = [1, 128], strides = [1, 1]} : vector<16x128xf32> to vector<1x128xf32>
    %768 = vector.broadcast %767 : vector<1x128xf32> to vector<16x128xf32>
    %769 = arith.mulf %766, %768 : vector<16x128xf32>
    %770 = arith.addf %764, %769 : vector<16x128xf32>
    %c14_127 = arith.constant 14 : index
    %c0_128 = arith.constant 0 : index
    %c0_129 = arith.constant 0 : index
    %771 = vector.load %arg4[%c14_127, %c0_128, %c0_129] : memref<16x16x128xf32, #tpu.memory_space<vmem>>, vector<1x16x128xf32>
    %772 = vector.shape_cast %771 : vector<1x16x128xf32> to vector<16x128xf32>
    %773 = vector.extract_strided_slice %687 {offsets = [14, 0], sizes = [1, 128], strides = [1, 1]} : vector<16x128xf32> to vector<1x128xf32>
    %774 = vector.broadcast %773 : vector<1x128xf32> to vector<16x128xf32>
    %775 = arith.mulf %772, %774 : vector<16x128xf32>
    %776 = arith.addf %770, %775 : vector<16x128xf32>
    %c15_130 = arith.constant 15 : index
    %c0_131 = arith.constant 0 : index
    %c0_132 = arith.constant 0 : index
    %777 = vector.load %arg4[%c15_130, %c0_131, %c0_132] : memref<16x16x128xf32, #tpu.memory_space<vmem>>, vector<1x16x128xf32>
    %778 = vector.shape_cast %777 : vector<1x16x128xf32> to vector<16x128xf32>
    %779 = vector.extract_strided_slice %687 {offsets = [15, 0], sizes = [1, 128], strides = [1, 1]} : vector<16x128xf32> to vector<1x128xf32>
    %780 = vector.broadcast %779 : vector<1x128xf32> to vector<16x128xf32>
    %781 = arith.mulf %778, %780 : vector<16x128xf32>
    %782 = arith.addf %776, %781 : vector<16x128xf32>
    %783 = arith.mulf %687, %782 : vector<16x128xf32>
    %cst_133 = arith.constant dense<0.000000e+00> : vector<128xf32>
    %784 = vector.multi_reduction <add>, %783, %cst_133 [0] : vector<16x128xf32> to vector<128xf32>
    %785 = vector.shape_cast %784 : vector<128xf32> to vector<1x128xf32>
    %786 = arith.mulf %687, %687 : vector<16x128xf32>
    %cst_134 = arith.constant dense<0.000000e+00> : vector<128xf32>
    %787 = vector.multi_reduction <add>, %786, %cst_134 [0] : vector<16x128xf32> to vector<128xf32>
    %788 = vector.shape_cast %787 : vector<128xf32> to vector<1x128xf32>
    %cst_135 = arith.constant 1.600000e+01 : f32
    %789 = vector.broadcast %cst_135 : f32 to vector<1x128xf32>
    %790 = arith.mulf %788, %789 : vector<1x128xf32>
    %791 = arith.divf %785, %790 : vector<1x128xf32>
    %792 = math.log %791 : vector<1x128xf32>
    %cst_136 = arith.constant 0.000000e+00 : f32
    %793 = vector.broadcast %cst_136 : f32 to vector<1x128xf32>
    %794 = arith.subf %793, %792 : vector<1x128xf32>
    %c0_137 = arith.constant 0 : index
    %c0_138 = arith.constant 0 : index
    %795 = vector.load %arg3[%c0_137, %c0_138] : memref<1x128xf32, #tpu.memory_space<vmem>>, vector<1x128xf32>
    tpu.vector_store %arg3[%c0_137, %c0_138], %794 {strides = array<i32>} : memref<1x128xf32, #tpu.memory_space<vmem>>, vector<1x128xf32>,
    return
  }
  func.func @transform_0(%arg0: i32) -> (i32, i32, i32) {
    %c0_i32 = arith.constant 0 : i32
    %c0_i32_0 = arith.constant 0 : i32
    %c0_i32_1 = arith.constant 0 : i32
    return %c0_i32, %c0_i32_0, %arg0 : i32, i32, i32
  }
  func.func @transform_1(%arg0: i32) -> (i32, i32, i32) {
    %c0_i32 = arith.constant 0 : i32
    %c0_i32_0 = arith.constant 0 : i32
    %c0_i32_1 = arith.constant 0 : i32
    return %c0_i32, %c0_i32_0, %arg0 : i32, i32, i32
  }
  func.func @transform_2(%arg0: i32) -> (i32, i32) {
    %c0_i32 = arith.constant 0 : i32
    %c0_i32_0 = arith.constant 0 : i32
    return %c0_i32, %arg0 : i32, i32
  }
}

</mosaic_0001>

<llo_original>
// kernel: tpu_custom_call.1
$region0: #{tpu_custom_call.1}
  #allocation0 [shape = 'u32[]', space=smem, size = 0x4, offset = 0x4, fixed_abs, tag = 'smem constant byte address 0x4 - core index']
  #allocation1 [shape = 'u32[144,128]{1,0:T(1,128)}', space=vmem, size = 0x12000, scoped, tag = 'internal scratch']
  #allocation2 [shape = 'f32[16,16,128]{2,1,0:T(8,128)}', space=vmem, size = 0x20000, scoped, tag = 'scratch operand']
  %s0 = inlined_call_operand.hbm [shape: f32[3,16,256], index: 0, kind: input, shape index: {}]
  %s1 = inlined_call_operand.hbm [shape: f32[3,16,256], index: 1, kind: input, shape index: {}]
  %s2 = inlined_call_operand.hbm [shape: f32[1,256], index: 2, kind: output, shape index: {}]
  %s3 = sld [smem:[#allocation0]]
  $region56: #{tpu_custom_call.1} parent=0
    _
  %s5 = ssub.s32 1, %s3
  %s6 = scalar_select 0, %s5, %s3
  $region1: #{tpu_custom_call.1} parent=0
    #allocation3 [shape = 'u8[49152]{0}', space=vmem, size = 0xc000, scoped, tag = 'input window, operand 0']
    #allocation4 [shape = 's32[2]{0}', space=sflag, size = 0x8, scoped, tag = 'scoped memory for tpu_custom_call.1']
    #allocation5 [shape = 's32[2]{0}', space=sflag, size = 0x8, scoped, tag = 'scoped memory for tpu_custom_call.1']
    #allocation6 [shape = 'u8[49152]{0}', space=vmem, size = 0xc000, scoped, tag = 'input window, operand 1']
    #allocation7 [shape = 's32[2]{0}', space=sflag, size = 0x8, scoped, tag = 'scoped memory for tpu_custom_call.1']
    #allocation8 [shape = 'u8[1024]{0}', space=vmem, size = 0x400, scoped, tag = 'output window, operand 0']
    %7 = vsyncpa [#allocation4], 0
    %s8 = scalar_lea.sflag [#allocation4], 1
    %9 = vsyncpa %s8, 0
    %10 = vsyncpa [#allocation7], 0
    %s11 = scalar_lea.sflag [#allocation7], 1
    %12 = vsyncpa %s11, 0
    %13 = vsyncpa [#allocation5], 0
    %s14 = scalar_lea.sflag [#allocation5], 1
    %15 = vsyncpa %s14, 0
    loop: start=0, step=1, limit=4
    $region2: #{tpu_custom_call.1} parent=1 // loop_pre_header
      _
    $region3: #{tpu_custom_call.1} parent=1 // loop_header
      %s17 = sphi 0, %s21
      %p18 = scmp.ge.s32.totalorder %s17, 4
      %s27 = sphi 0, %s29
      %s30 = sphi 0, %s27
      %s31 = sphi 0, %s30
      %s47 = sphi 0, %s31
      %s53 = sphi 0, %s55
      %s56 = sphi 0, %s53
      %s57 = sphi 0, %s56
      %s73 = sphi 0, %s57
      %s79 = sphi 0, %s81
      %s82 = sphi 0, %s79
      %s83 = sphi 0, %s82
      %s99 = sphi 0, %s83
    $region4: #{tpu_custom_call.1} parent=1 // loop_header_branch
      %20 = sbr.rel (%p18) target = $region8
    $region5: #{tpu_custom_call.1} parent=1 // loop_body
      %s22 = ssub.s32 %s17, 1
      %s23 = ssub.s32 %s17, 2
      %s24 = sadd.s32 %s17, 1
      %s25 = ssub.s32 %s17, %s24
      %p26 = scmp.eq.s32.totalorder %s25, 0
      %s28 = sadd.s32 %s27, 1
      %s29 = scalar_select %p26, %s27, %s28
      %p32 = pneg %p26
      %p33 = scmp.eq.s32.totalorder %s17, 1
      %p34 = por %p32, %p33
      %p35 = scmp.ne.s32.totalorder %s27, %s30
      %p36 = scmp.eq.s32.totalorder %s17, 0
      %p37 = por %p35, %p36
      %p38 = scmp.ne.s32.totalorder %s27, %s30
      %p39 = scmp.eq.s32.totalorder %s22, 1
      %p40 = por %p38, %p39
      %p41 = scmp.ne.s32.totalorder %s30, %s31
      %p42 = scmp.eq.s32.totalorder %s22, 0
      %p43 = por %p41, %p42
      %p44 = scmp.ne.s32.totalorder %s30, %s31
      %p45 = scmp.eq.s32.totalorder %s23, 1
      %p46 = por %p44, %p45
      %p48 = scmp.ne.s32.totalorder %s31, %s47
      %p49 = scmp.eq.s32.totalorder %s23, 0
      %p50 = por %p48, %p49
      %s51 = ssub.s32 %s17, %s24
      %p52 = scmp.eq.s32.totalorder %s51, 0
      %s54 = sadd.s32 %s53, 1
      %s55 = scalar_select %p52, %s53, %s54
      %p58 = pneg %p52
      %p59 = scmp.eq.s32.totalorder %s17, 1
      %p60 = por %p58, %p59
      %p61 = scmp.ne.s32.totalorder %s53, %s56
      %p62 = scmp.eq.s32.totalorder %s17, 0
      %p63 = por %p61, %p62
      %p64 = scmp.ne.s32.totalorder %s53, %s56
      %p65 = scmp.eq.s32.totalorder %s22, 1
      %p66 = por %p64, %p65
      %p67 = scmp.ne.s32.totalorder %s56, %s57
      %p68 = scmp.eq.s32.totalorder %s22, 0
      %p69 = por %p67, %p68
      %p70 = scmp.ne.s32.totalorder %s56, %s57
      %p71 = scmp.eq.s32.totalorder %s23, 1
      %p72 = por %p70, %p71
      %p74 = scmp.ne.s32.totalorder %s57, %s73
      %p75 = scmp.eq.s32.totalorder %s23, 0
      %p76 = por %p74, %p75
      %s77 = ssub.s32 %s17, %s24
      %p78 = scmp.eq.s32.totalorder %s77, 0
      %s80 = sadd.s32 %s79, 1
      %s81 = scalar_select %p78, %s79, %s80
      %p84 = pneg %p78
      %p85 = scmp.eq.s32.totalorder %s17, 1
      %p86 = por %p84, %p85
      %p87 = scmp.ne.s32.totalorder %s79, %s82
      %p88 = scmp.eq.s32.totalorder %s17, 0
      %p89 = por %p87, %p88
      %p90 = scmp.ne.s32.totalorder %s79, %s82
      %p91 = scmp.eq.s32.totalorder %s22, 1
      %p92 = por %p90, %p91
      %p93 = scmp.ne.s32.totalorder %s82, %s83
      %p94 = scmp.eq.s32.totalorder %s22, 0
      %p95 = por %p93, %p94
      %p96 = scmp.ne.s32.totalorder %s82, %s83
      %p97 = scmp.eq.s32.totalorder %s23, 1
      %p98 = por %p96, %p97
      %p100 = scmp.ne.s32.totalorder %s83, %s99
      %p101 = scmp.eq.s32.totalorder %s23, 0
      %p102 = por %p100, %p101
      %p103 = scmp.le.s32.totalorder 1, %s17
      %p104 = scmp.lt.s32.totalorder %s17, 3
      %p105 = pnand %p103, %p104
      %p106 = pneg %p105
      // Predicated region
      $region9: #{tpu_custom_call.1} parent=5 // pred_check
        _
      $region10: #{tpu_custom_call.1} parent=5 // pred_check_branch
        %108 = sbr.rel (%p105) target = $region12
      $region11: #{tpu_custom_call.1} parent=5 // pred_region
        %s109 = ssub.s32 %s17, 1
      $region12: #{tpu_custom_call.1} parent=5 // pred_fallthru
        _
      %p110 = scmp.lt.s32.totalorder %s17, 2
      // Predicated region
      $region13: #{tpu_custom_call.1} parent=5 // pred_check
        %p111 = pneg %p110
      $region14: #{tpu_custom_call.1} parent=5 // pred_check_branch
        %113 = sbr.rel (%p111) target = $region16
      $region15: #{tpu_custom_call.1} parent=5 // pred_region
        // Predicated region
        $region17: #{tpu_custom_call.1} parent=15 // pred_check
          %p114 = pneg %p37
        $region18: #{tpu_custom_call.1} parent=15 // pred_check_branch
          %116 = sbr.rel (%p114) target = $region20
        $region19: #{tpu_custom_call.1} parent=15 // pred_region
          %s117 = sand.u32 %s27, 1
          %s118 = scalar_lea.sflag [#allocation4], %s117
          %s119 = sand.u32 %s27, 1
          %s120 = smul.addr %s119, 48
          %s121 = scalar_lea.vmem [#allocation3], %s120
          %s123 = ssub.s32 768, 768
          %124 = vsyncadd %s118, %s123
          %s125 = smul.addr %s17, 128
          %s126 = scalar_lea.hbm %s0, %s125
          %s127 = sshll.u32 %s121, 4
          %s128 = int_to_ptr.vmem [resolvable:$true] %s127
          %133 = dma.hbm_to_vmem [thread:$0]  %s126, 768, %s128, %s118, 256, 128, 8
        $region20: #{tpu_custom_call.1} parent=15 // pred_fallthru
          _
        // Predicated region
        $region21: #{tpu_custom_call.1} parent=15 // pred_check
          %p134 = pneg %p63
        $region22: #{tpu_custom_call.1} parent=15 // pred_check_branch
          %136 = sbr.rel (%p134) target = $region24
        $region23: #{tpu_custom_call.1} parent=15 // pred_region
          %s137 = sand.u32 %s53, 1
          %s138 = scalar_lea.sflag [#allocation7], %s137
          %s139 = sand.u32 %s53, 1
          %s140 = smul.addr %s139, 48
          %s141 = scalar_lea.vmem [#allocation6], %s140
          %s143 = ssub.s32 768, 768
          %144 = vsyncadd %s138, %s143
          %s145 = smul.addr %s17, 128
          %s146 = scalar_lea.hbm %s1, %s145
          %s147 = sshll.u32 %s141, 4
          %s148 = int_to_ptr.vmem [resolvable:$true] %s147
          %153 = dma.hbm_to_vmem [thread:$0]  %s146, 768, %s148, %s138, 256, 128, 8
        $region24: #{tpu_custom_call.1} parent=15 // pred_fallthru
          _
      $region16: #{tpu_custom_call.1} parent=5 // pred_fallthru
        _
      %p154 = scmp.le.s32.totalorder 1, %s17
      %p155 = scmp.lt.s32.totalorder %s17, 3
      %p156 = pnand %p154, %p155
      %p157 = pneg %p156
      // Predicated region
      $region25: #{tpu_custom_call.1} parent=5 // pred_check
        _
      $region26: #{tpu_custom_call.1} parent=5 // pred_check_branch
        %159 = sbr.rel (%p156) target = $region28
      $region27: #{tpu_custom_call.1} parent=5 // pred_region
        %s160 = ssub.s32 %s17, 1
        %s161 = sand.u32 %s30, 1
        %s162 = scalar_lea.sflag [#allocation4], %s161
        %s163 = sand.u32 %s30, 1
        %s164 = smul.addr %s163, 48
        %s165 = scalar_lea.vmem [#allocation3], %s164
        // Predicated region
        $region29: #{tpu_custom_call.1} parent=27 // pred_check
          %p166 = pneg %p43
        $region30: #{tpu_custom_call.1} parent=27 // pred_check_branch
          %168 = sbr.rel (%p166) target = $region32
        $region31: #{tpu_custom_call.1} parent=27 // pred_region
          %169 = dma.done %s162, 768
        $region32: #{tpu_custom_call.1} parent=27 // pred_fallthru
          _
        %s170 = sand.u32 %s56, 1
        %s171 = scalar_lea.sflag [#allocation7], %s170
        %s172 = sand.u32 %s56, 1
        %s173 = smul.addr %s172, 48
        %s174 = scalar_lea.vmem [#allocation6], %s173
        // Predicated region
        $region33: #{tpu_custom_call.1} parent=27 // pred_check
          %p175 = pneg %p69
        $region34: #{tpu_custom_call.1} parent=27 // pred_check_branch
          %177 = sbr.rel (%p175) target = $region36
        $region35: #{tpu_custom_call.1} parent=27 // pred_region
          %178 = dma.done %s171, 768
        $region36: #{tpu_custom_call.1} parent=27 // pred_fallthru
          _
        %s179 = sand.u32 %s30, 1
        %s180 = scalar_lea.sflag [#allocation4], %s179
        %s181 = sand.u32 %s30, 1
        %s182 = smul.addr %s181, 48
        %s183 = scalar_lea.vmem [#allocation3], %s182
        %p184 = pneg %p43
        %p185 = pneg %p40
        %s186 = sand.u32 %s56, 1
        %s187 = scalar_lea.sflag [#allocation7], %s186
        %s188 = sand.u32 %s56, 1
        %s189 = smul.addr %s188, 48
        %s190 = scalar_lea.vmem [#allocation6], %s189
        %p191 = pneg %p69
        %p192 = pneg %p66
        %p193 = pneg %p95
        %p194 = pneg %p92
        %s195 = sand.u32 %s82, 1
        %s196 = scalar_lea.sflag [#allocation5], %s195
        %s197 = sand.u32 %s82, 1
        %s198 = scalar_lea.vmem [#allocation8], %s197
        %v199 = vld [vmem:[%s165] sm:$0xff]
        %v200 = vld [vmem:[%s165 + $0x8] sm:$0xff]
        %v201 = vld [vmem:[%s165 + $0x10] sm:$0xff]
        %v202 = vld [vmem:[%s165 + $0x18] sm:$0xff]
        %v203 = vld [vmem:[%s165 + $0x20] sm:$0xff]
        %v204 = vld [vmem:[%s165 + $0x28] sm:$0xff]
        %v205 = vld [vmem:[%s174] sm:$0xff]
        %v206 = vld [vmem:[%s174 + $0x8] sm:$0xff]
        %v207 = vld [vmem:[%s174 + $0x10] sm:$0xff]
        %v208 = vld [vmem:[%s174 + $0x18] sm:$0xff]
        %v209 = vld [vmem:[%s174 + $0x20] sm:$0xff]
        %v210 = vld [vmem:[%s174 + $0x28] sm:$0xff]
        %v211 = vadd.f32 %v199, %v205
        %v212 = vadd.f32 %v200, %v206
        %v213 = vadd.f32 %v201, %v207
        %v214 = vadd.f32 %v202, %v208
        %v215 = vadd.f32 %v203, %v209
        %v216 = vadd.f32 %v204, %v210
        %v217 = vlaneseq
        %v218 = vshrl.u32 %v217, 7
        %v219 = vsub.s32 0, %v218
        %v220 = vrot.slane %v199, %v219
        %v221 = vsub.f32 %v220, %v199
        %v222 = vsub.f32 %v220, %v200
        %v223 = vmul.f32 %v221, %v221
        %v224 = vmul.f32 %v222, %v222
        %v225 = vlaneseq
        %v226 = vshrl.u32 %v225, 7
        %v227 = vsub.s32 0, %v226
        %v228 = vrot.slane %v201, %v227
        %v229 = vsub.f32 %v228, %v201
        %v230 = vsub.f32 %v228, %v202
        %v231 = vmul.f32 %v229, %v229
        %v232 = vmul.f32 %v230, %v230
        %v233 = vadd.f32 %v223, %v231
        %v234 = vadd.f32 %v224, %v232
        %v235 = vlaneseq
        %v236 = vshrl.u32 %v235, 7
        %v237 = vsub.s32 0, %v236
        %v238 = vrot.slane %v203, %v237
        %v239 = vsub.f32 %v238, %v203
        %v240 = vsub.f32 %v238, %v204
        %v241 = vmul.f32 %v239, %v239
        %v242 = vmul.f32 %v240, %v240
        %v243 = vadd.f32 %v233, %v241
        %v244 = vadd.f32 %v234, %v242
        %v245 = vlaneseq
        %v246 = vshrl.u32 %v245, 7
        %v247 = vsub.s32 0, %v246
        %v248 = vrot.slane %v211, %v247
        %v249 = vsub.f32 %v248, %v211
        %v250 = vsub.f32 %v248, %v212
        %v251 = vmul.f32 %v249, %v249
        %v252 = vmul.f32 %v250, %v250
        %v253 = vlaneseq
        %v254 = vshrl.u32 %v253, 7
        %v255 = vsub.s32 0, %v254
        %v256 = vrot.slane %v213, %v255
        %v257 = vsub.f32 %v256, %v213
        %v258 = vsub.f32 %v256, %v214
        %v259 = vmul.f32 %v257, %v257
        %v260 = vmul.f32 %v258, %v258
        %v261 = vadd.f32 %v251, %v259
        %v262 = vadd.f32 %v252, %v260
        %v263 = vlaneseq
        %v264 = vshrl.u32 %v263, 7
        %v265 = vsub.s32 0, %v264
        %v266 = vrot.slane %v215, %v265
        %v267 = vsub.f32 %v266, %v215
        %v268 = vsub.f32 %v266, %v216
        %v269 = vmul.f32 %v267, %v267
        %v270 = vmul.f32 %v268, %v268
        %v271 = vadd.f32 %v261, %v269
        %v272 = vadd.f32 %v262, %v270
        %v273 = vrsqrt.pop %v243
        %v274 = vmul.f32 %v243, %v273
        %vm275 = vcmp.eq.f32.partialorder %v243, inf
        %v276 = vsel %vm275, %v243, %v274
        %vm277 = vcmp.eq.f32.partialorder %v243, 0.0
        %v278 = vand.u32 %v243, 2147483648
        %v279 = vsel %vm277, %v278, %v276
        %v280 = vrsqrt.pop %v244
        %v281 = vmul.f32 %v244, %v280
        %vm282 = vcmp.eq.f32.partialorder %v244, inf
        %v283 = vsel %vm282, %v244, %v281
        %vm284 = vcmp.eq.f32.partialorder %v244, 0.0
        %v285 = vand.u32 %v244, 2147483648
        %v286 = vsel %vm284, %v285, %v283
        %v287 = vrsqrt.pop %v271
        %v288 = vmul.f32 %v271, %v287
        %vm289 = vcmp.eq.f32.partialorder %v271, inf
        %v290 = vsel %vm289, %v271, %v288
        %vm291 = vcmp.eq.f32.partialorder %v271, 0.0
        %v292 = vand.u32 %v271, 2147483648
        %v293 = vsel %vm291, %v292, %v290
        %v294 = vrsqrt.pop %v272
        %v295 = vmul.f32 %v272, %v294
        %vm296 = vcmp.eq.f32.partialorder %v272, inf
        %v297 = vsel %vm296, %v272, %v295
        %vm298 = vcmp.eq.f32.partialorder %v272, 0.0
        %v299 = vand.u32 %v272, 2147483648
        %v300 = vsel %vm298, %v299, %v297
        %v301 = vsub.f32 %v279, %v293
        %v302 = vsub.f32 %v286, %v300
        %v303 = vmul.f32 %v301, 33.333332
        %v304 = vmul.f32 %v302, 33.333332
        %v305 = vmul.f32 %v303, %v303
        %v306 = vmul.f32 %v304, %v304
        %v307 = vsub.f32 1.0, %v305
        %v308 = vsub.f32 1.0, %v306
        %v309 = vmax.f32 %v307, 0.0
        %v310 = vmax.f32 %v308, 0.0
        %311 = vst [vmem:[#allocation2] sm:$0xff] %v309
        %312 = vst [vmem:[#allocation2 + $0x8] sm:$0xff] %v310
        %v313 = vlaneseq
        %v314 = vshrl.u32 %v313, 7
        %v315 = vsub.s32 1, %v314
        %v316 = vrot.slane %v199, %v315
        %v317 = vsub.f32 %v316, %v199
        %v318 = vsub.f32 %v316, %v200
        %v319 = vmul.f32 %v317, %v317
        %v320 = vmul.f32 %v318, %v318
        %v321 = vlaneseq
        %v322 = vshrl.u32 %v321, 7
        %v323 = vsub.s32 1, %v322
        %v324 = vrot.slane %v201, %v323
        %v325 = vsub.f32 %v324, %v201
        %v326 = vsub.f32 %v324, %v202
        %v327 = vmul.f32 %v325, %v325
        %v328 = vmul.f32 %v326, %v326
        %v329 = vadd.f32 %v319, %v327
        %v330 = vadd.f32 %v320, %v328
        %v331 = vlaneseq
        %v332 = vshrl.u32 %v331, 7
        %v333 = vsub.s32 1, %v332
        %v334 = vrot.slane %v203, %v333
        %v335 = vsub.f32 %v334, %v203
        %v336 = vsub.f32 %v334, %v204
        %v337 = vmul.f32 %v335, %v335
        %v338 = vmul.f32 %v336, %v336
        %v339 = vadd.f32 %v329, %v337
        %v340 = vadd.f32 %v330, %v338
        %v341 = vlaneseq
        %v342 = vshrl.u32 %v341, 7
        %v343 = vsub.s32 1, %v342
        %v344 = vrot.slane %v211, %v343
        %v345 = vsub.f32 %v344, %v211
        %v346 = vsub.f32 %v344, %v212
        %v347 = vmul.f32 %v345, %v345
        %v348 = vmul.f32 %v346, %v346
        %v349 = vlaneseq
        %v350 = vshrl.u32 %v349, 7
        %v351 = vsub.s32 1, %v350
        %v352 = vrot.slane %v213, %v351
        %v353 = vsub.f32 %v352, %v213
        %v354 = vsub.f32 %v352, %v214
        %v355 = vmul.f32 %v353, %v353
        %v356 = vmul.f32 %v354, %v354
        %v357 = vadd.f32 %v347, %v355
        %v358 = vadd.f32 %v348, %v356
        %v359 = vlaneseq
        %v360 = vshrl.u32 %v359, 7
        %v361 = vsub.s32 1, %v360
        %v362 = vrot.slane %v215, %v361
        %v363 = vsub.f32 %v362, %v215
        %v364 = vsub.f32 %v362, %v216
        %v365 = vmul.f32 %v363, %v363
        %v366 = vmul.f32 %v364, %v364
        %v367 = vadd.f32 %v357, %v365
        %v368 = vadd.f32 %v358, %v366
        %v369 = vrsqrt.pop %v339
        %v370 = vmul.f32 %v339, %v369
        %vm371 = vcmp.eq.f32.partialorder %v339, inf
        %v372 = vsel %vm371, %v339, %v370
        %vm373 = vcmp.eq.f32.partialorder %v339, 0.0
        %v374 = vand.u32 %v339, 2147483648
        %v375 = vsel %vm373, %v374, %v372
        %v376 = vrsqrt.pop %v340
        %v377 = vmul.f32 %v340, %v376
        %vm378 = vcmp.eq.f32.partialorder %v340, inf
        %v379 = vsel %vm378, %v340, %v377
        %vm380 = vcmp.eq.f32.partialorder %v340, 0.0
        %v381 = vand.u32 %v340, 2147483648
        %v382 = vsel %vm380, %v381, %v379
        %v383 = vrsqrt.pop %v367
        %v384 = vmul.f32 %v367, %v383
        %vm385 = vcmp.eq.f32.partialorder %v367, inf
        %v386 = vsel %vm385, %v367, %v384
        %vm387 = vcmp.eq.f32.partialorder %v367, 0.0
        %v388 = vand.u32 %v367, 2147483648
        %v389 = vsel %vm387, %v388, %v386
        %v390 = vrsqrt.pop %v368
        %v391 = vmul.f32 %v368, %v390
        %vm392 = vcmp.eq.f32.partialorder %v368, inf
        %v393 = vsel %vm392, %v368, %v391
        %vm394 = vcmp.eq.f32.partialorder %v368, 0.0
        %v395 = vand.u32 %v368, 2147483648
        %v396 = vsel %vm394, %v395, %v393
        %v397 = vsub.f32 %v375, %v389
        %v398 = vsub.f32 %v382, %v396
        %v399 = vmul.f32 %v397, 33.333332
        %v400 = vmul.f32 %v398, 33.333332
        %v401 = vmul.f32 %v399, %v399
        %v402 = vmul.f32 %v400, %v400
        %v403 = vsub.f32 1.0, %v401
        %v404 = vsub.f32 1.0, %v402
        %v405 = vmax.f32 %v403, 0.0
        %v406 = vmax.f32 %v404, 0.0
        %s407 = scalar_lea.vmem [#allocation2], 16
        %408 = vst [vmem:[%s407] sm:$0xff] %v405
        %409 = vst [vmem:[%s407 + $0x8] sm:$0xff] %v406
        %v410 = vadd.f32 %v309, %v405
        %v411 = vadd.f32 %v310, %v406
        %v412 = vlaneseq
        %v413 = vshrl.u32 %v412, 7
        %v414 = vsub.s32 2, %v413
        %v415 = vrot.slane %v199, %v414
        %v416 = vsub.f32 %v415, %v199
        %v417 = vsub.f32 %v415, %v200
        %v418 = vmul.f32 %v416, %v416
        %v419 = vmul.f32 %v417, %v417
        %v420 = vlaneseq
        %v421 = vshrl.u32 %v420, 7
        %v422 = vsub.s32 2, %v421
        %v423 = vrot.slane %v201, %v422
        %v424 = vsub.f32 %v423, %v201
        %v425 = vsub.f32 %v423, %v202
        %v426 = vmul.f32 %v424, %v424
        %v427 = vmul.f32 %v425, %v425
        %v428 = vadd.f32 %v418, %v426
        %v429 = vadd.f32 %v419, %v427
        %v430 = vlaneseq
        %v431 = vshrl.u32 %v430, 7
        %v432 = vsub.s32 2, %v431
        %v433 = vrot.slane %v203, %v432
        %v434 = vsub.f32 %v433, %v203
        %v435 = vsub.f32 %v433, %v204
        %v436 = vmul.f32 %v434, %v434
        %v437 = vmul.f32 %v435, %v435
        %v438 = vadd.f32 %v428, %v436
        %v439 = vadd.f32 %v429, %v437
        %v440 = vlaneseq
        %v441 = vshrl.u32 %v440, 7
        %v442 = vsub.s32 2, %v441
        %v443 = vrot.slane %v211, %v442
        %v444 = vsub.f32 %v443, %v211
        %v445 = vsub.f32 %v443, %v212
        %v446 = vmul.f32 %v444, %v444
        %v447 = vmul.f32 %v445, %v445
        %v448 = vlaneseq
        %v449 = vshrl.u32 %v448, 7
        %v450 = vsub.s32 2, %v449
        %v451 = vrot.slane %v213, %v450
        %v452 = vsub.f32 %v451, %v213
        %v453 = vsub.f32 %v451, %v214
        %v454 = vmul.f32 %v452, %v452
        %v455 = vmul.f32 %v453, %v453
        %v456 = vadd.f32 %v446, %v454
        %v457 = vadd.f32 %v447, %v455
        %v458 = vlaneseq
        %v459 = vshrl.u32 %v458, 7
        %v460 = vsub.s32 2, %v459
        %v461 = vrot.slane %v215, %v460
        %v462 = vsub.f32 %v461, %v215
        %v463 = vsub.f32 %v461, %v216
        %v464 = vmul.f32 %v462, %v462
        %v465 = vmul.f32 %v463, %v463
        %v466 = vadd.f32 %v456, %v464
        %v467 = vadd.f32 %v457, %v465
        %v468 = vrsqrt.pop %v438
        %v469 = vmul.f32 %v438, %v468
        %vm470 = vcmp.eq.f32.partialorder %v438, inf
        %v471 = vsel %vm470, %v438, %v469
        %vm472 = vcmp.eq.f32.partialorder %v438, 0.0
        %v473 = vand.u32 %v438, 2147483648
        %v474 = vsel %vm472, %v473, %v471
        %v475 = vrsqrt.pop %v439
        %v476 = vmul.f32 %v439, %v475
        %vm477 = vcmp.eq.f32.partialorder %v439, inf
        %v478 = vsel %vm477, %v439, %v476
        %vm479 = vcmp.eq.f32.partialorder %v439, 0.0
        %v480 = vand.u32 %v439, 2147483648
        %v481 = vsel %vm479, %v480, %v478
        %v482 = vrsqrt.pop %v466
        %v483 = vmul.f32 %v466, %v482
        %vm484 = vcmp.eq.f32.partialorder %v466, inf
        %v485 = vsel %vm484, %v466, %v483
        %vm486 = vcmp.eq.f32.partialorder %v466, 0.0
        %v487 = vand.u32 %v466, 2147483648
        %v488 = vsel %vm486, %v487, %v485
        %v489 = vrsqrt.pop %v467
        %v490 = vmul.f32 %v467, %v489
        %vm491 = vcmp.eq.f32.partialorder %v467, inf
        %v492 = vsel %vm491, %v467, %v490
        %vm493 = vcmp.eq.f32.partialorder %v467, 0.0
        %v494 = vand.u32 %v467, 2147483648
        %v495 = vsel %vm493, %v494, %v492
        %v496 = vsub.f32 %v474, %v488
        %v497 = vsub.f32 %v481, %v495
        %v498 = vmul.f32 %v496, 33.333332
        %v499 = vmul.f32 %v497, 33.333332
        %v500 = vmul.f32 %v498, %v498
        %v501 = vmul.f32 %v499, %v499
        %v502 = vsub.f32 1.0, %v500
        %v503 = vsub.f32 1.0, %v501
        %v504 = vmax.f32 %v502, 0.0
        %v505 = vmax.f32 %v503, 0.0
        %s506 = scalar_lea.vmem [#allocation2], 32
        %507 = vst [vmem:[%s506] sm:$0xff] %v504
        %508 = vst [vmem:[%s506 + $0x8] sm:$0xff] %v505
        %v509 = vadd.f32 %v410, %v504
        %v510 = vadd.f32 %v411, %v505
        %v511 = vlaneseq
        %v512 = vshrl.u32 %v511, 7
        %v513 = vsub.s32 3, %v512
        %v514 = vrot.slane %v199, %v513
        %v515 = vsub.f32 %v514, %v199
        %v516 = vsub.f32 %v514, %v200
        %v517 = vmul.f32 %v515, %v515
        %v518 = vmul.f32 %v516, %v516
        %v519 = vlaneseq
        %v520 = vshrl.u32 %v519, 7
        %v521 = vsub.s32 3, %v520
        %v522 = vrot.slane %v201, %v521
        %v523 = vsub.f32 %v522, %v201
        %v524 = vsub.f32 %v522, %v202
        %v525 = vmul.f32 %v523, %v523
        %v526 = vmul.f32 %v524, %v524
        %v527 = vadd.f32 %v517, %v525
        %v528 = vadd.f32 %v518, %v526
        %v529 = vlaneseq
        %v530 = vshrl.u32 %v529, 7
        %v531 = vsub.s32 3, %v530
        %v532 = vrot.slane %v203, %v531
        %v533 = vsub.f32 %v532, %v203
        %v534 = vsub.f32 %v532, %v204
        %v535 = vmul.f32 %v533, %v533
        %v536 = vmul.f32 %v534, %v534
        %v537 = vadd.f32 %v527, %v535
        %v538 = vadd.f32 %v528, %v536
        %v539 = vlaneseq
        %v540 = vshrl.u32 %v539, 7
        %v541 = vsub.s32 3, %v540
        %v542 = vrot.slane %v211, %v541
        %v543 = vsub.f32 %v542, %v211
        %v544 = vsub.f32 %v542, %v212
        %v545 = vmul.f32 %v543, %v543
        %v546 = vmul.f32 %v544, %v544
        %v547 = vlaneseq
        %v548 = vshrl.u32 %v547, 7
        %v549 = vsub.s32 3, %v548
        %v550 = vrot.slane %v213, %v549
        %v551 = vsub.f32 %v550, %v213
        %v552 = vsub.f32 %v550, %v214
        %v553 = vmul.f32 %v551, %v551
        %v554 = vmul.f32 %v552, %v552
        %v555 = vadd.f32 %v545, %v553
        %v556 = vadd.f32 %v546, %v554
        %v557 = vlaneseq
        %v558 = vshrl.u32 %v557, 7
        %v559 = vsub.s32 3, %v558
        %v560 = vrot.slane %v215, %v559
        %v561 = vsub.f32 %v560, %v215
        %v562 = vsub.f32 %v560, %v216
        %v563 = vmul.f32 %v561, %v561
        %v564 = vmul.f32 %v562, %v562
        %v565 = vadd.f32 %v555, %v563
        %v566 = vadd.f32 %v556, %v564
        %v567 = vrsqrt.pop %v537
        %v568 = vmul.f32 %v537, %v567
        %vm569 = vcmp.eq.f32.partialorder %v537, inf
        %v570 = vsel %vm569, %v537, %v568
        %vm571 = vcmp.eq.f32.partialorder %v537, 0.0
        %v572 = vand.u32 %v537, 2147483648
        %v573 = vsel %vm571, %v572, %v570
        %v574 = vrsqrt.pop %v538
        %v575 = vmul.f32 %v538, %v574
        %vm576 = vcmp.eq.f32.partialorder %v538, inf
        %v577 = vsel %vm576, %v538, %v575
        %vm578 = vcmp.eq.f32.partialorder %v538, 0.0
        %v579 = vand.u32 %v538, 2147483648
        %v580 = vsel %vm578, %v579, %v577
        %v581 = vrsqrt.pop %v565
        %v582 = vmul.f32 %v565, %v581
        %vm583 = vcmp.eq.f32.partialorder %v565, inf
        %v584 = vsel %vm583, %v565, %v582
        %vm585 = vcmp.eq.f32.partialorder %v565, 0.0
        %v586 = vand.u32 %v565, 2147483648
        %v587 = vsel %vm585, %v586, %v584
        %v588 = vrsqrt.pop %v566
        %v589 = vmul.f32 %v566, %v588
        %vm590 = vcmp.eq.f32.partialorder %v566, inf
        %v591 = vsel %vm590, %v566, %v589
        %vm592 = vcmp.eq.f32.partialorder %v566, 0.0
        %v593 = vand.u32 %v566, 2147483648
        %v594 = vsel %vm592, %v593, %v591
        %v595 = vsub.f32 %v573, %v587
        %v596 = vsub.f32 %v580, %v594
        %v597 = vmul.f32 %v595, 33.333332
        %v598 = vmul.f32 %v596, 33.333332
        %v599 = vmul.f32 %v597, %v597
        %v600 = vmul.f32 %v598, %v598
        %v601 = vsub.f32 1.0, %v599
        %v602 = vsub.f32 1.0, %v600
        %v603 = vmax.f32 %v601, 0.0
        %v604 = vmax.f32 %v602, 0.0
        %s605 = scalar_lea.vmem [#allocation2], 48
        %606 = vst [vmem:[%s605] sm:$0xff] %v603
        %607 = vst [vmem:[%s605 + $0x8] sm:$0xff] %v604
        %v608 = vadd.f32 %v509, %v603
        %v609 = vadd.f32 %v510, %v604
        %v610 = vlaneseq
        %v611 = vshrl.u32 %v610, 7
        %v612 = vsub.s32 4, %v611
        %v613 = vrot.slane %v199, %v612
        %v614 = vsub.f32 %v613, %v199
        %v615 = vsub.f32 %v613, %v200
        %v616 = vmul.f32 %v614, %v614
        %v617 = vmul.f32 %v615, %v615
        %v618 = vlaneseq
        %v619 = vshrl.u32 %v618, 7
        %v620 = vsub.s32 4, %v619
        %v621 = vrot.slane %v201, %v620
        %v622 = vsub.f32 %v621, %v201
        %v623 = vsub.f32 %v621, %v202
        %v624 = vmul.f32 %v622, %v622
        %v625 = vmul.f32 %v623, %v623
        %v626 = vadd.f32 %v616, %v624
        %v627 = vadd.f32 %v617, %v625
        %v628 = vlaneseq
        %v629 = vshrl.u32 %v628, 7
        %v630 = vsub.s32 4, %v629
        %v631 = vrot.slane %v203, %v630
        %v632 = vsub.f32 %v631, %v203
        %v633 = vsub.f32 %v631, %v204
        %v634 = vmul.f32 %v632, %v632
        %v635 = vmul.f32 %v633, %v633
        %v636 = vadd.f32 %v626, %v634
        %v637 = vadd.f32 %v627, %v635
        %v638 = vlaneseq
        %v639 = vshrl.u32 %v638, 7
        %v640 = vsub.s32 4, %v639
        %v641 = vrot.slane %v211, %v640
        %v642 = vsub.f32 %v641, %v211
        %v643 = vsub.f32 %v641, %v212
        %v644 = vmul.f32 %v642, %v642
        %v645 = vmul.f32 %v643, %v643
        %v646 = vlaneseq
        %v647 = vshrl.u32 %v646, 7
        %v648 = vsub.s32 4, %v647
        %v649 = vrot.slane %v213, %v648
        %v650 = vsub.f32 %v649, %v213
        %v651 = vsub.f32 %v649, %v214
        %v652 = vmul.f32 %v650, %v650
        %v653 = vmul.f32 %v651, %v651
        %v654 = vadd.f32 %v644, %v652
        %v655 = vadd.f32 %v645, %v653
        %v656 = vlaneseq
        %v657 = vshrl.u32 %v656, 7
        %v658 = vsub.s32 4, %v657
        %v659 = vrot.slane %v215, %v658
        %v660 = vsub.f32 %v659, %v215
        %v661 = vsub.f32 %v659, %v216
        %v662 = vmul.f32 %v660, %v660
        %v663 = vmul.f32 %v661, %v661
        %v664 = vadd.f32 %v654, %v662
        %v665 = vadd.f32 %v655, %v663
        %v666 = vrsqrt.pop %v636
        %v667 = vmul.f32 %v636, %v666
        %vm668 = vcmp.eq.f32.partialorder %v636, inf
        %v669 = vsel %vm668, %v636, %v667
        %vm670 = vcmp.eq.f32.partialorder %v636, 0.0
        %v671 = vand.u32 %v636, 2147483648
        %v672 = vsel %vm670, %v671, %v669
        %v673 = vrsqrt.pop %v637
        %v674 = vmul.f32 %v637, %v673
        %vm675 = vcmp.eq.f32.partialorder %v637, inf
        %v676 = vsel %vm675, %v637, %v674
        %vm677 = vcmp.eq.f32.partialorder %v637, 0.0
        %v678 = vand.u32 %v637, 2147483648
        %v679 = vsel %vm677, %v678, %v676
        %v680 = vrsqrt.pop %v664
        %v681 = vmul.f32 %v664, %v680
        %vm682 = vcmp.eq.f32.partialorder %v664, inf
        %v683 = vsel %vm682, %v664, %v681
        %vm684 = vcmp.eq.f32.partialorder %v664, 0.0
        %v685 = vand.u32 %v664, 2147483648
        %v686 = vsel %vm684, %v685, %v683
        %v687 = vrsqrt.pop %v665
        %v688 = vmul.f32 %v665, %v687
        %vm689 = vcmp.eq.f32.partialorder %v665, inf
        %v690 = vsel %vm689, %v665, %v688
        %vm691 = vcmp.eq.f32.partialorder %v665, 0.0
        %v692 = vand.u32 %v665, 2147483648
        %v693 = vsel %vm691, %v692, %v690
        %v694 = vsub.f32 %v672, %v686
        %v695 = vsub.f32 %v679, %v693
        %v696 = vmul.f32 %v694, 33.333332
        %v697 = vmul.f32 %v695, 33.333332
        %v698 = vmul.f32 %v696, %v696
        %v699 = vmul.f32 %v697, %v697
        %v700 = vsub.f32 1.0, %v698
        %v701 = vsub.f32 1.0, %v699
        %v702 = vmax.f32 %v700, 0.0
        %v703 = vmax.f32 %v701, 0.0
        %s704 = scalar_lea.vmem [#allocation2], 64
        %705 = vst [vmem:[%s704] sm:$0xff] %v702
        %706 = vst [vmem:[%s704 + $0x8] sm:$0xff] %v703
        %v707 = vadd.f32 %v608, %v702
        %v708 = vadd.f32 %v609, %v703
        %v709 = vlaneseq
        %v710 = vshrl.u32 %v709, 7
        %v711 = vsub.s32 5, %v710
        %v712 = vrot.slane %v199, %v711
        %v713 = vsub.f32 %v712, %v199
        %v714 = vsub.f32 %v712, %v200
        %v715 = vmul.f32 %v713, %v713
        %v716 = vmul.f32 %v714, %v714
        %v717 = vlaneseq
        %v718 = vshrl.u32 %v717, 7
        %v719 = vsub.s32 5, %v718
        %v720 = vrot.slane %v201, %v719
        %v721 = vsub.f32 %v720, %v201
        %v722 = vsub.f32 %v720, %v202
        %v723 = vmul.f32 %v721, %v721
        %v724 = vmul.f32 %v722, %v722
        %v725 = vadd.f32 %v715, %v723
        %v726 = vadd.f32 %v716, %v724
        %v727 = vlaneseq
        %v728 = vshrl.u32 %v727, 7
        %v729 = vsub.s32 5, %v728
        %v730 = vrot.slane %v203, %v729
        %v731 = vsub.f32 %v730, %v203
        %v732 = vsub.f32 %v730, %v204
        %v733 = vmul.f32 %v731, %v731
        %v734 = vmul.f32 %v732, %v732
        %v735 = vadd.f32 %v725, %v733
        %v736 = vadd.f32 %v726, %v734
        %v737 = vlaneseq
        %v738 = vshrl.u32 %v737, 7
        %v739 = vsub.s32 5, %v738
        %v740 = vrot.slane %v211, %v739
        %v741 = vsub.f32 %v740, %v211
        %v742 = vsub.f32 %v740, %v212
        %v743 = vmul.f32 %v741, %v741
        %v744 = vmul.f32 %v742, %v742
        %v745 = vlaneseq
        %v746 = vshrl.u32 %v745, 7
        %v747 = vsub.s32 5, %v746
        %v748 = vrot.slane %v213, %v747
        %v749 = vsub.f32 %v748, %v213
        %v750 = vsub.f32 %v748, %v214
        %v751 = vmul.f32 %v749, %v749
        %v752 = vmul.f32 %v750, %v750
        %v753 = vadd.f32 %v743, %v751
        %v754 = vadd.f32 %v744, %v752
        %v755 = vlaneseq
        %v756 = vshrl.u32 %v755, 7
        %v757 = vsub.s32 5, %v756
        %v758 = vrot.slane %v215, %v757
        %v759 = vsub.f32 %v758, %v215
        %v760 = vsub.f32 %v758, %v216
        %v761 = vmul.f32 %v759, %v759
        %v762 = vmul.f32 %v760, %v760
        %v763 = vadd.f32 %v753, %v761
        %v764 = vadd.f32 %v754, %v762
        %v765 = vrsqrt.pop %v735
        %v766 = vmul.f32 %v735, %v765
        %vm767 = vcmp.eq.f32.partialorder %v735, inf
        %v768 = vsel %vm767, %v735, %v766
        %vm769 = vcmp.eq.f32.partialorder %v735, 0.0
        %v770 = vand.u32 %v735, 2147483648
        %v771 = vsel %vm769, %v770, %v768
        %v772 = vrsqrt.pop %v736
        %v773 = vmul.f32 %v736, %v772
        %vm774 = vcmp.eq.f32.partialorder %v736, inf
        %v775 = vsel %vm774, %v736, %v773
        %vm776 = vcmp.eq.f32.partialorder %v736, 0.0
        %v777 = vand.u32 %v736, 2147483648
        %v778 = vsel %vm776, %v777, %v775
        %v779 = vrsqrt.pop %v763
        %v780 = vmul.f32 %v763, %v779
        %vm781 = vcmp.eq.f32.partialorder %v763, inf
        %v782 = vsel %vm781, %v763, %v780
        %vm783 = vcmp.eq.f32.partialorder %v763, 0.0
        %v784 = vand.u32 %v763, 2147483648
        %v785 = vsel %vm783, %v784, %v782
        %v786 = vrsqrt.pop %v764
        %v787 = vmul.f32 %v764, %v786
        %vm788 = vcmp.eq.f32.partialorder %v764, inf
        %v789 = vsel %vm788, %v764, %v787
        %vm790 = vcmp.eq.f32.partialorder %v764, 0.0
        %v791 = vand.u32 %v764, 2147483648
        %v792 = vsel %vm790, %v791, %v789
        %v793 = vsub.f32 %v771, %v785
        %v794 = vsub.f32 %v778, %v792
        %v795 = vmul.f32 %v793, 33.333332
        %v796 = vmul.f32 %v794, 33.333332
        %v797 = vmul.f32 %v795, %v795
        %v798 = vmul.f32 %v796, %v796
        %v799 = vsub.f32 1.0, %v797
        %v800 = vsub.f32 1.0, %v798
        %v801 = vmax.f32 %v799, 0.0
        %v802 = vmax.f32 %v800, 0.0
        %s803 = scalar_lea.vmem [#allocation2], 80
        %804 = vst [vmem:[%s803] sm:$0xff] %v801
        %805 = vst [vmem:[%s803 + $0x8] sm:$0xff] %v802
        %v806 = vadd.f32 %v707, %v801
        %v807 = vadd.f32 %v708, %v802
        %v808 = vlaneseq
        %v809 = vshrl.u32 %v808, 7
        %v810 = vsub.s32 6, %v809
        %v811 = vrot.slane %v199, %v810
        %v812 = vsub.f32 %v811, %v199
        %v813 = vsub.f32 %v811, %v200
        %v814 = vmul.f32 %v812, %v812
        %v815 = vmul.f32 %v813, %v813
        %v816 = vlaneseq
        %v817 = vshrl.u32 %v816, 7
        %v818 = vsub.s32 6, %v817
        %v819 = vrot.slane %v201, %v818
        %v820 = vsub.f32 %v819, %v201
        %v821 = vsub.f32 %v819, %v202
        %v822 = vmul.f32 %v820, %v820
        %v823 = vmul.f32 %v821, %v821
        %v824 = vadd.f32 %v814, %v822
        %v825 = vadd.f32 %v815, %v823
        %v826 = vlaneseq
        %v827 = vshrl.u32 %v826, 7
        %v828 = vsub.s32 6, %v827
        %v829 = vrot.slane %v203, %v828
        %v830 = vsub.f32 %v829, %v203
        %v831 = vsub.f32 %v829, %v204
        %v832 = vmul.f32 %v830, %v830
        %v833 = vmul.f32 %v831, %v831
        %v834 = vadd.f32 %v824, %v832
        %v835 = vadd.f32 %v825, %v833
        %v836 = vlaneseq
        %v837 = vshrl.u32 %v836, 7
        %v838 = vsub.s32 6, %v837
        %v839 = vrot.slane %v211, %v838
        %v840 = vsub.f32 %v839, %v211
        %v841 = vsub.f32 %v839, %v212
        %v842 = vmul.f32 %v840, %v840
        %v843 = vmul.f32 %v841, %v841
        %v844 = vlaneseq
        %v845 = vshrl.u32 %v844, 7
        %v846 = vsub.s32 6, %v845
        %v847 = vrot.slane %v213, %v846
        %v848 = vsub.f32 %v847, %v213
        %v849 = vsub.f32 %v847, %v214
        %v850 = vmul.f32 %v848, %v848
        %v851 = vmul.f32 %v849, %v849
        %v852 = vadd.f32 %v842, %v850
        %v853 = vadd.f32 %v843, %v851
        %v854 = vlaneseq
        %v855 = vshrl.u32 %v854, 7
        %v856 = vsub.s32 6, %v855
        %v857 = vrot.slane %v215, %v856
        %v858 = vsub.f32 %v857, %v215
        %v859 = vsub.f32 %v857, %v216
        %v860 = vmul.f32 %v858, %v858
        %v861 = vmul.f32 %v859, %v859
        %v862 = vadd.f32 %v852, %v860
        %v863 = vadd.f32 %v853, %v861
        %v864 = vrsqrt.pop %v834
        %v865 = vmul.f32 %v834, %v864
        %vm866 = vcmp.eq.f32.partialorder %v834, inf
        %v867 = vsel %vm866, %v834, %v865
        %vm868 = vcmp.eq.f32.partialorder %v834, 0.0
        %v869 = vand.u32 %v834, 2147483648
        %v870 = vsel %vm868, %v869, %v867
        %v871 = vrsqrt.pop %v835
        %v872 = vmul.f32 %v835, %v871
        %vm873 = vcmp.eq.f32.partialorder %v835, inf
        %v874 = vsel %vm873, %v835, %v872
        %vm875 = vcmp.eq.f32.partialorder %v835, 0.0
        %v876 = vand.u32 %v835, 2147483648
        %v877 = vsel %vm875, %v876, %v874
        %v878 = vrsqrt.pop %v862
        %v879 = vmul.f32 %v862, %v878
        %vm880 = vcmp.eq.f32.partialorder %v862, inf
        %v881 = vsel %vm880, %v862, %v879
        %vm882 = vcmp.eq.f32.partialorder %v862, 0.0
        %v883 = vand.u32 %v862, 2147483648
        %v884 = vsel %vm882, %v883, %v881
        %v885 = vrsqrt.pop %v863
        %v886 = vmul.f32 %v863, %v885
        %vm887 = vcmp.eq.f32.partialorder %v863, inf
        %v888 = vsel %vm887, %v863, %v886
        %vm889 = vcmp.eq.f32.partialorder %v863, 0.0
        %v890 = vand.u32 %v863, 2147483648
        %v891 = vsel %vm889, %v890, %v888
        %v892 = vsub.f32 %v870, %v884
        %v893 = vsub.f32 %v877, %v891
        %v894 = vmul.f32 %v892, 33.333332
        %v895 = vmul.f32 %v893, 33.333332
        %v896 = vmul.f32 %v894, %v894
        %v897 = vmul.f32 %v895, %v895
        %v898 = vsub.f32 1.0, %v896
        %v899 = vsub.f32 1.0, %v897
        %v900 = vmax.f32 %v898, 0.0
        %v901 = vmax.f32 %v899, 0.0
        %s902 = scalar_lea.vmem [#allocation2], 96
        %903 = vst [vmem:[%s902] sm:$0xff] %v900
        %904 = vst [vmem:[%s902 + $0x8] sm:$0xff] %v901
        %v905 = vadd.f32 %v806, %v900
        %v906 = vadd.f32 %v807, %v901
        %v907 = vlaneseq
        %v908 = vshrl.u32 %v907, 7
        %v909 = vsub.s32 7, %v908
        %v910 = vrot.slane %v199, %v909
        %v911 = vsub.f32 %v910, %v199
        %v912 = vsub.f32 %v910, %v200
        %v913 = vmul.f32 %v911, %v911
        %v914 = vmul.f32 %v912, %v912
        %v915 = vlaneseq
        %v916 = vshrl.u32 %v915, 7
        %v917 = vsub.s32 7, %v916
        %v918 = vrot.slane %v201, %v917
        %v919 = vsub.f32 %v918, %v201
        %v920 = vsub.f32 %v918, %v202
        %v921 = vmul.f32 %v919, %v919
        %v922 = vmul.f32 %v920, %v920
        %v923 = vadd.f32 %v913, %v921
        %v924 = vadd.f32 %v914, %v922
        %v925 = vlaneseq
        %v926 = vshrl.u32 %v925, 7
        %v927 = vsub.s32 7, %v926
        %v928 = vrot.slane %v203, %v927
        %v929 = vsub.f32 %v928, %v203
        %v930 = vsub.f32 %v928, %v204
        %v931 = vmul.f32 %v929, %v929
        %v932 = vmul.f32 %v930, %v930
        %v933 = vadd.f32 %v923, %v931
        %v934 = vadd.f32 %v924, %v932
        %v935 = vlaneseq
        %v936 = vshrl.u32 %v935, 7
        %v937 = vsub.s32 7, %v936
        %v938 = vrot.slane %v211, %v937
        %v939 = vsub.f32 %v938, %v211
        %v940 = vsub.f32 %v938, %v212
        %v941 = vmul.f32 %v939, %v939
        %v942 = vmul.f32 %v940, %v940
        %v943 = vlaneseq
        %v944 = vshrl.u32 %v943, 7
        %v945 = vsub.s32 7, %v944
        %v946 = vrot.slane %v213, %v945
        %v947 = vsub.f32 %v946, %v213
        %v948 = vsub.f32 %v946, %v214
        %v949 = vmul.f32 %v947, %v947
        %v950 = vmul.f32 %v948, %v948
        %v951 = vadd.f32 %v941, %v949
        %v952 = vadd.f32 %v942, %v950
        %v953 = vlaneseq
        %v954 = vshrl.u32 %v953, 7
        %v955 = vsub.s32 7, %v954
        %v956 = vrot.slane %v215, %v955
        %v957 = vsub.f32 %v956, %v215
        %v958 = vsub.f32 %v956, %v216
        %v959 = vmul.f32 %v957, %v957
        %v960 = vmul.f32 %v958, %v958
        %v961 = vadd.f32 %v951, %v959
        %v962 = vadd.f32 %v952, %v960
        %v963 = vrsqrt.pop %v933
        %v964 = vmul.f32 %v933, %v963
        %vm965 = vcmp.eq.f32.partialorder %v933, inf
        %v966 = vsel %vm965, %v933, %v964
        %vm967 = vcmp.eq.f32.partialorder %v933, 0.0
        %v968 = vand.u32 %v933, 2147483648
        %v969 = vsel %vm967, %v968, %v966
        %v970 = vrsqrt.pop %v934
        %v971 = vmul.f32 %v934, %v970
        %vm972 = vcmp.eq.f32.partialorder %v934, inf
        %v973 = vsel %vm972, %v934, %v971
        %vm974 = vcmp.eq.f32.partialorder %v934, 0.0
        %v975 = vand.u32 %v934, 2147483648
        %v976 = vsel %vm974, %v975, %v973
        %v977 = vrsqrt.pop %v961
        %v978 = vmul.f32 %v961, %v977
        %vm979 = vcmp.eq.f32.partialorder %v961, inf
        %v980 = vsel %vm979, %v961, %v978
        %vm981 = vcmp.eq.f32.partialorder %v961, 0.0
        %v982 = vand.u32 %v961, 2147483648
        %v983 = vsel %vm981, %v982, %v980
        %v984 = vrsqrt.pop %v962
        %v985 = vmul.f32 %v962, %v984
        %vm986 = vcmp.eq.f32.partialorder %v962, inf
        %v987 = vsel %vm986, %v962, %v985
        %vm988 = vcmp.eq.f32.partialorder %v962, 0.0
        %v989 = vand.u32 %v962, 2147483648
        %v990 = vsel %vm988, %v989, %v987
        %v991 = vsub.f32 %v969, %v983
        %v992 = vsub.f32 %v976, %v990
        %v993 = vmul.f32 %v991, 33.333332
        %v994 = vmul.f32 %v992, 33.333332
        %v995 = vmul.f32 %v993, %v993
        %v996 = vmul.f32 %v994, %v994
        %v997 = vsub.f32 1.0, %v995
        %v998 = vsub.f32 1.0, %v996
        %v999 = vmax.f32 %v997, 0.0
        %v1000 = vmax.f32 %v998, 0.0
        %s1001 = scalar_lea.vmem [#allocation2], 112
        %1002 = vst [vmem:[%s1001] sm:$0xff] %v999
        %1003 = vst [vmem:[%s1001 + $0x8] sm:$0xff] %v1000
        %v1004 = vadd.f32 %v905, %v999
        %v1005 = vadd.f32 %v906, %v1000
        %v1006 = vlaneseq
        %v1007 = vshrl.u32 %v1006, 7
        %v1008 = vsub.s32 0, %v1007
        %v1009 = vrot.slane %v200, %v1008
        %v1010 = vsub.f32 %v1009, %v199
        %v1011 = vsub.f32 %v1009, %v200
        %v1012 = vmul.f32 %v1010, %v1010
        %v1013 = vmul.f32 %v1011, %v1011
        %v1014 = vlaneseq
        %v1015 = vshrl.u32 %v1014, 7
        %v1016 = vsub.s32 0, %v1015
        %v1017 = vrot.slane %v202, %v1016
        %v1018 = vsub.f32 %v1017, %v201
        %v1019 = vsub.f32 %v1017, %v202
        %v1020 = vmul.f32 %v1018, %v1018
        %v1021 = vmul.f32 %v1019, %v1019
        %v1022 = vadd.f32 %v1012, %v1020
        %v1023 = vadd.f32 %v1013, %v1021
        %v1024 = vlaneseq
        %v1025 = vshrl.u32 %v1024, 7
        %v1026 = vsub.s32 0, %v1025
        %v1027 = vrot.slane %v204, %v1026
        %v1028 = vsub.f32 %v1027, %v203
        %v1029 = vsub.f32 %v1027, %v204
        %v1030 = vmul.f32 %v1028, %v1028
        %v1031 = vmul.f32 %v1029, %v1029
        %v1032 = vadd.f32 %v1022, %v1030
        %v1033 = vadd.f32 %v1023, %v1031
        %v1034 = vlaneseq
        %v1035 = vshrl.u32 %v1034, 7
        %v1036 = vsub.s32 0, %v1035
        %v1037 = vrot.slane %v212, %v1036
        %v1038 = vsub.f32 %v1037, %v211
        %v1039 = vsub.f32 %v1037, %v212
        %v1040 = vmul.f32 %v1038, %v1038
        %v1041 = vmul.f32 %v1039, %v1039
        %v1042 = vlaneseq
        %v1043 = vshrl.u32 %v1042, 7
        %v1044 = vsub.s32 0, %v1043
        %v1045 = vrot.slane %v214, %v1044
        %v1046 = vsub.f32 %v1045, %v213
        %v1047 = vsub.f32 %v1045, %v214
        %v1048 = vmul.f32 %v1046, %v1046
        %v1049 = vmul.f32 %v1047, %v1047
        %v1050 = vadd.f32 %v1040, %v1048
        %v1051 = vadd.f32 %v1041, %v1049
        %v1052 = vlaneseq
        %v1053 = vshrl.u32 %v1052, 7
        %v1054 = vsub.s32 0, %v1053
        %v1055 = vrot.slane %v216, %v1054
        %v1056 = vsub.f32 %v1055, %v215
        %v1057 = vsub.f32 %v1055, %v216
        %v1058 = vmul.f32 %v1056, %v1056
        %v1059 = vmul.f32 %v1057, %v1057
        %v1060 = vadd.f32 %v1050, %v1058
        %v1061 = vadd.f32 %v1051, %v1059
        %v1062 = vrsqrt.pop %v1032
        %v1063 = vmul.f32 %v1032, %v1062
        %vm1064 = vcmp.eq.f32.partialorder %v1032, inf
        %v1065 = vsel %vm1064, %v1032, %v1063
        %vm1066 = vcmp.eq.f32.partialorder %v1032, 0.0
        %v1067 = vand.u32 %v1032, 2147483648
        %v1068 = vsel %vm1066, %v1067, %v1065
        %v1069 = vrsqrt.pop %v1033
        %v1070 = vmul.f32 %v1033, %v1069
        %vm1071 = vcmp.eq.f32.partialorder %v1033, inf
        %v1072 = vsel %vm1071, %v1033, %v1070
        %vm1073 = vcmp.eq.f32.partialorder %v1033, 0.0
        %v1074 = vand.u32 %v1033, 2147483648
        %v1075 = vsel %vm1073, %v1074, %v1072
        %v1076 = vrsqrt.pop %v1060
        %v1077 = vmul.f32 %v1060, %v1076
        %vm1078 = vcmp.eq.f32.partialorder %v1060, inf
        %v1079 = vsel %vm1078, %v1060, %v1077
        %vm1080 = vcmp.eq.f32.partialorder %v1060, 0.0
        %v1081 = vand.u32 %v1060, 2147483648
        %v1082 = vsel %vm1080, %v1081, %v1079
        %v1083 = vrsqrt.pop %v1061
        %v1084 = vmul.f32 %v1061, %v1083
        %vm1085 = vcmp.eq.f32.partialorder %v1061, inf
        %v1086 = vsel %vm1085, %v1061, %v1084
        %vm1087 = vcmp.eq.f32.partialorder %v1061, 0.0
        %v1088 = vand.u32 %v1061, 2147483648
        %v1089 = vsel %vm1087, %v1088, %v1086
        %v1090 = vsub.f32 %v1068, %v1082
        %v1091 = vsub.f32 %v1075, %v1089
        %v1092 = vmul.f32 %v1090, 33.333332
        %v1093 = vmul.f32 %v1091, 33.333332
        %v1094 = vmul.f32 %v1092, %v1092
        %v1095 = vmul.f32 %v1093, %v1093
        %v1096 = vsub.f32 1.0, %v1094
        %v1097 = vsub.f32 1.0, %v1095
        %v1098 = vmax.f32 %v1096, 0.0
        %v1099 = vmax.f32 %v1097, 0.0
        %s1100 = scalar_lea.vmem [#allocation2], 128
        %1101 = vst [vmem:[%s1100] sm:$0xff] %v1098
        %1102 = vst [vmem:[%s1100 + $0x8] sm:$0xff] %v1099
        %v1103 = vadd.f32 %v1004, %v1098
        %v1104 = vadd.f32 %v1005, %v1099
        %v1105 = vlaneseq
        %v1106 = vshrl.u32 %v1105, 7
        %v1107 = vsub.s32 1, %v1106
        %v1108 = vrot.slane %v200, %v1107
        %v1109 = vsub.f32 %v1108, %v199
        %v1110 = vsub.f32 %v1108, %v200
        %v1111 = vmul.f32 %v1109, %v1109
        %v1112 = vmul.f32 %v1110, %v1110
        %v1113 = vlaneseq
        %v1114 = vshrl.u32 %v1113, 7
        %v1115 = vsub.s32 1, %v1114
        %v1116 = vrot.slane %v202, %v1115
        %v1117 = vsub.f32 %v1116, %v201
        %v1118 = vsub.f32 %v1116, %v202
        %v1119 = vmul.f32 %v1117, %v1117
        %v1120 = vmul.f32 %v1118, %v1118
        %v1121 = vadd.f32 %v1111, %v1119
        %v1122 = vadd.f32 %v1112, %v1120
        %v1123 = vlaneseq
        %v1124 = vshrl.u32 %v1123, 7
        %v1125 = vsub.s32 1, %v1124
        %v1126 = vrot.slane %v204, %v1125
        %v1127 = vsub.f32 %v1126, %v203
        %v1128 = vsub.f32 %v1126, %v204
        %v1129 = vmul.f32 %v1127, %v1127
        %v1130 = vmul.f32 %v1128, %v1128
        %v1131 = vadd.f32 %v1121, %v1129
        %v1132 = vadd.f32 %v1122, %v1130
        %v1133 = vlaneseq
        %v1134 = vshrl.u32 %v1133, 7
        %v1135 = vsub.s32 1, %v1134
        %v1136 = vrot.slane %v212, %v1135
        %v1137 = vsub.f32 %v1136, %v211
        %v1138 = vsub.f32 %v1136, %v212
        %v1139 = vmul.f32 %v1137, %v1137
        %v1140 = vmul.f32 %v1138, %v1138
        %v1141 = vlaneseq
        %v1142 = vshrl.u32 %v1141, 7
        %v1143 = vsub.s32 1, %v1142
        %v1144 = vrot.slane %v214, %v1143
        %v1145 = vsub.f32 %v1144, %v213
        %v1146 = vsub.f32 %v1144, %v214
        %v1147 = vmul.f32 %v1145, %v1145
        %v1148 = vmul.f32 %v1146, %v1146
        %v1149 = vadd.f32 %v1139, %v1147
        %v1150 = vadd.f32 %v1140, %v1148
        %v1151 = vlaneseq
        %v1152 = vshrl.u32 %v1151, 7
        %v1153 = vsub.s32 1, %v1152
        %v1154 = vrot.slane %v216, %v1153
        %v1155 = vsub.f32 %v1154, %v215
        %v1156 = vsub.f32 %v1154, %v216
        %v1157 = vmul.f32 %v1155, %v1155
        %v1158 = vmul.f32 %v1156, %v1156
        %v1159 = vadd.f32 %v1149, %v1157
        %v1160 = vadd.f32 %v1150, %v1158
        %v1161 = vrsqrt.pop %v1131
        %v1162 = vmul.f32 %v1131, %v1161
        %vm1163 = vcmp.eq.f32.partialorder %v1131, inf
        %v1164 = vsel %vm1163, %v1131, %v1162
        %vm1165 = vcmp.eq.f32.partialorder %v1131, 0.0
        %v1166 = vand.u32 %v1131, 2147483648
        %v1167 = vsel %vm1165, %v1166, %v1164
        %v1168 = vrsqrt.pop %v1132
        %v1169 = vmul.f32 %v1132, %v1168
        %vm1170 = vcmp.eq.f32.partialorder %v1132, inf
        %v1171 = vsel %vm1170, %v1132, %v1169
        %vm1172 = vcmp.eq.f32.partialorder %v1132, 0.0
        %v1173 = vand.u32 %v1132, 2147483648
        %v1174 = vsel %vm1172, %v1173, %v1171
        %v1175 = vrsqrt.pop %v1159
        %v1176 = vmul.f32 %v1159, %v1175
        %vm1177 = vcmp.eq.f32.partialorder %v1159, inf
        %v1178 = vsel %vm1177, %v1159, %v1176
        %vm1179 = vcmp.eq.f32.partialorder %v1159, 0.0
        %v1180 = vand.u32 %v1159, 2147483648
        %v1181 = vsel %vm1179, %v1180, %v1178
        %v1182 = vrsqrt.pop %v1160
        %v1183 = vmul.f32 %v1160, %v1182
        %vm1184 = vcmp.eq.f32.partialorder %v1160, inf
        %v1185 = vsel %vm1184, %v1160, %v1183
        %vm1186 = vcmp.eq.f32.partialorder %v1160, 0.0
        %v1187 = vand.u32 %v1160, 2147483648
        %v1188 = vsel %vm1186, %v1187, %v1185
        %v1189 = vsub.f32 %v1167, %v1181
        %v1190 = vsub.f32 %v1174, %v1188
        %v1191 = vmul.f32 %v1189, 33.333332
        %v1192 = vmul.f32 %v1190, 33.333332
        %v1193 = vmul.f32 %v1191, %v1191
        %v1194 = vmul.f32 %v1192, %v1192
        %v1195 = vsub.f32 1.0, %v1193
        %v1196 = vsub.f32 1.0, %v1194
        %v1197 = vmax.f32 %v1195, 0.0
        %v1198 = vmax.f32 %v1196, 0.0
        %s1199 = scalar_lea.vmem [#allocation2], 144
        %1200 = vst [vmem:[%s1199] sm:$0xff] %v1197
        %1201 = vst [vmem:[%s1199 + $0x8] sm:$0xff] %v1198
        %v1202 = vadd.f32 %v1103, %v1197
        %v1203 = vadd.f32 %v1104, %v1198
        %v1204 = vlaneseq
        %v1205 = vshrl.u32 %v1204, 7
        %v1206 = vsub.s32 2, %v1205
        %v1207 = vrot.slane %v200, %v1206
        %v1208 = vsub.f32 %v1207, %v199
        %v1209 = vsub.f32 %v1207, %v200
        %v1210 = vmul.f32 %v1208, %v1208
        %v1211 = vmul.f32 %v1209, %v1209
        %v1212 = vlaneseq
        %v1213 = vshrl.u32 %v1212, 7
        %v1214 = vsub.s32 2, %v1213
        %v1215 = vrot.slane %v202, %v1214
        %v1216 = vsub.f32 %v1215, %v201
        %v1217 = vsub.f32 %v1215, %v202
        %v1218 = vmul.f32 %v1216, %v1216
        %v1219 = vmul.f32 %v1217, %v1217
        %v1220 = vadd.f32 %v1210, %v1218
        %v1221 = vadd.f32 %v1211, %v1219
        %v1222 = vlaneseq
        %v1223 = vshrl.u32 %v1222, 7
        %v1224 = vsub.s32 2, %v1223
        %v1225 = vrot.slane %v204, %v1224
        %v1226 = vsub.f32 %v1225, %v203
        %v1227 = vsub.f32 %v1225, %v204
        %v1228 = vmul.f32 %v1226, %v1226
        %v1229 = vmul.f32 %v1227, %v1227
        %v1230 = vadd.f32 %v1220, %v1228
        %v1231 = vadd.f32 %v1221, %v1229
        %v1232 = vlaneseq
        %v1233 = vshrl.u32 %v1232, 7
        %v1234 = vsub.s32 2, %v1233
        %v1235 = vrot.slane %v212, %v1234
        %v1236 = vsub.f32 %v1235, %v211
        %v1237 = vsub.f32 %v1235, %v212
        %v1238 = vmul.f32 %v1236, %v1236
        %v1239 = vmul.f32 %v1237, %v1237
        %v1240 = vlaneseq
        %v1241 = vshrl.u32 %v1240, 7
        %v1242 = vsub.s32 2, %v1241
        %v1243 = vrot.slane %v214, %v1242
        %v1244 = vsub.f32 %v1243, %v213
        %v1245 = vsub.f32 %v1243, %v214
        %v1246 = vmul.f32 %v1244, %v1244
        %v1247 = vmul.f32 %v1245, %v1245
        %v1248 = vadd.f32 %v1238, %v1246
        %v1249 = vadd.f32 %v1239, %v1247
        %v1250 = vlaneseq
        %v1251 = vshrl.u32 %v1250, 7
        %v1252 = vsub.s32 2, %v1251
        %v1253 = vrot.slane %v216, %v1252
        %v1254 = vsub.f32 %v1253, %v215
        %v1255 = vsub.f32 %v1253, %v216
        %v1256 = vmul.f32 %v1254, %v1254
        %v1257 = vmul.f32 %v1255, %v1255
        %v1258 = vadd.f32 %v1248, %v1256
        %v1259 = vadd.f32 %v1249, %v1257
        %v1260 = vrsqrt.pop %v1230
        %v1261 = vmul.f32 %v1230, %v1260
        %vm1262 = vcmp.eq.f32.partialorder %v1230, inf
        %v1263 = vsel %vm1262, %v1230, %v1261
        %vm1264 = vcmp.eq.f32.partialorder %v1230, 0.0
        %v1265 = vand.u32 %v1230, 2147483648
        %v1266 = vsel %vm1264, %v1265, %v1263
        %v1267 = vrsqrt.pop %v1231
        %v1268 = vmul.f32 %v1231, %v1267
        %vm1269 = vcmp.eq.f32.partialorder %v1231, inf
        %v1270 = vsel %vm1269, %v1231, %v1268
        %vm1271 = vcmp.eq.f32.partialorder %v1231, 0.0
        %v1272 = vand.u32 %v1231, 2147483648
        %v1273 = vsel %vm1271, %v1272, %v1270
        %v1274 = vrsqrt.pop %v1258
        %v1275 = vmul.f32 %v1258, %v1274
        %vm1276 = vcmp.eq.f32.partialorder %v1258, inf
        %v1277 = vsel %vm1276, %v1258, %v1275
        %vm1278 = vcmp.eq.f32.partialorder %v1258, 0.0
        %v1279 = vand.u32 %v1258, 2147483648
        %v1280 = vsel %vm1278, %v1279, %v1277
        %v1281 = vrsqrt.pop %v1259
        %v1282 = vmul.f32 %v1259, %v1281
        %vm1283 = vcmp.eq.f32.partialorder %v1259, inf
        %v1284 = vsel %vm1283, %v1259, %v1282
        %vm1285 = vcmp.eq.f32.partialorder %v1259, 0.0
        %v1286 = vand.u32 %v1259, 2147483648
        %v1287 = vsel %vm1285, %v1286, %v1284
        %v1288 = vsub.f32 %v1266, %v1280
        %v1289 = vsub.f32 %v1273, %v1287
        %v1290 = vmul.f32 %v1288, 33.333332
        %v1291 = vmul.f32 %v1289, 33.333332
        %v1292 = vmul.f32 %v1290, %v1290
        %v1293 = vmul.f32 %v1291, %v1291
        %v1294 = vsub.f32 1.0, %v1292
        %v1295 = vsub.f32 1.0, %v1293
        %v1296 = vmax.f32 %v1294, 0.0
        %v1297 = vmax.f32 %v1295, 0.0
        %s1298 = scalar_lea.vmem [#allocation2], 160
        %1299 = vst [vmem:[%s1298] sm:$0xff] %v1296
        %1300 = vst [vmem:[%s1298 + $0x8] sm:$0xff] %v1297
        %v1301 = vadd.f32 %v1202, %v1296
        %v1302 = vadd.f32 %v1203, %v1297
        %v1303 = vlaneseq
        %v1304 = vshrl.u32 %v1303, 7
        %v1305 = vsub.s32 3, %v1304
        %v1306 = vrot.slane %v200, %v1305
        %v1307 = vsub.f32 %v1306, %v199
        %v1308 = vsub.f32 %v1306, %v200
        %v1309 = vmul.f32 %v1307, %v1307
        %v1310 = vmul.f32 %v1308, %v1308
        %v1311 = vlaneseq
        %v1312 = vshrl.u32 %v1311, 7
        %v1313 = vsub.s32 3, %v1312
        %v1314 = vrot.slane %v202, %v1313
        %v1315 = vsub.f32 %v1314, %v201
        %v1316 = vsub.f32 %v1314, %v202
        %v1317 = vmul.f32 %v1315, %v1315
        %v1318 = vmul.f32 %v1316, %v1316
        %v1319 = vadd.f32 %v1309, %v1317
        %v1320 = vadd.f32 %v1310, %v1318
        %v1321 = vlaneseq
        %v1322 = vshrl.u32 %v1321, 7
        %v1323 = vsub.s32 3, %v1322
        %v1324 = vrot.slane %v204, %v1323
        %v1325 = vsub.f32 %v1324, %v203
        %v1326 = vsub.f32 %v1324, %v204
        %v1327 = vmul.f32 %v1325, %v1325
        %v1328 = vmul.f32 %v1326, %v1326
        %v1329 = vadd.f32 %v1319, %v1327
        %v1330 = vadd.f32 %v1320, %v1328
        %v1331 = vlaneseq
        %v1332 = vshrl.u32 %v1331, 7
        %v1333 = vsub.s32 3, %v1332
        %v1334 = vrot.slane %v212, %v1333
        %v1335 = vsub.f32 %v1334, %v211
        %v1336 = vsub.f32 %v1334, %v212
        %v1337 = vmul.f32 %v1335, %v1335
        %v1338 = vmul.f32 %v1336, %v1336
        %v1339 = vlaneseq
        %v1340 = vshrl.u32 %v1339, 7
        %v1341 = vsub.s32 3, %v1340
        %v1342 = vrot.slane %v214, %v1341
        %v1343 = vsub.f32 %v1342, %v213
        %v1344 = vsub.f32 %v1342, %v214
        %v1345 = vmul.f32 %v1343, %v1343
        %v1346 = vmul.f32 %v1344, %v1344
        %v1347 = vadd.f32 %v1337, %v1345
        %v1348 = vadd.f32 %v1338, %v1346
        %v1349 = vlaneseq
        %v1350 = vshrl.u32 %v1349, 7
        %v1351 = vsub.s32 3, %v1350
        %v1352 = vrot.slane %v216, %v1351
        %v1353 = vsub.f32 %v1352, %v215
        %v1354 = vsub.f32 %v1352, %v216
        %v1355 = vmul.f32 %v1353, %v1353
        %v1356 = vmul.f32 %v1354, %v1354
        %v1357 = vadd.f32 %v1347, %v1355
        %v1358 = vadd.f32 %v1348, %v1356
        %v1359 = vrsqrt.pop %v1329
        %v1360 = vmul.f32 %v1329, %v1359
        %vm1361 = vcmp.eq.f32.partialorder %v1329, inf
        %v1362 = vsel %vm1361, %v1329, %v1360
        %vm1363 = vcmp.eq.f32.partialorder %v1329, 0.0
        %v1364 = vand.u32 %v1329, 2147483648
        %v1365 = vsel %vm1363, %v1364, %v1362
        %v1366 = vrsqrt.pop %v1330
        %v1367 = vmul.f32 %v1330, %v1366
        %vm1368 = vcmp.eq.f32.partialorder %v1330, inf
        %v1369 = vsel %vm1368, %v1330, %v1367
        %vm1370 = vcmp.eq.f32.partialorder %v1330, 0.0
        %v1371 = vand.u32 %v1330, 2147483648
        %v1372 = vsel %vm1370, %v1371, %v1369
        %v1373 = vrsqrt.pop %v1357
        %v1374 = vmul.f32 %v1357, %v1373
        %vm1375 = vcmp.eq.f32.partialorder %v1357, inf
        %v1376 = vsel %vm1375, %v1357, %v1374
        %vm1377 = vcmp.eq.f32.partialorder %v1357, 0.0
        %v1378 = vand.u32 %v1357, 2147483648
        %v1379 = vsel %vm1377, %v1378, %v1376
        %v1380 = vrsqrt.pop %v1358
        %v1381 = vmul.f32 %v1358, %v1380
        %vm1382 = vcmp.eq.f32.partialorder %v1358, inf
        %v1383 = vsel %vm1382, %v1358, %v1381
        %vm1384 = vcmp.eq.f32.partialorder %v1358, 0.0
        %v1385 = vand.u32 %v1358, 2147483648
        %v1386 = vsel %vm1384, %v1385, %v1383
        %v1387 = vsub.f32 %v1365, %v1379
        %v1388 = vsub.f32 %v1372, %v1386
        %v1389 = vmul.f32 %v1387, 33.333332
        %v1390 = vmul.f32 %v1388, 33.333332
        %v1391 = vmul.f32 %v1389, %v1389
        %v1392 = vmul.f32 %v1390, %v1390
        %v1393 = vsub.f32 1.0, %v1391
        %v1394 = vsub.f32 1.0, %v1392
        %v1395 = vmax.f32 %v1393, 0.0
        %v1396 = vmax.f32 %v1394, 0.0
        %s1397 = scalar_lea.vmem [#allocation2], 176
        %1398 = vst [vmem:[%s1397] sm:$0xff] %v1395
        %1399 = vst [vmem:[%s1397 + $0x8] sm:$0xff] %v1396
        %v1400 = vadd.f32 %v1301, %v1395
        %v1401 = vadd.f32 %v1302, %v1396
        %v1402 = vlaneseq
        %v1403 = vshrl.u32 %v1402, 7
        %v1404 = vsub.s32 4, %v1403
        %v1405 = vrot.slane %v200, %v1404
        %v1406 = vsub.f32 %v1405, %v199
        %v1407 = vsub.f32 %v1405, %v200
        %v1408 = vmul.f32 %v1406, %v1406
        %v1409 = vmul.f32 %v1407, %v1407
        %v1410 = vlaneseq
        %v1411 = vshrl.u32 %v1410, 7
        %v1412 = vsub.s32 4, %v1411
        %v1413 = vrot.slane %v202, %v1412
        %v1414 = vsub.f32 %v1413, %v201
        %v1415 = vsub.f32 %v1413, %v202
        %v1416 = vmul.f32 %v1414, %v1414
        %v1417 = vmul.f32 %v1415, %v1415
        %v1418 = vadd.f32 %v1408, %v1416
        %v1419 = vadd.f32 %v1409, %v1417
        %v1420 = vlaneseq
        %v1421 = vshrl.u32 %v1420, 7
        %v1422 = vsub.s32 4, %v1421
        %v1423 = vrot.slane %v204, %v1422
        %v1424 = vsub.f32 %v1423, %v203
        %v1425 = vsub.f32 %v1423, %v204
        %v1426 = vmul.f32 %v1424, %v1424
        %v1427 = vmul.f32 %v1425, %v1425
        %v1428 = vadd.f32 %v1418, %v1426
        %v1429 = vadd.f32 %v1419, %v1427
        %v1430 = vlaneseq
        %v1431 = vshrl.u32 %v1430, 7
        %v1432 = vsub.s32 4, %v1431
        %v1433 = vrot.slane %v212, %v1432
        %v1434 = vsub.f32 %v1433, %v211
        %v1435 = vsub.f32 %v1433, %v212
        %v1436 = vmul.f32 %v1434, %v1434
        %v1437 = vmul.f32 %v1435, %v1435
        %v1438 = vlaneseq
        %v1439 = vshrl.u32 %v1438, 7
        %v1440 = vsub.s32 4, %v1439
        %v1441 = vrot.slane %v214, %v1440
        %v1442 = vsub.f32 %v1441, %v213
        %v1443 = vsub.f32 %v1441, %v214
        %v1444 = vmul.f32 %v1442, %v1442
        %v1445 = vmul.f32 %v1443, %v1443
        %v1446 = vadd.f32 %v1436, %v1444
        %v1447 = vadd.f32 %v1437, %v1445
        %v1448 = vlaneseq
        %v1449 = vshrl.u32 %v1448, 7
        %v1450 = vsub.s32 4, %v1449
        %v1451 = vrot.slane %v216, %v1450
        %v1452 = vsub.f32 %v1451, %v215
        %v1453 = vsub.f32 %v1451, %v216
        %v1454 = vmul.f32 %v1452, %v1452
        %v1455 = vmul.f32 %v1453, %v1453
        %v1456 = vadd.f32 %v1446, %v1454
        %v1457 = vadd.f32 %v1447, %v1455
        %v1458 = vrsqrt.pop %v1428
        %v1459 = vmul.f32 %v1428, %v1458
        %vm1460 = vcmp.eq.f32.partialorder %v1428, inf
        %v1461 = vsel %vm1460, %v1428, %v1459
        %vm1462 = vcmp.eq.f32.partialorder %v1428, 0.0
        %v1463 = vand.u32 %v1428, 2147483648
        %v1464 = vsel %vm1462, %v1463, %v1461
        %v1465 = vrsqrt.pop %v1429
        %v1466 = vmul.f32 %v1429, %v1465
        %vm1467 = vcmp.eq.f32.partialorder %v1429, inf
        %v1468 = vsel %vm1467, %v1429, %v1466
        %vm1469 = vcmp.eq.f32.partialorder %v1429, 0.0
        %v1470 = vand.u32 %v1429, 2147483648
        %v1471 = vsel %vm1469, %v1470, %v1468
        %v1472 = vrsqrt.pop %v1456
        %v1473 = vmul.f32 %v1456, %v1472
        %vm1474 = vcmp.eq.f32.partialorder %v1456, inf
        %v1475 = vsel %vm1474, %v1456, %v1473
        %vm1476 = vcmp.eq.f32.partialorder %v1456, 0.0
        %v1477 = vand.u32 %v1456, 2147483648
        %v1478 = vsel %vm1476, %v1477, %v1475
        %v1479 = vrsqrt.pop %v1457
        %v1480 = vmul.f32 %v1457, %v1479
        %vm1481 = vcmp.eq.f32.partialorder %v1457, inf
        %v1482 = vsel %vm1481, %v1457, %v1480
        %vm1483 = vcmp.eq.f32.partialorder %v1457, 0.0
        %v1484 = vand.u32 %v1457, 2147483648
        %v1485 = vsel %vm1483, %v1484, %v1482
        %v1486 = vsub.f32 %v1464, %v1478
        %v1487 = vsub.f32 %v1471, %v1485
        %v1488 = vmul.f32 %v1486, 33.333332
        %v1489 = vmul.f32 %v1487, 33.333332
        %v1490 = vmul.f32 %v1488, %v1488
        %v1491 = vmul.f32 %v1489, %v1489
        %v1492 = vsub.f32 1.0, %v1490
        %v1493 = vsub.f32 1.0, %v1491
        %v1494 = vmax.f32 %v1492, 0.0
        %v1495 = vmax.f32 %v1493, 0.0
        %s1496 = scalar_lea.vmem [#allocation2], 192
        %1497 = vst [vmem:[%s1496] sm:$0xff] %v1494
        %1498 = vst [vmem:[%s1496 + $0x8] sm:$0xff] %v1495
        %v1499 = vadd.f32 %v1400, %v1494
        %v1500 = vadd.f32 %v1401, %v1495
        %v1501 = vlaneseq
        %v1502 = vshrl.u32 %v1501, 7
        %v1503 = vsub.s32 5, %v1502
        %v1504 = vrot.slane %v200, %v1503
        %v1505 = vsub.f32 %v1504, %v199
        %v1506 = vsub.f32 %v1504, %v200
        %v1507 = vmul.f32 %v1505, %v1505
        %v1508 = vmul.f32 %v1506, %v1506
        %v1509 = vlaneseq
        %v1510 = vshrl.u32 %v1509, 7
        %v1511 = vsub.s32 5, %v1510
        %v1512 = vrot.slane %v202, %v1511
        %v1513 = vsub.f32 %v1512, %v201
        %v1514 = vsub.f32 %v1512, %v202
        %v1515 = vmul.f32 %v1513, %v1513
        %v1516 = vmul.f32 %v1514, %v1514
        %v1517 = vadd.f32 %v1507, %v1515
        %v1518 = vadd.f32 %v1508, %v1516
        %v1519 = vlaneseq
        %v1520 = vshrl.u32 %v1519, 7
        %v1521 = vsub.s32 5, %v1520
        %v1522 = vrot.slane %v204, %v1521
        %v1523 = vsub.f32 %v1522, %v203
        %v1524 = vsub.f32 %v1522, %v204
        %v1525 = vmul.f32 %v1523, %v1523
        %v1526 = vmul.f32 %v1524, %v1524
        %v1527 = vadd.f32 %v1517, %v1525
        %v1528 = vadd.f32 %v1518, %v1526
        %v1529 = vlaneseq
        %v1530 = vshrl.u32 %v1529, 7
        %v1531 = vsub.s32 5, %v1530
        %v1532 = vrot.slane %v212, %v1531
        %v1533 = vsub.f32 %v1532, %v211
        %v1534 = vsub.f32 %v1532, %v212
        %v1535 = vmul.f32 %v1533, %v1533
        %v1536 = vmul.f32 %v1534, %v1534
        %v1537 = vlaneseq
        %v1538 = vshrl.u32 %v1537, 7
        %v1539 = vsub.s32 5, %v1538
        %v1540 = vrot.slane %v214, %v1539
        %v1541 = vsub.f32 %v1540, %v213
        %v1542 = vsub.f32 %v1540, %v214
        %v1543 = vmul.f32 %v1541, %v1541
        %v1544 = vmul.f32 %v1542, %v1542
        %v1545 = vadd.f32 %v1535, %v1543
        %v1546 = vadd.f32 %v1536, %v1544
        %v1547 = vlaneseq
        %v1548 = vshrl.u32 %v1547, 7
        %v1549 = vsub.s32 5, %v1548
        %v1550 = vrot.slane %v216, %v1549
        %v1551 = vsub.f32 %v1550, %v215
        %v1552 = vsub.f32 %v1550, %v216
        %v1553 = vmul.f32 %v1551, %v1551
        %v1554 = vmul.f32 %v1552, %v1552
        %v1555 = vadd.f32 %v1545, %v1553
        %v1556 = vadd.f32 %v1546, %v1554
        %v1557 = vrsqrt.pop %v1527
        %v1558 = vmul.f32 %v1527, %v1557
        %vm1559 = vcmp.eq.f32.partialorder %v1527, inf
        %v1560 = vsel %vm1559, %v1527, %v1558
        %vm1561 = vcmp.eq.f32.partialorder %v1527, 0.0
        %v1562 = vand.u32 %v1527, 2147483648
        %v1563 = vsel %vm1561, %v1562, %v1560
        %v1564 = vrsqrt.pop %v1528
        %v1565 = vmul.f32 %v1528, %v1564
        %vm1566 = vcmp.eq.f32.partialorder %v1528, inf
        %v1567 = vsel %vm1566, %v1528, %v1565
        %vm1568 = vcmp.eq.f32.partialorder %v1528, 0.0
        %v1569 = vand.u32 %v1528, 2147483648
        %v1570 = vsel %vm1568, %v1569, %v1567
        %v1571 = vrsqrt.pop %v1555
        %v1572 = vmul.f32 %v1555, %v1571
        %vm1573 = vcmp.eq.f32.partialorder %v1555, inf
        %v1574 = vsel %vm1573, %v1555, %v1572
        %vm1575 = vcmp.eq.f32.partialorder %v1555, 0.0
        %v1576 = vand.u32 %v1555, 2147483648
        %v1577 = vsel %vm1575, %v1576, %v1574
        %v1578 = vrsqrt.pop %v1556
        %v1579 = vmul.f32 %v1556, %v1578
        %vm1580 = vcmp.eq.f32.partialorder %v1556, inf
        %v1581 = vsel %vm1580, %v1556, %v1579
        %vm1582 = vcmp.eq.f32.partialorder %v1556, 0.0
        %v1583 = vand.u32 %v1556, 2147483648
        %v1584 = vsel %vm1582, %v1583, %v1581
        %v1585 = vsub.f32 %v1563, %v1577
        %v1586 = vsub.f32 %v1570, %v1584
        %v1587 = vmul.f32 %v1585, 33.333332
        %v1588 = vmul.f32 %v1586, 33.333332
        %v1589 = vmul.f32 %v1587, %v1587
        %v1590 = vmul.f32 %v1588, %v1588
        %v1591 = vsub.f32 1.0, %v1589
        %v1592 = vsub.f32 1.0, %v1590
        %v1593 = vmax.f32 %v1591, 0.0
        %v1594 = vmax.f32 %v1592, 0.0
        %s1595 = scalar_lea.vmem [#allocation2], 208
        %1596 = vst [vmem:[%s1595] sm:$0xff] %v1593
        %1597 = vst [vmem:[%s1595 + $0x8] sm:$0xff] %v1594
        %v1598 = vadd.f32 %v1499, %v1593
        %v1599 = vadd.f32 %v1500, %v1594
        %v1600 = vlaneseq
        %v1601 = vshrl.u32 %v1600, 7
        %v1602 = vsub.s32 6, %v1601
        %v1603 = vrot.slane %v200, %v1602
        %v1604 = vsub.f32 %v1603, %v199
        %v1605 = vsub.f32 %v1603, %v200
        %v1606 = vmul.f32 %v1604, %v1604
        %v1607 = vmul.f32 %v1605, %v1605
        %v1608 = vlaneseq
        %v1609 = vshrl.u32 %v1608, 7
        %v1610 = vsub.s32 6, %v1609
        %v1611 = vrot.slane %v202, %v1610
        %v1612 = vsub.f32 %v1611, %v201
        %v1613 = vsub.f32 %v1611, %v202
        %v1614 = vmul.f32 %v1612, %v1612
        %v1615 = vmul.f32 %v1613, %v1613
        %v1616 = vadd.f32 %v1606, %v1614
        %v1617 = vadd.f32 %v1607, %v1615
        %v1618 = vlaneseq
        %v1619 = vshrl.u32 %v1618, 7
        %v1620 = vsub.s32 6, %v1619
        %v1621 = vrot.slane %v204, %v1620
        %v1622 = vsub.f32 %v1621, %v203
        %v1623 = vsub.f32 %v1621, %v204
        %v1624 = vmul.f32 %v1622, %v1622
        %v1625 = vmul.f32 %v1623, %v1623
        %v1626 = vadd.f32 %v1616, %v1624
        %v1627 = vadd.f32 %v1617, %v1625
        %v1628 = vlaneseq
        %v1629 = vshrl.u32 %v1628, 7
        %v1630 = vsub.s32 6, %v1629
        %v1631 = vrot.slane %v212, %v1630
        %v1632 = vsub.f32 %v1631, %v211
        %v1633 = vsub.f32 %v1631, %v212
        %v1634 = vmul.f32 %v1632, %v1632
        %v1635 = vmul.f32 %v1633, %v1633
        %v1636 = vlaneseq
        %v1637 = vshrl.u32 %v1636, 7
        %v1638 = vsub.s32 6, %v1637
        %v1639 = vrot.slane %v214, %v1638
        %v1640 = vsub.f32 %v1639, %v213
        %v1641 = vsub.f32 %v1639, %v214
        %v1642 = vmul.f32 %v1640, %v1640
        %v1643 = vmul.f32 %v1641, %v1641
        %v1644 = vadd.f32 %v1634, %v1642
        %v1645 = vadd.f32 %v1635, %v1643
        %v1646 = vlaneseq
        %v1647 = vshrl.u32 %v1646, 7
        %v1648 = vsub.s32 6, %v1647
        %v1649 = vrot.slane %v216, %v1648
        %v1650 = vsub.f32 %v1649, %v215
        %v1651 = vsub.f32 %v1649, %v216
        %v1652 = vmul.f32 %v1650, %v1650
        %v1653 = vmul.f32 %v1651, %v1651
        %v1654 = vadd.f32 %v1644, %v1652
        %v1655 = vadd.f32 %v1645, %v1653
        %v1656 = vrsqrt.pop %v1626
        %v1657 = vmul.f32 %v1626, %v1656
        %vm1658 = vcmp.eq.f32.partialorder %v1626, inf
        %v1659 = vsel %vm1658, %v1626, %v1657
        %vm1660 = vcmp.eq.f32.partialorder %v1626, 0.0
        %v1661 = vand.u32 %v1626, 2147483648
        %v1662 = vsel %vm1660, %v1661, %v1659
        %v1663 = vrsqrt.pop %v1627
        %v1664 = vmul.f32 %v1627, %v1663
        %vm1665 = vcmp.eq.f32.partialorder %v1627, inf
        %v1666 = vsel %vm1665, %v1627, %v1664
        %vm1667 = vcmp.eq.f32.partialorder %v1627, 0.0
        %v1668 = vand.u32 %v1627, 2147483648
        %v1669 = vsel %vm1667, %v1668, %v1666
        %v1670 = vrsqrt.pop %v1654
        %v1671 = vmul.f32 %v1654, %v1670
        %vm1672 = vcmp.eq.f32.partialorder %v1654, inf
        %v1673 = vsel %vm1672, %v1654, %v1671
        %vm1674 = vcmp.eq.f32.partialorder %v1654, 0.0
        %v1675 = vand.u32 %v1654, 2147483648
        %v1676 = vsel %vm1674, %v1675, %v1673
        %v1677 = vrsqrt.pop %v1655
        %v1678 = vmul.f32 %v1655, %v1677
        %vm1679 = vcmp.eq.f32.partialorder %v1655, inf
        %v1680 = vsel %vm1679, %v1655, %v1678
        %vm1681 = vcmp.eq.f32.partialorder %v1655, 0.0
        %v1682 = vand.u32 %v1655, 2147483648
        %v1683 = vsel %vm1681, %v1682, %v1680
        %v1684 = vsub.f32 %v1662, %v1676
        %v1685 = vsub.f32 %v1669, %v1683
        %v1686 = vmul.f32 %v1684, 33.333332
        %v1687 = vmul.f32 %v1685, 33.333332
        %v1688 = vmul.f32 %v1686, %v1686
        %v1689 = vmul.f32 %v1687, %v1687
        %v1690 = vsub.f32 1.0, %v1688
        %v1691 = vsub.f32 1.0, %v1689
        %v1692 = vmax.f32 %v1690, 0.0
        %v1693 = vmax.f32 %v1691, 0.0
        %s1694 = scalar_lea.vmem [#allocation2], 224
        %1695 = vst [vmem:[%s1694] sm:$0xff] %v1692
        %1696 = vst [vmem:[%s1694 + $0x8] sm:$0xff] %v1693
        %v1697 = vadd.f32 %v1598, %v1692
        %v1698 = vadd.f32 %v1599, %v1693
        %v1699 = vlaneseq
        %v1700 = vshrl.u32 %v1699, 7
        %v1701 = vsub.s32 7, %v1700
        %v1702 = vrot.slane %v200, %v1701
        %v1703 = vsub.f32 %v1702, %v199
        %v1704 = vsub.f32 %v1702, %v200
        %v1705 = vmul.f32 %v1703, %v1703
        %v1706 = vmul.f32 %v1704, %v1704
        %v1707 = vlaneseq
        %v1708 = vshrl.u32 %v1707, 7
        %v1709 = vsub.s32 7, %v1708
        %v1710 = vrot.slane %v202, %v1709
        %v1711 = vsub.f32 %v1710, %v201
        %v1712 = vsub.f32 %v1710, %v202
        %v1713 = vmul.f32 %v1711, %v1711
        %v1714 = vmul.f32 %v1712, %v1712
        %v1715 = vadd.f32 %v1705, %v1713
        %v1716 = vadd.f32 %v1706, %v1714
        %v1717 = vlaneseq
        %v1718 = vshrl.u32 %v1717, 7
        %v1719 = vsub.s32 7, %v1718
        %v1720 = vrot.slane %v204, %v1719
        %v1721 = vsub.f32 %v1720, %v203
        %v1722 = vsub.f32 %v1720, %v204
        %v1723 = vmul.f32 %v1721, %v1721
        %v1724 = vmul.f32 %v1722, %v1722
        %v1725 = vadd.f32 %v1715, %v1723
        %v1726 = vadd.f32 %v1716, %v1724
        %v1727 = vlaneseq
        %v1728 = vshrl.u32 %v1727, 7
        %v1729 = vsub.s32 7, %v1728
        %v1730 = vrot.slane %v212, %v1729
        %v1731 = vsub.f32 %v1730, %v211
        %v1732 = vsub.f32 %v1730, %v212
        %v1733 = vmul.f32 %v1731, %v1731
        %v1734 = vmul.f32 %v1732, %v1732
        %v1735 = vlaneseq
        %v1736 = vshrl.u32 %v1735, 7
        %v1737 = vsub.s32 7, %v1736
        %v1738 = vrot.slane %v214, %v1737
        %v1739 = vsub.f32 %v1738, %v213
        %v1740 = vsub.f32 %v1738, %v214
        %v1741 = vmul.f32 %v1739, %v1739
        %v1742 = vmul.f32 %v1740, %v1740
        %v1743 = vadd.f32 %v1733, %v1741
        %v1744 = vadd.f32 %v1734, %v1742
        %v1745 = vlaneseq
        %v1746 = vshrl.u32 %v1745, 7
        %v1747 = vsub.s32 7, %v1746
        %v1748 = vrot.slane %v216, %v1747
        %v1749 = vsub.f32 %v1748, %v215
        %v1750 = vsub.f32 %v1748, %v216
        %v1751 = vmul.f32 %v1749, %v1749
        %v1752 = vmul.f32 %v1750, %v1750
        %v1753 = vadd.f32 %v1743, %v1751
        %v1754 = vadd.f32 %v1744, %v1752
        %v1755 = vrsqrt.pop %v1725
        %v1756 = vmul.f32 %v1725, %v1755
        %vm1757 = vcmp.eq.f32.partialorder %v1725, inf
        %v1758 = vsel %vm1757, %v1725, %v1756
        %vm1759 = vcmp.eq.f32.partialorder %v1725, 0.0
        %v1760 = vand.u32 %v1725, 2147483648
        %v1761 = vsel %vm1759, %v1760, %v1758
        %v1762 = vrsqrt.pop %v1726
        %v1763 = vmul.f32 %v1726, %v1762
        %vm1764 = vcmp.eq.f32.partialorder %v1726, inf
        %v1765 = vsel %vm1764, %v1726, %v1763
        %vm1766 = vcmp.eq.f32.partialorder %v1726, 0.0
        %v1767 = vand.u32 %v1726, 2147483648
        %v1768 = vsel %vm1766, %v1767, %v1765
        %v1769 = vrsqrt.pop %v1753
        %v1770 = vmul.f32 %v1753, %v1769
        %vm1771 = vcmp.eq.f32.partialorder %v1753, inf
        %v1772 = vsel %vm1771, %v1753, %v1770
        %vm1773 = vcmp.eq.f32.partialorder %v1753, 0.0
        %v1774 = vand.u32 %v1753, 2147483648
        %v1775 = vsel %vm1773, %v1774, %v1772
        %v1776 = vrsqrt.pop %v1754
        %v1777 = vmul.f32 %v1754, %v1776
        %vm1778 = vcmp.eq.f32.partialorder %v1754, inf
        %v1779 = vsel %vm1778, %v1754, %v1777
        %vm1780 = vcmp.eq.f32.partialorder %v1754, 0.0
        %v1781 = vand.u32 %v1754, 2147483648
        %v1782 = vsel %vm1780, %v1781, %v1779
        %v1783 = vsub.f32 %v1761, %v1775
        %v1784 = vsub.f32 %v1768, %v1782
        %v1785 = vmul.f32 %v1783, 33.333332
        %v1786 = vmul.f32 %v1784, 33.333332
        %v1787 = vmul.f32 %v1785, %v1785
        %v1788 = vmul.f32 %v1786, %v1786
        %v1789 = vsub.f32 1.0, %v1787
        %v1790 = vsub.f32 1.0, %v1788
        %v1791 = vmax.f32 %v1789, 0.0
        %v1792 = vmax.f32 %v1790, 0.0
        %s1793 = scalar_lea.vmem [#allocation2], 240
        %1794 = vst [vmem:[%s1793] sm:$0xff] %v1791
        %1795 = vst [vmem:[%s1793 + $0x8] sm:$0xff] %v1792
        %v1796 = vadd.f32 %v1697, %v1791
        %v1797 = vadd.f32 %v1698, %v1792
        loop: start=0, step=1, limit=9
        $region37: #{tpu_custom_call.1} parent=27 // loop_pre_header
          _
        $region38: #{tpu_custom_call.1} parent=27 // loop_header
          %s1799 = sphi 0, %s1803
          %p1800 = scmp.ge.s32.totalorder %s1799, 9
          %v1804 = vphi %v1796, %v1962
          %v1805 = vphi %v1797, %v1963
        $region39: #{tpu_custom_call.1} parent=27 // loop_header_branch
          %1802 = sbr.rel (%p1800) target = $region43
        $region40: #{tpu_custom_call.1} parent=27 // loop_body
          %v1806 = vld [vmem:[#allocation2] sm:$0xff]
          %v1807 = vld [vmem:[#allocation2 + $0x8] sm:$0xff]
          %v1808 = vlaneseq
          %v1809 = vshrl.u32 %v1808, 7
          %v1810 = vsub.s32 0, %v1809
          %v1811 = vrot.slane %v1804, %v1810
          %v1812 = vmul.f32 %v1806, %v1811
          %v1813 = vmul.f32 %v1807, %v1811
          %v1814 = vld [vmem:[%s407] sm:$0xff]
          %v1815 = vld [vmem:[%s407 + $0x8] sm:$0xff]
          %v1816 = vlaneseq
          %v1817 = vshrl.u32 %v1816, 7
          %v1818 = vsub.s32 1, %v1817
          %v1819 = vrot.slane %v1804, %v1818
          %v1820 = vmul.f32 %v1814, %v1819
          %v1821 = vmul.f32 %v1815, %v1819
          %v1822 = vadd.f32 %v1812, %v1820
          %v1823 = vadd.f32 %v1813, %v1821
          %v1824 = vld [vmem:[%s506] sm:$0xff]
          %v1825 = vld [vmem:[%s506 + $0x8] sm:$0xff]
          %v1826 = vlaneseq
          %v1827 = vshrl.u32 %v1826, 7
          %v1828 = vsub.s32 2, %v1827
          %v1829 = vrot.slane %v1804, %v1828
          %v1830 = vmul.f32 %v1824, %v1829
          %v1831 = vmul.f32 %v1825, %v1829
          %v1832 = vadd.f32 %v1822, %v1830
          %v1833 = vadd.f32 %v1823, %v1831
          %v1834 = vld [vmem:[%s605] sm:$0xff]
          %v1835 = vld [vmem:[%s605 + $0x8] sm:$0xff]
          %v1836 = vlaneseq
          %v1837 = vshrl.u32 %v1836, 7
          %v1838 = vsub.s32 3, %v1837
          %v1839 = vrot.slane %v1804, %v1838
          %v1840 = vmul.f32 %v1834, %v1839
          %v1841 = vmul.f32 %v1835, %v1839
          %v1842 = vadd.f32 %v1832, %v1840
          %v1843 = vadd.f32 %v1833, %v1841
          %v1844 = vld [vmem:[%s704] sm:$0xff]
          %v1845 = vld [vmem:[%s704 + $0x8] sm:$0xff]
          %v1846 = vlaneseq
          %v1847 = vshrl.u32 %v1846, 7
          %v1848 = vsub.s32 4, %v1847
          %v1849 = vrot.slane %v1804, %v1848
          %v1850 = vmul.f32 %v1844, %v1849
          %v1851 = vmul.f32 %v1845, %v1849
          %v1852 = vadd.f32 %v1842, %v1850
          %v1853 = vadd.f32 %v1843, %v1851
          %v1854 = vld [vmem:[%s803] sm:$0xff]
          %v1855 = vld [vmem:[%s803 + $0x8] sm:$0xff]
          %v1856 = vlaneseq
          %v1857 = vshrl.u32 %v1856, 7
          %v1858 = vsub.s32 5, %v1857
          %v1859 = vrot.slane %v1804, %v1858
          %v1860 = vmul.f32 %v1854, %v1859
          %v1861 = vmul.f32 %v1855, %v1859
          %v1862 = vadd.f32 %v1852, %v1860
          %v1863 = vadd.f32 %v1853, %v1861
          %v1864 = vld [vmem:[%s902] sm:$0xff]
          %v1865 = vld [vmem:[%s902 + $0x8] sm:$0xff]
          %v1866 = vlaneseq
          %v1867 = vshrl.u32 %v1866, 7
          %v1868 = vsub.s32 6, %v1867
          %v1869 = vrot.slane %v1804, %v1868
          %v1870 = vmul.f32 %v1864, %v1869
          %v1871 = vmul.f32 %v1865, %v1869
          %v1872 = vadd.f32 %v1862, %v1870
          %v1873 = vadd.f32 %v1863, %v1871
          %v1874 = vld [vmem:[%s1001] sm:$0xff]
          %v1875 = vld [vmem:[%s1001 + $0x8] sm:$0xff]
          %v1876 = vlaneseq
          %v1877 = vshrl.u32 %v1876, 7
          %v1878 = vsub.s32 7, %v1877
          %v1879 = vrot.slane %v1804, %v1878
          %v1880 = vmul.f32 %v1874, %v1879
          %v1881 = vmul.f32 %v1875, %v1879
          %v1882 = vadd.f32 %v1872, %v1880
          %v1883 = vadd.f32 %v1873, %v1881
          %v1884 = vld [vmem:[%s1100] sm:$0xff]
          %v1885 = vld [vmem:[%s1100 + $0x8] sm:$0xff]
          %v1886 = vlaneseq
          %v1887 = vshrl.u32 %v1886, 7
          %v1888 = vsub.s32 0, %v1887
          %v1889 = vrot.slane %v1805, %v1888
          %v1890 = vmul.f32 %v1884, %v1889
          %v1891 = vmul.f32 %v1885, %v1889
          %v1892 = vadd.f32 %v1882, %v1890
          %v1893 = vadd.f32 %v1883, %v1891
          %v1894 = vld [vmem:[%s1199] sm:$0xff]
          %v1895 = vld [vmem:[%s1199 + $0x8] sm:$0xff]
          %v1896 = vlaneseq
          %v1897 = vshrl.u32 %v1896, 7
          %v1898 = vsub.s32 1, %v1897
          %v1899 = vrot.slane %v1805, %v1898
          %v1900 = vmul.f32 %v1894, %v1899
          %v1901 = vmul.f32 %v1895, %v1899
          %v1902 = vadd.f32 %v1892, %v1900
          %v1903 = vadd.f32 %v1893, %v1901
          %v1904 = vld [vmem:[%s1298] sm:$0xff]
          %v1905 = vld [vmem:[%s1298 + $0x8] sm:$0xff]
          %v1906 = vlaneseq
          %v1907 = vshrl.u32 %v1906, 7
          %v1908 = vsub.s32 2, %v1907
          %v1909 = vrot.slane %v1805, %v1908
          %v1910 = vmul.f32 %v1904, %v1909
          %v1911 = vmul.f32 %v1905, %v1909
          %v1912 = vadd.f32 %v1902, %v1910
          %v1913 = vadd.f32 %v1903, %v1911
          %v1914 = vld [vmem:[%s1397] sm:$0xff]
          %v1915 = vld [vmem:[%s1397 + $0x8] sm:$0xff]
          %v1916 = vlaneseq
          %v1917 = vshrl.u32 %v1916, 7
          %v1918 = vsub.s32 3, %v1917
          %v1919 = vrot.slane %v1805, %v1918
          %v1920 = vmul.f32 %v1914, %v1919
          %v1921 = vmul.f32 %v1915, %v1919
          %v1922 = vadd.f32 %v1912, %v1920
          %v1923 = vadd.f32 %v1913, %v1921
          %v1924 = vld [vmem:[%s1496] sm:$0xff]
          %v1925 = vld [vmem:[%s1496 + $0x8] sm:$0xff]
          %v1926 = vlaneseq
          %v1927 = vshrl.u32 %v1926, 7
          %v1928 = vsub.s32 4, %v1927
          %v1929 = vrot.slane %v1805, %v1928
          %v1930 = vmul.f32 %v1924, %v1929
          %v1931 = vmul.f32 %v1925, %v1929
          %v1932 = vadd.f32 %v1922, %v1930
          %v1933 = vadd.f32 %v1923, %v1931
          %v1934 = vld [vmem:[%s1595] sm:$0xff]
          %v1935 = vld [vmem:[%s1595 + $0x8] sm:$0xff]
          %v1936 = vlaneseq
          %v1937 = vshrl.u32 %v1936, 7
          %v1938 = vsub.s32 5, %v1937
          %v1939 = vrot.slane %v1805, %v1938
          %v1940 = vmul.f32 %v1934, %v1939
          %v1941 = vmul.f32 %v1935, %v1939
          %v1942 = vadd.f32 %v1932, %v1940
          %v1943 = vadd.f32 %v1933, %v1941
          %v1944 = vld [vmem:[%s1694] sm:$0xff]
          %v1945 = vld [vmem:[%s1694 + $0x8] sm:$0xff]
          %v1946 = vlaneseq
          %v1947 = vshrl.u32 %v1946, 7
          %v1948 = vsub.s32 6, %v1947
          %v1949 = vrot.slane %v1805, %v1948
          %v1950 = vmul.f32 %v1944, %v1949
          %v1951 = vmul.f32 %v1945, %v1949
          %v1952 = vadd.f32 %v1942, %v1950
          %v1953 = vadd.f32 %v1943, %v1951
          %v1954 = vld [vmem:[%s1793] sm:$0xff]
          %v1955 = vld [vmem:[%s1793 + $0x8] sm:$0xff]
          %v1956 = vlaneseq
          %v1957 = vshrl.u32 %v1956, 7
          %v1958 = vsub.s32 7, %v1957
          %v1959 = vrot.slane %v1805, %v1958
          %v1960 = vmul.f32 %v1954, %v1959
          %v1961 = vmul.f32 %v1955, %v1959
          %v1962 = vadd.f32 %v1952, %v1960
          %v1963 = vadd.f32 %v1953, %v1961
        $region41: #{tpu_custom_call.1} parent=27 // loop_footer
          %s1803 = sadd.s32 1, %s1799
        $region42: #{tpu_custom_call.1} parent=27 // loop_footer_branch
          %1798 = sbr.rel target = $region38
        $region43: #{tpu_custom_call.1} parent=27 // loop_exit
          _
        %v1964 = vld [vmem:[#allocation2] sm:$0xff]
        %v1965 = vld [vmem:[#allocation2 + $0x8] sm:$0xff]
        %v1966 = vlaneseq
        %v1967 = vshrl.u32 %v1966, 7
        %v1968 = vsub.s32 0, %v1967
        %v1969 = vrot.slane %v1804, %v1968
        %v1970 = vmul.f32 %v1964, %v1969
        %v1971 = vmul.f32 %v1965, %v1969
        %v1972 = vld [vmem:[%s407] sm:$0xff]
        %v1973 = vld [vmem:[%s407 + $0x8] sm:$0xff]
        %v1974 = vlaneseq
        %v1975 = vshrl.u32 %v1974, 7
        %v1976 = vsub.s32 1, %v1975
        %v1977 = vrot.slane %v1804, %v1976
        %v1978 = vmul.f32 %v1972, %v1977
        %v1979 = vmul.f32 %v1973, %v1977
        %v1980 = vadd.f32 %v1970, %v1978
        %v1981 = vadd.f32 %v1971, %v1979
        %v1982 = vld [vmem:[%s506] sm:$0xff]
        %v1983 = vld [vmem:[%s506 + $0x8] sm:$0xff]
        %v1984 = vlaneseq
        %v1985 = vshrl.u32 %v1984, 7
        %v1986 = vsub.s32 2, %v1985
        %v1987 = vrot.slane %v1804, %v1986
        %v1988 = vmul.f32 %v1982, %v1987
        %v1989 = vmul.f32 %v1983, %v1987
        %v1990 = vadd.f32 %v1980, %v1988
        %v1991 = vadd.f32 %v1981, %v1989
        %v1992 = vld [vmem:[%s605] sm:$0xff]
        %v1993 = vld [vmem:[%s605 + $0x8] sm:$0xff]
        %v1994 = vlaneseq
        %v1995 = vshrl.u32 %v1994, 7
        %v1996 = vsub.s32 3, %v1995
        %v1997 = vrot.slane %v1804, %v1996
        %v1998 = vmul.f32 %v1992, %v1997
        %v1999 = vmul.f32 %v1993, %v1997
        %v2000 = vadd.f32 %v1990, %v1998
        %v2001 = vadd.f32 %v1991, %v1999
        %v2002 = vld [vmem:[%s704] sm:$0xff]
        %v2003 = vld [vmem:[%s704 + $0x8] sm:$0xff]
        %v2004 = vlaneseq
        %v2005 = vshrl.u32 %v2004, 7
        %v2006 = vsub.s32 4, %v2005
        %v2007 = vrot.slane %v1804, %v2006
        %v2008 = vmul.f32 %v2002, %v2007
        %v2009 = vmul.f32 %v2003, %v2007
        %v2010 = vadd.f32 %v2000, %v2008
        %v2011 = vadd.f32 %v2001, %v2009
        %v2012 = vld [vmem:[%s803] sm:$0xff]
        %v2013 = vld [vmem:[%s803 + $0x8] sm:$0xff]
        %v2014 = vlaneseq
        %v2015 = vshrl.u32 %v2014, 7
        %v2016 = vsub.s32 5, %v2015
        %v2017 = vrot.slane %v1804, %v2016
        %v2018 = vmul.f32 %v2012, %v2017
        %v2019 = vmul.f32 %v2013, %v2017
        %v2020 = vadd.f32 %v2010, %v2018
        %v2021 = vadd.f32 %v2011, %v2019
        %v2022 = vld [vmem:[%s902] sm:$0xff]
        %v2023 = vld [vmem:[%s902 + $0x8] sm:$0xff]
        %v2024 = vlaneseq
        %v2025 = vshrl.u32 %v2024, 7
        %v2026 = vsub.s32 6, %v2025
        %v2027 = vrot.slane %v1804, %v2026
        %v2028 = vmul.f32 %v2022, %v2027
        %v2029 = vmul.f32 %v2023, %v2027
        %v2030 = vadd.f32 %v2020, %v2028
        %v2031 = vadd.f32 %v2021, %v2029
        %v2032 = vld [vmem:[%s1001] sm:$0xff]
        %v2033 = vld [vmem:[%s1001 + $0x8] sm:$0xff]
        %v2034 = vlaneseq
        %v2035 = vshrl.u32 %v2034, 7
        %v2036 = vsub.s32 7, %v2035
        %v2037 = vrot.slane %v1804, %v2036
        %v2038 = vmul.f32 %v2032, %v2037
        %v2039 = vmul.f32 %v2033, %v2037
        %v2040 = vadd.f32 %v2030, %v2038
        %v2041 = vadd.f32 %v2031, %v2039
        %v2042 = vld [vmem:[%s1100] sm:$0xff]
        %v2043 = vld [vmem:[%s1100 + $0x8] sm:$0xff]
        %v2044 = vlaneseq
        %v2045 = vshrl.u32 %v2044, 7
        %v2046 = vsub.s32 0, %v2045
        %v2047 = vrot.slane %v1805, %v2046
        %v2048 = vmul.f32 %v2042, %v2047
        %v2049 = vmul.f32 %v2043, %v2047
        %v2050 = vadd.f32 %v2040, %v2048
        %v2051 = vadd.f32 %v2041, %v2049
        %v2052 = vld [vmem:[%s1199] sm:$0xff]
        %v2053 = vld [vmem:[%s1199 + $0x8] sm:$0xff]
        %v2054 = vlaneseq
        %v2055 = vshrl.u32 %v2054, 7
        %v2056 = vsub.s32 1, %v2055
        %v2057 = vrot.slane %v1805, %v2056
        %v2058 = vmul.f32 %v2052, %v2057
        %v2059 = vmul.f32 %v2053, %v2057
        %v2060 = vadd.f32 %v2050, %v2058
        %v2061 = vadd.f32 %v2051, %v2059
        %v2062 = vld [vmem:[%s1298] sm:$0xff]
        %v2063 = vld [vmem:[%s1298 + $0x8] sm:$0xff]
        %v2064 = vlaneseq
        %v2065 = vshrl.u32 %v2064, 7
        %v2066 = vsub.s32 2, %v2065
        %v2067 = vrot.slane %v1805, %v2066
        %v2068 = vmul.f32 %v2062, %v2067
        %v2069 = vmul.f32 %v2063, %v2067
        %v2070 = vadd.f32 %v2060, %v2068
        %v2071 = vadd.f32 %v2061, %v2069
        %v2072 = vld [vmem:[%s1397] sm:$0xff]
        %v2073 = vld [vmem:[%s1397 + $0x8] sm:$0xff]
        %v2074 = vlaneseq
        %v2075 = vshrl.u32 %v2074, 7
        %v2076 = vsub.s32 3, %v2075
        %v2077 = vrot.slane %v1805, %v2076
        %v2078 = vmul.f32 %v2072, %v2077
        %v2079 = vmul.f32 %v2073, %v2077
        %v2080 = vadd.f32 %v2070, %v2078
        %v2081 = vadd.f32 %v2071, %v2079
        %v2082 = vld [vmem:[%s1496] sm:$0xff]
        %v2083 = vld [vmem:[%s1496 + $0x8] sm:$0xff]
        %v2084 = vlaneseq
        %v2085 = vshrl.u32 %v2084, 7
        %v2086 = vsub.s32 4, %v2085
        %v2087 = vrot.slane %v1805, %v2086
        %v2088 = vmul.f32 %v2082, %v2087
        %v2089 = vmul.f32 %v2083, %v2087
        %v2090 = vadd.f32 %v2080, %v2088
        %v2091 = vadd.f32 %v2081, %v2089
        %v2092 = vld [vmem:[%s1595] sm:$0xff]
        %v2093 = vld [vmem:[%s1595 + $0x8] sm:$0xff]
        %v2094 = vlaneseq
        %v2095 = vshrl.u32 %v2094, 7
        %v2096 = vsub.s32 5, %v2095
        %v2097 = vrot.slane %v1805, %v2096
        %v2098 = vmul.f32 %v2092, %v2097
        %v2099 = vmul.f32 %v2093, %v2097
        %v2100 = vadd.f32 %v2090, %v2098
        %v2101 = vadd.f32 %v2091, %v2099
        %v2102 = vld [vmem:[%s1694] sm:$0xff]
        %v2103 = vld [vmem:[%s1694 + $0x8] sm:$0xff]
        %v2104 = vlaneseq
        %v2105 = vshrl.u32 %v2104, 7
        %v2106 = vsub.s32 6, %v2105
        %v2107 = vrot.slane %v1805, %v2106
        %v2108 = vmul.f32 %v2102, %v2107
        %v2109 = vmul.f32 %v2103, %v2107
        %v2110 = vadd.f32 %v2100, %v2108
        %v2111 = vadd.f32 %v2101, %v2109
        %v2112 = vld [vmem:[%s1793] sm:$0xff]
        %v2113 = vld [vmem:[%s1793 + $0x8] sm:$0xff]
        %v2114 = vlaneseq
        %v2115 = vshrl.u32 %v2114, 7
        %v2116 = vsub.s32 7, %v2115
        %v2117 = vrot.slane %v1805, %v2116
        %v2118 = vmul.f32 %v2112, %v2117
        %v2119 = vmul.f32 %v2113, %v2117
        %v2120 = vadd.f32 %v2110, %v2118
        %v2121 = vadd.f32 %v2111, %v2119
        %v2122 = vmul.f32 %v1804, %v2120
        %v2123 = vmul.f32 %v1805, %v2121
        %v2124 = vadd.f32 %v2122, %v2123
        %v2125 = vrot.slane %v2124, 4
        %v2126 = vadd.f32 %v2124, %v2125
        %v2127 = vrot.slane %v2126, 2
        %v2128 = vadd.f32 %v2126, %v2127
        %v2129 = vrot.slane %v2128, 1
        %v2130 = vadd.f32 %v2128, %v2129
        %v2131 = vmul.f32 %v1804, %v1804
        %v2132 = vmul.f32 %v1805, %v1805
        %v2133 = vadd.f32 %v2131, %v2132
        %v2134 = vrot.slane %v2133, 4
        %v2135 = vadd.f32 %v2133, %v2134
        %v2136 = vrot.slane %v2135, 2
        %v2137 = vadd.f32 %v2135, %v2136
        %v2138 = vrot.slane %v2137, 1
        %v2139 = vadd.f32 %v2137, %v2138
        %v2140 = vmul.f32 %v2139, 16.0
        %v2141 = vrcp.pop %v2140
        %v2142 = vmul.f32 %v2130, %v2141
        %v2143 = vlog2.pop %v2142
        %v2144 = vmul.f32 %v2143, 0.6931472
        %v2145 = vsub.f32 0.0, %v2144
        %2146 = vst [vmem:[%s198] sm:$0x1] %v2145
        %s2147 = sand.u32 %s82, 1
        %s2148 = scalar_lea.sflag [#allocation5], %s2147
        %s2149 = sand.u32 %s82, 1
        %s2150 = scalar_lea.vmem [#allocation8], %s2149
        // Predicated region
        $region44: #{tpu_custom_call.1} parent=27 // pred_check
          %p2151 = pneg %p92
        $region45: #{tpu_custom_call.1} parent=27 // pred_check_branch
          %2153 = sbr.rel (%p2151) target = $region47
        $region46: #{tpu_custom_call.1} parent=27 // pred_region
          %s2155 = ssub.s32 16, 16
          %2156 = vsyncadd %s2148, %s2155
          %s2157 = smul.addr %s22, 16
          %s2158 = scalar_lea.hbm %s2, %s2157
          %s2160 = sshll.u32 %s2150, 4
          %s2161 = int_to_ptr.vmem [resolvable:$true] %s2160
          %2163 = dma.vmem_to_hbm [thread:$0]  %s2161, 16, %s2158, %s2148
        $region47: #{tpu_custom_call.1} parent=27 // pred_fallthru
          _
      $region28: #{tpu_custom_call.1} parent=5 // pred_fallthru
        _
      %p2164 = scmp.le.s32.totalorder 2, %s17
      // Predicated region
      $region48: #{tpu_custom_call.1} parent=5 // pred_check
        %p2165 = pneg %p2164
      $region49: #{tpu_custom_call.1} parent=5 // pred_check_branch
        %2167 = sbr.rel (%p2165) target = $region51
      $region50: #{tpu_custom_call.1} parent=5 // pred_region
        %s2168 = ssub.s32 %s17, 2
        // Predicated region
        $region52: #{tpu_custom_call.1} parent=50 // pred_check
          %p2169 = pneg %p98
        $region53: #{tpu_custom_call.1} parent=50 // pred_check_branch
          %2171 = sbr.rel (%p2169) target = $region55
        $region54: #{tpu_custom_call.1} parent=50 // pred_region
          %s2172 = sand.u32 %s83, 1
          %s2173 = scalar_lea.sflag [#allocation5], %s2172
          %s2174 = sand.u32 %s83, 1
          %s2175 = scalar_lea.vmem [#allocation8], %s2174
          %2176 = dma.done %s2173, 16
        $region55: #{tpu_custom_call.1} parent=50 // pred_fallthru
          _
      $region51: #{tpu_custom_call.1} parent=5 // pred_fallthru
        _
    $region6: #{tpu_custom_call.1} parent=1 // loop_footer
      %s21 = sadd.s32 1, %s17
    $region7: #{tpu_custom_call.1} parent=1 // loop_footer_branch
      %16 = sbr.rel target = $region3
    $region8: #{tpu_custom_call.1} parent=1 // loop_exit
      _
    %2177 = vsyncpa [#allocation4], 1
    %s2178 = scalar_lea.sflag [#allocation4], 1
    %2179 = vsyncpa %s2178, 1
    %2180 = vsyncpa [#allocation7], 1
    %s2181 = scalar_lea.sflag [#allocation7], 1
    %2182 = vsyncpa %s2181, 1
    %2183 = vsyncpa [#allocation5], 1
    %s2184 = scalar_lea.sflag [#allocation5], 1
    %2185 = vsyncpa %s2184, 1

</llo_original>
